<compile_context>
chip_gen: v7x
topology: tpu7x:2x2x1
jax: 0.10.0
libtpu: 0.0.40
codegen_flags: <defaults>
</compile_context>

<pallas_src>
import jax
import jax.numpy as jnp
from jax.experimental import pallas as pl
from jax.experimental.pallas import tpu as pltpu

HIDDEN = 64
NUM_LAYERS = 3
OUT_DIM = 5


def lstm_kernel(x_ref,              # (seq,)    SMEM: last-batch-column of the input
                wih0_ref, b0_ref,    # (1, 4H), (1, 4H)   layer-0 input weights / fused bias
                wa_ref,              # (H, 8H)   [whh0 | wih1]  (gate-reordered)
                wb_ref,              # (H, 8H)   [whh1 | wih2]
                wc_ref,              # (H, 4H)   whh2
                b1_ref, b2_ref,      # (1, 4H), (1, 4H)
                wlin_ref, blin_ref,  # (H, 5), (1, 5)
                out_ref,             # (seq, 5)
                otop_ref):           # (seq, H)  VMEM scratch: top-layer hiddens
    seq = out_ref.shape[0]
    H = wa_ref.shape[0]
    G = 4 * H
    f32 = jnp.float32

    # Tiny per-gate-row constants (8 vregs total) — safe to keep live.
    # The big weight matrices (wa/wb/wc) are deliberately NOT hoisted.
    wih0 = wih0_ref[...]
    b0 = b0_ref[...]
    b1 = b1_ref[...]
    b2 = b2_ref[...]

    def cell(gates, c_prev):
        # gate column order: [ i | f | o | g ]
        # sigmoid(x) == 0.5*tanh(0.5*x) + 0.5 : one EUP tanh + cheap VPU ops.
        sig = 0.5 * jnp.tanh(0.5 * gates[:, :3 * H]) + 0.5
        g_g = jnp.tanh(gates[:, 3 * H:])
        i_g = sig[:, :H]
        f_g = sig[:, H:2 * H]
        o_g = sig[:, 2 * H:3 * H]
        c_new = f_g * c_prev + i_g * g_g
        h_new = o_g * jnp.tanh(c_new)
        return h_new, c_new

    zeros = jnp.zeros((1, H), f32)   # PyTorch default zero initial states
    h0, c0 = zeros, zeros
    h1, c1 = zeros, zeros
    h2, c2 = zeros, zeros

    # Wavefront over seq+2 iterations (pipeline fill/drain handled by static conditionals).
    for s in range(seq + 2):
        do0 = s < seq                # layer0 advances to time s
        do1 = 1 <= s <= seq          # layer1 advances to time s-1
        do2 = 2 <= s <= seq + 1      # layer2 advances to time s-2

        # Shared-LHS matmuls, all depending only on previous-iteration state.
        # RHS refs indexed at the dot sites to keep vreg pressure low.
        # Matmuls whose LHS is still the zero init state are skipped statically.
        mA = (jnp.dot(h0, wa_ref[...], preferred_element_type=f32)
              if (do0 or do1) and s >= 1 else None)
        mB = (jnp.dot(h1, wb_ref[...], preferred_element_type=f32)
              if (do1 or do2) and s >= 2 else None)
        mC = (jnp.dot(h2, wc_ref[...], preferred_element_type=f32)
              if do2 and s >= 3 else None)

        if do2:                                      # layer 2 at time s-2
            gates2 = mB[:, G:] + b2
            if mC is not None:
                gates2 = gates2 + mC
            h2, c2 = cell(gates2, c2)
            otop_ref[pl.ds(s - 2, 1), :] = h2        # masked vst, store slot has slack
        if do1:                                      # layer 1 at time s-1
            gates1 = mA[:, G:] + b1
            if mB is not None:
                gates1 = gates1 + mB[:, :G]
            h1, c1 = cell(gates1, c1)
        if do0:                                      # layer 0 at time s
            gates0 = x_ref[s] * wih0 + b0            # SMEM scalar * (1,4H) broadcast
            if mA is not None:
                gates0 = gates0 + mA[:, :G]
            h0, c0 = cell(gates0, c0)

    otop = otop_ref[...]                             # (seq, H)
    out_ref[...] = (jnp.dot(otop, wlin_ref[...], preferred_element_type=f32)
                    + blin_ref[...]).astype(out_ref.dtype)


def _reorder_gate_cols(w):
    """Reorder the 4H gate columns from PyTorch's [i, f, g, o] to [i, f, o, g]."""
    H = w.shape[-1] // 4
    return jnp.concatenate(
        [w[..., :2 * H], w[..., 3 * H:], w[..., 2 * H:3 * H]], axis=-1)


def prepare_params(params):
    """One-time weight plumbing (gate reorder + wavefront fusion). Call at model init,
    NOT per forward call."""
    (wih0, whh0, b0, wih1, whh1, b1, wih2, whh2, b2, wlin, blin) = params
    wih0_r, whh0_r, b0_r = map(_reorder_gate_cols, (wih0, whh0, b0))
    wih1_r, whh1_r, b1_r = map(_reorder_gate_cols, (wih1, whh1, b1))
    wih2_r, whh2_r, b2_r = map(_reorder_gate_cols, (wih2, whh2, b2))
    # Shared-LHS wavefront weights.
    wa = jnp.concatenate([whh0_r, wih1_r], axis=1)   # (H, 8H)
    wb = jnp.concatenate([whh1_r, wih2_r], axis=1)   # (H, 8H)
    wc = whh2_r                                      # (H, 4H)
    return (wih0_r, b0_r, wa, wb, wc, b1_r, b2_r, wlin, blin)


@jax.jit
def lstm_model_forward(x, prepared):
    """x: (seq, batch) float32 — same input the torch module sees before unsqueeze(2)."""
    (wih0_r, b0_r, wa, wb, wc, b1_r, b2_r, wlin, blin) = prepared
    seq, _ = x.shape

    # Dead-batch elimination: only batch element -1 is selected by the module
    # (out[0][:, -1, :]) and LSTM batch rows are independent.
    x_last = x[:, -1]                                # (seq,)

    vmem = pl.BlockSpec(memory_space=pltpu.MemorySpace.VMEM)
    smem = pl.BlockSpec(memory_space=pltpu.MemorySpace.SMEM)
    return pl.pallas_call(
        lstm_kernel,
        out_shape=jax.ShapeDtypeStruct((seq, OUT_DIM), jnp.float32),
        in_specs=[smem] + [vmem] * 9,
        out_specs=vmem,
        scratch_shapes=[pltpu.VMEM((seq, HIDDEN), jnp.float32)],
    )(x_last, wih0_r, b0_r, wa, wb, wc, b1_r, b2_r, wlin, blin)


def lstm_model_ref(x, params):
    """Pure-JAX reference of the PyTorch forward (original gate order / layout)."""
    (wih0, whh0, b0, wih1, whh1, b1, wih2, whh2, b2, wlin, blin) = params
    seq, B = x.shape
    H = whh0.shape[0]
    wihs = [wih0, wih1, wih2]
    whhs = [whh0, whh1, whh2]
    bs = [b0, b1, b2]
    h = [jnp.zeros((B, H), jnp.float32) for _ in range(NUM_LAYERS)]
    c = [jnp.zeros((B, H), jnp.float32) for _ in range(NUM_LAYERS)]
    outs = []
    for t in range(seq):
        x_t = x[t][:, None]                    # (B, 1)
        layer_in = None
        for l in range(NUM_LAYERS):
            g_in = x_t * wihs[0] if l == 0 else layer_in @ wihs[l]
            gates = g_in + h[l] @ whhs[l] + bs[l]
            i_g = jax.nn.sigmoid(gates[:, :H])
            f_g = jax.nn.sigmoid(gates[:, H:2 * H])
            g_g = jnp.tanh(gates[:, 2 * H:3 * H])
            o_g = jax.nn.sigmoid(gates[:, 3 * H:])
            c[l] = f_g * c[l] + i_g * g_g
            h[l] = o_g * jnp.tanh(c[l])
            layer_in = h[l]
        outs.append(layer_in[-1])              # out[0][:, -1, :] -> last batch element
    otop = jnp.stack(outs)                     # (seq, H)
    return otop @ wlin + blin


def init_params(key, hidden=HIDDEN):
    H = hidden
    k = 1.0 / (H ** 0.5)
    keys = jax.random.split(key, 16)

    def u(kk, shape):
        return jax.random.uniform(kk, shape, jnp.float32, -k, k)

    # LSTM weights stored pre-transposed as (in_features, 4H); b = b_ih + b_hh combined.
    wih0 = u(keys[0], (1, 4 * H))
    whh0 = u(keys[1], (H, 4 * H))
    b0 = u(keys[2], (1, 4 * H)) + u(keys[3], (1, 4 * H))
    wih1 = u(keys[4], (H, 4 * H))
    whh1 = u(keys[5], (H, 4 * H))
    b1 = u(keys[6], (1, 4 * H)) + u(keys[7], (1, 4 * H))
    wih2 = u(keys[8], (H, 4 * H))
    whh2 = u(keys[9], (H, 4 * H))
    b2 = u(keys[10], (1, 4 * H)) + u(keys[11], (1, 4 * H))
    # Linear(H, 5), stored transposed as (H, 5)
    wlin = u(keys[12], (H, OUT_DIM))
    blin = u(keys[13], (1, OUT_DIM))
    return (wih0, whh0, b0, wih1, whh1, b1, wih2, whh2, b2, wlin, blin)


if __name__ == "__main__":
    key = jax.random.PRNGKey(0)
    pkey, xkey = jax.random.split(key)
    params = init_params(pkey)
    prepared = prepare_params(params)          # one-time, outside the per-call forward

    seq, batch = 8, 4
    x = jax.random.normal(xkey, (seq, batch), dtype=jnp.float32)

    out = lstm_model_forward(x, prepared)
    out = jax.block_until_ready(out)

    ref = lstm_model_ref(x, params)
    assert out.shape == (seq, OUT_DIM), out.shape
    assert jnp.allclose(out, ref, atol=1e-5, rtol=1e-5), (
        f"max abs diff = {jnp.max(jnp.abs(out - ref))}")

    print("KERNEL_OK")
</pallas_src>

<mosaic_0001>
module attributes {stable_mosaic.version = 11 : i64} {
  func.func @lstm_kernel(%arg0: memref<8xf32, #tpu.memory_space<smem>>, %arg1: memref<1x256xf32, #tpu.memory_space<vmem>>, %arg2: memref<1x256xf32, #tpu.memory_space<vmem>>, %arg3: memref<64x512xf32, #tpu.memory_space<vmem>>, %arg4: memref<64x512xf32, #tpu.memory_space<vmem>>, %arg5: memref<64x256xf32, #tpu.memory_space<vmem>>, %arg6: memref<1x256xf32, #tpu.memory_space<vmem>>, %arg7: memref<1x256xf32, #tpu.memory_space<vmem>>, %arg8: memref<64x5xf32, #tpu.memory_space<vmem>>, %arg9: memref<1x5xf32, #tpu.memory_space<vmem>>, %arg10: memref<8x5xf32, #tpu.memory_space<vmem>>, %arg11: memref<8x64xf32, #tpu.memory_space<vmem>>) attributes {dimension_semantics = [], scalar_prefetch = 0 : i64, scratch_operands = 1 : i64, tpu.core_type = #tpu.core_type<tc>} {
    %c0 = arith.constant 0 : index
    %c0_0 = arith.constant 0 : index
    %0 = vector.load %arg1[%c0, %c0_0] : memref<1x256xf32, #tpu.memory_space<vmem>>, vector<1x256xf32>
    %c0_1 = arith.constant 0 : index
    %c0_2 = arith.constant 0 : index
    %1 = vector.load %arg2[%c0_1, %c0_2] : memref<1x256xf32, #tpu.memory_space<vmem>>, vector<1x256xf32>
    %c0_3 = arith.constant 0 : index
    %c0_4 = arith.constant 0 : index
    %2 = vector.load %arg6[%c0_3, %c0_4] : memref<1x256xf32, #tpu.memory_space<vmem>>, vector<1x256xf32>
    %c0_5 = arith.constant 0 : index
    %c0_6 = arith.constant 0 : index
    %3 = vector.load %arg7[%c0_5, %c0_6] : memref<1x256xf32, #tpu.memory_space<vmem>>, vector<1x256xf32>
    %cst = arith.constant 0.000000e+00 : f32
    %4 = vector.broadcast %cst : f32 to vector<1x64xf32>
    %c0_7 = arith.constant 0 : index
    %5 = memref.load %arg0[%c0_7] : memref<8xf32, #tpu.memory_space<smem>>
    %6 = vector.broadcast %5 : f32 to vector<1x256xf32>
    %7 = arith.mulf %6, %0 : vector<1x256xf32>
    %8 = arith.addf %7, %1 : vector<1x256xf32>
    %9 = vector.extract_strided_slice %8 {offsets = [0, 0], sizes = [1, 192], strides = [1, 1]} : vector<1x256xf32> to vector<1x192xf32>
    %cst_8 = arith.constant 5.000000e-01 : f32
    %10 = vector.broadcast %cst_8 : f32 to vector<1x192xf32>
    %11 = arith.mulf %10, %9 : vector<1x192xf32>
    %12 = math.tanh %11 : vector<1x192xf32>
    %cst_9 = arith.constant 5.000000e-01 : f32
    %13 = vector.broadcast %cst_9 : f32 to vector<1x192xf32>
    %14 = arith.mulf %13, %12 : vector<1x192xf32>
    %cst_10 = arith.constant 5.000000e-01 : f32
    %15 = vector.broadcast %cst_10 : f32 to vector<1x192xf32>
    %16 = arith.addf %14, %15 : vector<1x192xf32>
    %17 = vector.extract_strided_slice %8 {offsets = [0, 192], sizes = [1, 64], strides = [1, 1]} : vector<1x256xf32> to vector<1x64xf32>
    %18 = math.tanh %17 : vector<1x64xf32>
    %19 = vector.extract_strided_slice %16 {offsets = [0, 0], sizes = [1, 64], strides = [1, 1]} : vector<1x192xf32> to vector<1x64xf32>
    %20 = vector.extract_strided_slice %16 {offsets = [0, 64], sizes = [1, 64], strides = [1, 1]} : vector<1x192xf32> to vector<1x64xf32>
    %21 = vector.extract_strided_slice %16 {offsets = [0, 128], sizes = [1, 64], strides = [1, 1]} : vector<1x192xf32> to vector<1x64xf32>
    %22 = arith.mulf %20, %4 : vector<1x64xf32>
    %23 = arith.mulf %19, %18 : vector<1x64xf32>
    %24 = arith.addf %22, %23 : vector<1x64xf32>
    %25 = math.tanh %24 : vector<1x64xf32>
    %26 = arith.mulf %21, %25 : vector<1x64xf32>
    %c0_11 = arith.constant 0 : index
    %c0_12 = arith.constant 0 : index
    %27 = vector.load %arg3[%c0_11, %c0_12] : memref<64x512xf32, #tpu.memory_space<vmem>>, vector<64x512xf32>
    %cst_13 = arith.constant dense<0.000000e+00> : vector<1x512xf32>
    %28 = tpu.matmul %26, %27, %cst_13 {dimension_numbers = #tpu.dot_dimension_numbers<[1], [0], [0], [1], [0, 0, 1, 1], [], []>} : vector<1x64xf32>, vector<64x512xf32>, vector<1x512xf32> -> vector<1x512xf32>
    %29 = vector.extract_strided_slice %28 {offsets = [0, 256], sizes = [1, 256], strides = [1, 1]} : vector<1x512xf32> to vector<1x256xf32>
    %30 = arith.addf %29, %2 : vector<1x256xf32>
    %31 = vector.extract_strided_slice %30 {offsets = [0, 0], sizes = [1, 192], strides = [1, 1]} : vector<1x256xf32> to vector<1x192xf32>
    %cst_14 = arith.constant 5.000000e-01 : f32
    %32 = vector.broadcast %cst_14 : f32 to vector<1x192xf32>
    %33 = arith.mulf %32, %31 : vector<1x192xf32>
    %34 = math.tanh %33 : vector<1x192xf32>
    %cst_15 = arith.constant 5.000000e-01 : f32
    %35 = vector.broadcast %cst_15 : f32 to vector<1x192xf32>
    %36 = arith.mulf %35, %34 : vector<1x192xf32>
    %cst_16 = arith.constant 5.000000e-01 : f32
    %37 = vector.broadcast %cst_16 : f32 to vector<1x192xf32>
    %38 = arith.addf %36, %37 : vector<1x192xf32>
    %39 = vector.extract_strided_slice %30 {offsets = [0, 192], sizes = [1, 64], strides = [1, 1]} : vector<1x256xf32> to vector<1x64xf32>
    %40 = math.tanh %39 : vector<1x64xf32>
    %41 = vector.extract_strided_slice %38 {offsets = [0, 0], sizes = [1, 64], strides = [1, 1]} : vector<1x192xf32> to vector<1x64xf32>
    %42 = vector.extract_strided_slice %38 {offsets = [0, 64], sizes = [1, 64], strides = [1, 1]} : vector<1x192xf32> to vector<1x64xf32>
    %43 = vector.extract_strided_slice %38 {offsets = [0, 128], sizes = [1, 64], strides = [1, 1]} : vector<1x192xf32> to vector<1x64xf32>
    %44 = arith.mulf %42, %4 : vector<1x64xf32>
    %45 = arith.mulf %41, %40 : vector<1x64xf32>
    %46 = arith.addf %44, %45 : vector<1x64xf32>
    %47 = math.tanh %46 : vector<1x64xf32>
    %48 = arith.mulf %43, %47 : vector<1x64xf32>
    %c1 = arith.constant 1 : index
    %49 = memref.load %arg0[%c1] : memref<8xf32, #tpu.memory_space<smem>>
    %50 = vector.broadcast %49 : f32 to vector<1x256xf32>
    %51 = arith.mulf %50, %0 : vector<1x256xf32>
    %52 = arith.addf %51, %1 : vector<1x256xf32>
    %53 = vector.extract_strided_slice %28 {offsets = [0, 0], sizes = [1, 256], strides = [1, 1]} : vector<1x512xf32> to vector<1x256xf32>
    %54 = arith.addf %52, %53 : vector<1x256xf32>
    %55 = vector.extract_strided_slice %54 {offsets = [0, 0], sizes = [1, 192], strides = [1, 1]} : vector<1x256xf32> to vector<1x192xf32>
    %cst_17 = arith.constant 5.000000e-01 : f32
    %56 = vector.broadcast %cst_17 : f32 to vector<1x192xf32>
    %57 = arith.mulf %56, %55 : vector<1x192xf32>
    %58 = math.tanh %57 : vector<1x192xf32>
    %cst_18 = arith.constant 5.000000e-01 : f32
    %59 = vector.broadcast %cst_18 : f32 to vector<1x192xf32>
    %60 = arith.mulf %59, %58 : vector<1x192xf32>
    %cst_19 = arith.constant 5.000000e-01 : f32
    %61 = vector.broadcast %cst_19 : f32 to vector<1x192xf32>
    %62 = arith.addf %60, %61 : vector<1x192xf32>
    %63 = vector.extract_strided_slice %54 {offsets = [0, 192], sizes = [1, 64], strides = [1, 1]} : vector<1x256xf32> to vector<1x64xf32>
    %64 = math.tanh %63 : vector<1x64xf32>
    %65 = vector.extract_strided_slice %62 {offsets = [0, 0], sizes = [1, 64], strides = [1, 1]} : vector<1x192xf32> to vector<1x64xf32>
    %66 = vector.extract_strided_slice %62 {offsets = [0, 64], sizes = [1, 64], strides = [1, 1]} : vector<1x192xf32> to vector<1x64xf32>
    %67 = vector.extract_strided_slice %62 {offsets = [0, 128], sizes = [1, 64], strides = [1, 1]} : vector<1x192xf32> to vector<1x64xf32>
    %68 = arith.mulf %66, %24 : vector<1x64xf32>
    %69 = arith.mulf %65, %64 : vector<1x64xf32>
    %70 = arith.addf %68, %69 : vector<1x64xf32>
    %71 = math.tanh %70 : vector<1x64xf32>
    %72 = arith.mulf %67, %71 : vector<1x64xf32>
    %c0_20 = arith.constant 0 : index
    %c0_21 = arith.constant 0 : index
    %73 = vector.load %arg3[%c0_20, %c0_21] : memref<64x512xf32, #tpu.memory_space<vmem>>, vector<64x512xf32>
    %cst_22 = arith.constant dense<0.000000e+00> : vector<1x512xf32>
    %74 = tpu.matmul %72, %73, %cst_22 {dimension_numbers = #tpu.dot_dimension_numbers<[1], [0], [0], [1], [0, 0, 1, 1], [], []>} : vector<1x64xf32>, vector<64x512xf32>, vector<1x512xf32> -> vector<1x512xf32>
    %c0_23 = arith.constant 0 : index
    %c0_24 = arith.constant 0 : index
    %75 = vector.load %arg4[%c0_23, %c0_24] : memref<64x512xf32, #tpu.memory_space<vmem>>, vector<64x512xf32>
    %cst_25 = arith.constant dense<0.000000e+00> : vector<1x512xf32>
    %76 = tpu.matmul %48, %75, %cst_25 {dimension_numbers = #tpu.dot_dimension_numbers<[1], [0], [0], [1], [0, 0, 1, 1], [], []>} : vector<1x64xf32>, vector<64x512xf32>, vector<1x512xf32> -> vector<1x512xf32>
    %77 = vector.extract_strided_slice %76 {offsets = [0, 256], sizes = [1, 256], strides = [1, 1]} : vector<1x512xf32> to vector<1x256xf32>
    %78 = arith.addf %77, %3 : vector<1x256xf32>
    %79 = vector.extract_strided_slice %78 {offsets = [0, 0], sizes = [1, 192], strides = [1, 1]} : vector<1x256xf32> to vector<1x192xf32>
    %cst_26 = arith.constant 5.000000e-01 : f32
    %80 = vector.broadcast %cst_26 : f32 to vector<1x192xf32>
    %81 = arith.mulf %80, %79 : vector<1x192xf32>
    %82 = math.tanh %81 : vector<1x192xf32>
    %cst_27 = arith.constant 5.000000e-01 : f32
    %83 = vector.broadcast %cst_27 : f32 to vector<1x192xf32>
    %84 = arith.mulf %83, %82 : vector<1x192xf32>
    %cst_28 = arith.constant 5.000000e-01 : f32
    %85 = vector.broadcast %cst_28 : f32 to vector<1x192xf32>
    %86 = arith.addf %84, %85 : vector<1x192xf32>
    %87 = vector.extract_strided_slice %78 {offsets = [0, 192], sizes = [1, 64], strides = [1, 1]} : vector<1x256xf32> to vector<1x64xf32>
    %88 = math.tanh %87 : vector<1x64xf32>
    %89 = vector.extract_strided_slice %86 {offsets = [0, 0], sizes = [1, 64], strides = [1, 1]} : vector<1x192xf32> to vector<1x64xf32>
    %90 = vector.extract_strided_slice %86 {offsets = [0, 64], sizes = [1, 64], strides = [1, 1]} : vector<1x192xf32> to vector<1x64xf32>
    %91 = vector.extract_strided_slice %86 {offsets = [0, 128], sizes = [1, 64], strides = [1, 1]} : vector<1x192xf32> to vector<1x64xf32>
    %92 = arith.mulf %90, %4 : vector<1x64xf32>
    %93 = arith.mulf %89, %88 : vector<1x64xf32>
    %94 = arith.addf %92, %93 : vector<1x64xf32>
    %95 = math.tanh %94 : vector<1x64xf32>
    %96 = arith.mulf %91, %95 : vector<1x64xf32>
    %c0_29 = arith.constant 0 : index
    %c0_30 = arith.constant 0 : index
    %97 = vector.load %arg11[%c0_29, %c0_30] : memref<8x64xf32, #tpu.memory_space<vmem>>, vector<1x64xf32>
    tpu.vector_store %arg11[%c0_29, %c0_30], %96 {strides = array<i32>} : memref<8x64xf32, #tpu.memory_space<vmem>>, vector<1x64xf32>,
    %98 = vector.extract_strided_slice %74 {offsets = [0, 256], sizes = [1, 256], strides = [1, 1]} : vector<1x512xf32> to vector<1x256xf32>
    %99 = arith.addf %98, %2 : vector<1x256xf32>
    %100 = vector.extract_strided_slice %76 {offsets = [0, 0], sizes = [1, 256], strides = [1, 1]} : vector<1x512xf32> to vector<1x256xf32>
    %101 = arith.addf %99, %100 : vector<1x256xf32>
    %102 = vector.extract_strided_slice %101 {offsets = [0, 0], sizes = [1, 192], strides = [1, 1]} : vector<1x256xf32> to vector<1x192xf32>
    %cst_31 = arith.constant 5.000000e-01 : f32
    %103 = vector.broadcast %cst_31 : f32 to vector<1x192xf32>
    %104 = arith.mulf %103, %102 : vector<1x192xf32>
    %105 = math.tanh %104 : vector<1x192xf32>
    %cst_32 = arith.constant 5.000000e-01 : f32
    %106 = vector.broadcast %cst_32 : f32 to vector<1x192xf32>
    %107 = arith.mulf %106, %105 : vector<1x192xf32>
    %cst_33 = arith.constant 5.000000e-01 : f32
    %108 = vector.broadcast %cst_33 : f32 to vector<1x192xf32>
    %109 = arith.addf %107, %108 : vector<1x192xf32>
    %110 = vector.extract_strided_slice %101 {offsets = [0, 192], sizes = [1, 64], strides = [1, 1]} : vector<1x256xf32> to vector<1x64xf32>
    %111 = math.tanh %110 : vector<1x64xf32>
    %112 = vector.extract_strided_slice %109 {offsets = [0, 0], sizes = [1, 64], strides = [1, 1]} : vector<1x192xf32> to vector<1x64xf32>
    %113 = vector.extract_strided_slice %109 {offsets = [0, 64], sizes = [1, 64], strides = [1, 1]} : vector<1x192xf32> to vector<1x64xf32>
    %114 = vector.extract_strided_slice %109 {offsets = [0, 128], sizes = [1, 64], strides = [1, 1]} : vector<1x192xf32> to vector<1x64xf32>
    %115 = arith.mulf %113, %46 : vector<1x64xf32>
    %116 = arith.mulf %112, %111 : vector<1x64xf32>
    %117 = arith.addf %115, %116 : vector<1x64xf32>
    %118 = math.tanh %117 : vector<1x64xf32>
    %119 = arith.mulf %114, %118 : vector<1x64xf32>
    %c2 = arith.constant 2 : index
    %120 = memref.load %arg0[%c2] : memref<8xf32, #tpu.memory_space<smem>>
    %121 = vector.broadcast %120 : f32 to vector<1x256xf32>
    %122 = arith.mulf %121, %0 : vector<1x256xf32>
    %123 = arith.addf %122, %1 : vector<1x256xf32>
    %124 = vector.extract_strided_slice %74 {offsets = [0, 0], sizes = [1, 256], strides = [1, 1]} : vector<1x512xf32> to vector<1x256xf32>
    %125 = arith.addf %123, %124 : vector<1x256xf32>
    %126 = vector.extract_strided_slice %125 {offsets = [0, 0], sizes = [1, 192], strides = [1, 1]} : vector<1x256xf32> to vector<1x192xf32>
    %cst_34 = arith.constant 5.000000e-01 : f32
    %127 = vector.broadcast %cst_34 : f32 to vector<1x192xf32>
    %128 = arith.mulf %127, %126 : vector<1x192xf32>
    %129 = math.tanh %128 : vector<1x192xf32>
    %cst_35 = arith.constant 5.000000e-01 : f32
    %130 = vector.broadcast %cst_35 : f32 to vector<1x192xf32>
    %131 = arith.mulf %130, %129 : vector<1x192xf32>
    %cst_36 = arith.constant 5.000000e-01 : f32
    %132 = vector.broadcast %cst_36 : f32 to vector<1x192xf32>
    %133 = arith.addf %131, %132 : vector<1x192xf32>
    %134 = vector.extract_strided_slice %125 {offsets = [0, 192], sizes = [1, 64], strides = [1, 1]} : vector<1x256xf32> to vector<1x64xf32>
    %135 = math.tanh %134 : vector<1x64xf32>
    %136 = vector.extract_strided_slice %133 {offsets = [0, 0], sizes = [1, 64], strides = [1, 1]} : vector<1x192xf32> to vector<1x64xf32>
    %137 = vector.extract_strided_slice %133 {offsets = [0, 64], sizes = [1, 64], strides = [1, 1]} : vector<1x192xf32> to vector<1x64xf32>
    %138 = vector.extract_strided_slice %133 {offsets = [0, 128], sizes = [1, 64], strides = [1, 1]} : vector<1x192xf32> to vector<1x64xf32>
    %139 = arith.mulf %137, %70 : vector<1x64xf32>
    %140 = arith.mulf %136, %135 : vector<1x64xf32>
    %141 = arith.addf %139, %140 : vector<1x64xf32>
    %142 = math.tanh %141 : vector<1x64xf32>
    %143 = arith.mulf %138, %142 : vector<1x64xf32>
    %c0_37 = arith.constant 0 : index
    %c0_38 = arith.constant 0 : index
    %144 = vector.load %arg3[%c0_37, %c0_38] : memref<64x512xf32, #tpu.memory_space<vmem>>, vector<64x512xf32>
    %cst_39 = arith.constant dense<0.000000e+00> : vector<1x512xf32>
    %145 = tpu.matmul %143, %144, %cst_39 {dimension_numbers = #tpu.dot_dimension_numbers<[1], [0], [0], [1], [0, 0, 1, 1], [], []>} : vector<1x64xf32>, vector<64x512xf32>, vector<1x512xf32> -> vector<1x512xf32>
    %c0_40 = arith.constant 0 : index
    %c0_41 = arith.constant 0 : index
    %146 = vector.load %arg4[%c0_40, %c0_41] : memref<64x512xf32, #tpu.memory_space<vmem>>, vector<64x512xf32>
    %cst_42 = arith.constant dense<0.000000e+00> : vector<1x512xf32>
    %147 = tpu.matmul %119, %146, %cst_42 {dimension_numbers = #tpu.dot_dimension_numbers<[1], [0], [0], [1], [0, 0, 1, 1], [], []>} : vector<1x64xf32>, vector<64x512xf32>, vector<1x512xf32> -> vector<1x512xf32>
    %c0_43 = arith.constant 0 : index
    %c0_44 = arith.constant 0 : index
    %148 = vector.load %arg5[%c0_43, %c0_44] : memref<64x256xf32, #tpu.memory_space<vmem>>, vector<64x256xf32>
    %cst_45 = arith.constant dense<0.000000e+00> : vector<1x256xf32>
    %149 = tpu.matmul %96, %148, %cst_45 {dimension_numbers = #tpu.dot_dimension_numbers<[1], [0], [0], [1], [0, 0, 1, 1], [], []>} : vector<1x64xf32>, vector<64x256xf32>, vector<1x256xf32> -> vector<1x256xf32>
    %150 = vector.extract_strided_slice %147 {offsets = [0, 256], sizes = [1, 256], strides = [1, 1]} : vector<1x512xf32> to vector<1x256xf32>
    %151 = arith.addf %150, %3 : vector<1x256xf32>
    %152 = arith.addf %151, %149 : vector<1x256xf32>
    %153 = vector.extract_strided_slice %152 {offsets = [0, 0], sizes = [1, 192], strides = [1, 1]} : vector<1x256xf32> to vector<1x192xf32>
    %cst_46 = arith.constant 5.000000e-01 : f32
    %154 = vector.broadcast %cst_46 : f32 to vector<1x192xf32>
    %155 = arith.mulf %154, %153 : vector<1x192xf32>
    %156 = math.tanh %155 : vector<1x192xf32>
    %cst_47 = arith.constant 5.000000e-01 : f32
    %157 = vector.broadcast %cst_47 : f32 to vector<1x192xf32>
    %158 = arith.mulf %157, %156 : vector<1x192xf32>
    %cst_48 = arith.constant 5.000000e-01 : f32
    %159 = vector.broadcast %cst_48 : f32 to vector<1x192xf32>
    %160 = arith.addf %158, %159 : vector<1x192xf32>
    %161 = vector.extract_strided_slice %152 {offsets = [0, 192], sizes = [1, 64], strides = [1, 1]} : vector<1x256xf32> to vector<1x64xf32>
    %162 = math.tanh %161 : vector<1x64xf32>
    %163 = vector.extract_strided_slice %160 {offsets = [0, 0], sizes = [1, 64], strides = [1, 1]} : vector<1x192xf32> to vector<1x64xf32>
    %164 = vector.extract_strided_slice %160 {offsets = [0, 64], sizes = [1, 64], strides = [1, 1]} : vector<1x192xf32> to vector<1x64xf32>
    %165 = vector.extract_strided_slice %160 {offsets = [0, 128], sizes = [1, 64], strides = [1, 1]} : vector<1x192xf32> to vector<1x64xf32>
    %166 = arith.mulf %164, %94 : vector<1x64xf32>
    %167 = arith.mulf %163, %162 : vector<1x64xf32>
    %168 = arith.addf %166, %167 : vector<1x64xf32>
    %169 = math.tanh %168 : vector<1x64xf32>
    %170 = arith.mulf %165, %169 : vector<1x64xf32>
    %c1_49 = arith.constant 1 : index
    %c0_50 = arith.constant 0 : index
    %171 = vector.load %arg11[%c1_49, %c0_50] : memref<8x64xf32, #tpu.memory_space<vmem>>, vector<1x64xf32>
    tpu.vector_store %arg11[%c1_49, %c0_50], %170 {strides = array<i32>} : memref<8x64xf32, #tpu.memory_space<vmem>>, vector<1x64xf32>,
    %172 = vector.extract_strided_slice %145 {offsets = [0, 256], sizes = [1, 256], strides = [1, 1]} : vector<1x512xf32> to vector<1x256xf32>
    %173 = arith.addf %172, %2 : vector<1x256xf32>
    %174 = vector.extract_strided_slice %147 {offsets = [0, 0], sizes = [1, 256], strides = [1, 1]} : vector<1x512xf32> to vector<1x256xf32>
    %175 = arith.addf %173, %174 : vector<1x256xf32>
    %176 = vector.extract_strided_slice %175 {offsets = [0, 0], sizes = [1, 192], strides = [1, 1]} : vector<1x256xf32> to vector<1x192xf32>
    %cst_51 = arith.constant 5.000000e-01 : f32
    %177 = vector.broadcast %cst_51 : f32 to vector<1x192xf32>
    %178 = arith.mulf %177, %176 : vector<1x192xf32>
    %179 = math.tanh %178 : vector<1x192xf32>
    %cst_52 = arith.constant 5.000000e-01 : f32
    %180 = vector.broadcast %cst_52 : f32 to vector<1x192xf32>
    %181 = arith.mulf %180, %179 : vector<1x192xf32>
    %cst_53 = arith.constant 5.000000e-01 : f32
    %182 = vector.broadcast %cst_53 : f32 to vector<1x192xf32>
    %183 = arith.addf %181, %182 : vector<1x192xf32>
    %184 = vector.extract_strided_slice %175 {offsets = [0, 192], sizes = [1, 64], strides = [1, 1]} : vector<1x256xf32> to vector<1x64xf32>
    %185 = math.tanh %184 : vector<1x64xf32>
    %186 = vector.extract_strided_slice %183 {offsets = [0, 0], sizes = [1, 64], strides = [1, 1]} : vector<1x192xf32> to vector<1x64xf32>
    %187 = vector.extract_strided_slice %183 {offsets = [0, 64], sizes = [1, 64], strides = [1, 1]} : vector<1x192xf32> to vector<1x64xf32>
    %188 = vector.extract_strided_slice %183 {offsets = [0, 128], sizes = [1, 64], strides = [1, 1]} : vector<1x192xf32> to vector<1x64xf32>
    %189 = arith.mulf %187, %117 : vector<1x64xf32>
    %190 = arith.mulf %186, %185 : vector<1x64xf32>
    %191 = arith.addf %189, %190 : vector<1x64xf32>
    %192 = math.tanh %191 : vector<1x64xf32>
    %193 = arith.mulf %188, %192 : vector<1x64xf32>
    %c3 = arith.constant 3 : index
    %194 = memref.load %arg0[%c3] : memref<8xf32, #tpu.memory_space<smem>>
    %195 = vector.broadcast %194 : f32 to vector<1x256xf32>
    %196 = arith.mulf %195, %0 : vector<1x256xf32>
    %197 = arith.addf %196, %1 : vector<1x256xf32>
    %198 = vector.extract_strided_slice %145 {offsets = [0, 0], sizes = [1, 256], strides = [1, 1]} : vector<1x512xf32> to vector<1x256xf32>
    %199 = arith.addf %197, %198 : vector<1x256xf32>
    %200 = vector.extract_strided_slice %199 {offsets = [0, 0], sizes = [1, 192], strides = [1, 1]} : vector<1x256xf32> to vector<1x192xf32>
    %cst_54 = arith.constant 5.000000e-01 : f32
    %201 = vector.broadcast %cst_54 : f32 to vector<1x192xf32>
    %202 = arith.mulf %201, %200 : vector<1x192xf32>
    %203 = math.tanh %202 : vector<1x192xf32>
    %cst_55 = arith.constant 5.000000e-01 : f32
    %204 = vector.broadcast %cst_55 : f32 to vector<1x192xf32>
    %205 = arith.mulf %204, %203 : vector<1x192xf32>
    %cst_56 = arith.constant 5.000000e-01 : f32
    %206 = vector.broadcast %cst_56 : f32 to vector<1x192xf32>
    %207 = arith.addf %205, %206 : vector<1x192xf32>
    %208 = vector.extract_strided_slice %199 {offsets = [0, 192], sizes = [1, 64], strides = [1, 1]} : vector<1x256xf32> to vector<1x64xf32>
    %209 = math.tanh %208 : vector<1x64xf32>
    %210 = vector.extract_strided_slice %207 {offsets = [0, 0], sizes = [1, 64], strides = [1, 1]} : vector<1x192xf32> to vector<1x64xf32>
    %211 = vector.extract_strided_slice %207 {offsets = [0, 64], sizes = [1, 64], strides = [1, 1]} : vector<1x192xf32> to vector<1x64xf32>
    %212 = vector.extract_strided_slice %207 {offsets = [0, 128], sizes = [1, 64], strides = [1, 1]} : vector<1x192xf32> to vector<1x64xf32>
    %213 = arith.mulf %211, %141 : vector<1x64xf32>
    %214 = arith.mulf %210, %209 : vector<1x64xf32>
    %215 = arith.addf %213, %214 : vector<1x64xf32>
    %216 = math.tanh %215 : vector<1x64xf32>
    %217 = arith.mulf %212, %216 : vector<1x64xf32>
    %c0_57 = arith.constant 0 : index
    %c0_58 = arith.constant 0 : index
    %218 = vector.load %arg3[%c0_57, %c0_58] : memref<64x512xf32, #tpu.memory_space<vmem>>, vector<64x512xf32>
    %cst_59 = arith.constant dense<0.000000e+00> : vector<1x512xf32>
    %219 = tpu.matmul %217, %218, %cst_59 {dimension_numbers = #tpu.dot_dimension_numbers<[1], [0], [0], [1], [0, 0, 1, 1], [], []>} : vector<1x64xf32>, vector<64x512xf32>, vector<1x512xf32> -> vector<1x512xf32>
    %c0_60 = arith.constant 0 : index
    %c0_61 = arith.constant 0 : index
    %220 = vector.load %arg4[%c0_60, %c0_61] : memref<64x512xf32, #tpu.memory_space<vmem>>, vector<64x512xf32>
    %cst_62 = arith.constant dense<0.000000e+00> : vector<1x512xf32>
    %221 = tpu.matmul %193, %220, %cst_62 {dimension_numbers = #tpu.dot_dimension_numbers<[1], [0], [0], [1], [0, 0, 1, 1], [], []>} : vector<1x64xf32>, vector<64x512xf32>, vector<1x512xf32> -> vector<1x512xf32>
    %c0_63 = arith.constant 0 : index
    %c0_64 = arith.constant 0 : index
    %222 = vector.load %arg5[%c0_63, %c0_64] : memref<64x256xf32, #tpu.memory_space<vmem>>, vector<64x256xf32>
    %cst_65 = arith.constant dense<0.000000e+00> : vector<1x256xf32>
    %223 = tpu.matmul %170, %222, %cst_65 {dimension_numbers = #tpu.dot_dimension_numbers<[1], [0], [0], [1], [0, 0, 1, 1], [], []>} : vector<1x64xf32>, vector<64x256xf32>, vector<1x256xf32> -> vector<1x256xf32>
    %224 = vector.extract_strided_slice %221 {offsets = [0, 256], sizes = [1, 256], strides = [1, 1]} : vector<1x512xf32> to vector<1x256xf32>
    %225 = arith.addf %224, %3 : vector<1x256xf32>
    %226 = arith.addf %225, %223 : vector<1x256xf32>
    %227 = vector.extract_strided_slice %226 {offsets = [0, 0], sizes = [1, 192], strides = [1, 1]} : vector<1x256xf32> to vector<1x192xf32>
    %cst_66 = arith.constant 5.000000e-01 : f32
    %228 = vector.broadcast %cst_66 : f32 to vector<1x192xf32>
    %229 = arith.mulf %228, %227 : vector<1x192xf32>
    %230 = math.tanh %229 : vector<1x192xf32>
    %cst_67 = arith.constant 5.000000e-01 : f32
    %231 = vector.broadcast %cst_67 : f32 to vector<1x192xf32>
    %232 = arith.mulf %231, %230 : vector<1x192xf32>
    %cst_68 = arith.constant 5.000000e-01 : f32
    %233 = vector.broadcast %cst_68 : f32 to vector<1x192xf32>
    %234 = arith.addf %232, %233 : vector<1x192xf32>
    %235 = vector.extract_strided_slice %226 {offsets = [0, 192], sizes = [1, 64], strides = [1, 1]} : vector<1x256xf32> to vector<1x64xf32>
    %236 = math.tanh %235 : vector<1x64xf32>
    %237 = vector.extract_strided_slice %234 {offsets = [0, 0], sizes = [1, 64], strides = [1, 1]} : vector<1x192xf32> to vector<1x64xf32>
    %238 = vector.extract_strided_slice %234 {offsets = [0, 64], sizes = [1, 64], strides = [1, 1]} : vector<1x192xf32> to vector<1x64xf32>
    %239 = vector.extract_strided_slice %234 {offsets = [0, 128], sizes = [1, 64], strides = [1, 1]} : vector<1x192xf32> to vector<1x64xf32>
    %240 = arith.mulf %238, %168 : vector<1x64xf32>
    %241 = arith.mulf %237, %236 : vector<1x64xf32>
    %242 = arith.addf %240, %241 : vector<1x64xf32>
    %243 = math.tanh %242 : vector<1x64xf32>
    %244 = arith.mulf %239, %243 : vector<1x64xf32>
    %c2_69 = arith.constant 2 : index
    %c0_70 = arith.constant 0 : index
    %245 = vector.load %arg11[%c2_69, %c0_70] : memref<8x64xf32, #tpu.memory_space<vmem>>, vector<1x64xf32>
    tpu.vector_store %arg11[%c2_69, %c0_70], %244 {strides = array<i32>} : memref<8x64xf32, #tpu.memory_space<vmem>>, vector<1x64xf32>,
    %246 = vector.extract_strided_slice %219 {offsets = [0, 256], sizes = [1, 256], strides = [1, 1]} : vector<1x512xf32> to vector<1x256xf32>
    %247 = arith.addf %246, %2 : vector<1x256xf32>
    %248 = vector.extract_strided_slice %221 {offsets = [0, 0], sizes = [1, 256], strides = [1, 1]} : vector<1x512xf32> to vector<1x256xf32>
    %249 = arith.addf %247, %248 : vector<1x256xf32>
    %250 = vector.extract_strided_slice %249 {offsets = [0, 0], sizes = [1, 192], strides = [1, 1]} : vector<1x256xf32> to vector<1x192xf32>
    %cst_71 = arith.constant 5.000000e-01 : f32
    %251 = vector.broadcast %cst_71 : f32 to vector<1x192xf32>
    %252 = arith.mulf %251, %250 : vector<1x192xf32>
    %253 = math.tanh %252 : vector<1x192xf32>
    %cst_72 = arith.constant 5.000000e-01 : f32
    %254 = vector.broadcast %cst_72 : f32 to vector<1x192xf32>
    %255 = arith.mulf %254, %253 : vector<1x192xf32>
    %cst_73 = arith.constant 5.000000e-01 : f32
    %256 = vector.broadcast %cst_73 : f32 to vector<1x192xf32>
    %257 = arith.addf %255, %256 : vector<1x192xf32>
    %258 = vector.extract_strided_slice %249 {offsets = [0, 192], sizes = [1, 64], strides = [1, 1]} : vector<1x256xf32> to vector<1x64xf32>
    %259 = math.tanh %258 : vector<1x64xf32>
    %260 = vector.extract_strided_slice %257 {offsets = [0, 0], sizes = [1, 64], strides = [1, 1]} : vector<1x192xf32> to vector<1x64xf32>
    %261 = vector.extract_strided_slice %257 {offsets = [0, 64], sizes = [1, 64], strides = [1, 1]} : vector<1x192xf32> to vector<1x64xf32>
    %262 = vector.extract_strided_slice %257 {offsets = [0, 128], sizes = [1, 64], strides = [1, 1]} : vector<1x192xf32> to vector<1x64xf32>
    %263 = arith.mulf %261, %191 : vector<1x64xf32>
    %264 = arith.mulf %260, %259 : vector<1x64xf32>
    %265 = arith.addf %263, %264 : vector<1x64xf32>
    %266 = math.tanh %265 : vector<1x64xf32>
    %267 = arith.mulf %262, %266 : vector<1x64xf32>
    %c4 = arith.constant 4 : index
    %268 = memref.load %arg0[%c4] : memref<8xf32, #tpu.memory_space<smem>>
    %269 = vector.broadcast %268 : f32 to vector<1x256xf32>
    %270 = arith.mulf %269, %0 : vector<1x256xf32>
    %271 = arith.addf %270, %1 : vector<1x256xf32>
    %272 = vector.extract_strided_slice %219 {offsets = [0, 0], sizes = [1, 256], strides = [1, 1]} : vector<1x512xf32> to vector<1x256xf32>
    %273 = arith.addf %271, %272 : vector<1x256xf32>
    %274 = vector.extract_strided_slice %273 {offsets = [0, 0], sizes = [1, 192], strides = [1, 1]} : vector<1x256xf32> to vector<1x192xf32>
    %cst_74 = arith.constant 5.000000e-01 : f32
    %275 = vector.broadcast %cst_74 : f32 to vector<1x192xf32>
    %276 = arith.mulf %275, %274 : vector<1x192xf32>
    %277 = math.tanh %276 : vector<1x192xf32>
    %cst_75 = arith.constant 5.000000e-01 : f32
    %278 = vector.broadcast %cst_75 : f32 to vector<1x192xf32>
    %279 = arith.mulf %278, %277 : vector<1x192xf32>
    %cst_76 = arith.constant 5.000000e-01 : f32
    %280 = vector.broadcast %cst_76 : f32 to vector<1x192xf32>
    %281 = arith.addf %279, %280 : vector<1x192xf32>
    %282 = vector.extract_strided_slice %273 {offsets = [0, 192], sizes = [1, 64], strides = [1, 1]} : vector<1x256xf32> to vector<1x64xf32>
    %283 = math.tanh %282 : vector<1x64xf32>
    %284 = vector.extract_strided_slice %281 {offsets = [0, 0], sizes = [1, 64], strides = [1, 1]} : vector<1x192xf32> to vector<1x64xf32>
    %285 = vector.extract_strided_slice %281 {offsets = [0, 64], sizes = [1, 64], strides = [1, 1]} : vector<1x192xf32> to vector<1x64xf32>
    %286 = vector.extract_strided_slice %281 {offsets = [0, 128], sizes = [1, 64], strides = [1, 1]} : vector<1x192xf32> to vector<1x64xf32>
    %287 = arith.mulf %285, %215 : vector<1x64xf32>
    %288 = arith.mulf %284, %283 : vector<1x64xf32>
    %289 = arith.addf %287, %288 : vector<1x64xf32>
    %290 = math.tanh %289 : vector<1x64xf32>
    %291 = arith.mulf %286, %290 : vector<1x64xf32>
    %c0_77 = arith.constant 0 : index
    %c0_78 = arith.constant 0 : index
    %292 = vector.load %arg3[%c0_77, %c0_78] : memref<64x512xf32, #tpu.memory_space<vmem>>, vector<64x512xf32>
    %cst_79 = arith.constant dense<0.000000e+00> : vector<1x512xf32>
    %293 = tpu.matmul %291, %292, %cst_79 {dimension_numbers = #tpu.dot_dimension_numbers<[1], [0], [0], [1], [0, 0, 1, 1], [], []>} : vector<1x64xf32>, vector<64x512xf32>, vector<1x512xf32> -> vector<1x512xf32>
    %c0_80 = arith.constant 0 : index
    %c0_81 = arith.constant 0 : index
    %294 = vector.load %arg4[%c0_80, %c0_81] : memref<64x512xf32, #tpu.memory_space<vmem>>, vector<64x512xf32>
    %cst_82 = arith.constant dense<0.000000e+00> : vector<1x512xf32>
    %295 = tpu.matmul %267, %294, %cst_82 {dimension_numbers = #tpu.dot_dimension_numbers<[1], [0], [0], [1], [0, 0, 1, 1], [], []>} : vector<1x64xf32>, vector<64x512xf32>, vector<1x512xf32> -> vector<1x512xf32>
    %c0_83 = arith.constant 0 : index
    %c0_84 = arith.constant 0 : index
    %296 = vector.load %arg5[%c0_83, %c0_84] : memref<64x256xf32, #tpu.memory_space<vmem>>, vector<64x256xf32>
    %cst_85 = arith.constant dense<0.000000e+00> : vector<1x256xf32>
    %297 = tpu.matmul %244, %296, %cst_85 {dimension_numbers = #tpu.dot_dimension_numbers<[1], [0], [0], [1], [0, 0, 1, 1], [], []>} : vector<1x64xf32>, vector<64x256xf32>, vector<1x256xf32> -> vector<1x256xf32>
    %298 = vector.extract_strided_slice %295 {offsets = [0, 256], sizes = [1, 256], strides = [1, 1]} : vector<1x512xf32> to vector<1x256xf32>
    %299 = arith.addf %298, %3 : vector<1x256xf32>
    %300 = arith.addf %299, %297 : vector<1x256xf32>
    %301 = vector.extract_strided_slice %300 {offsets = [0, 0], sizes = [1, 192], strides = [1, 1]} : vector<1x256xf32> to vector<1x192xf32>
    %cst_86 = arith.constant 5.000000e-01 : f32
    %302 = vector.broadcast %cst_86 : f32 to vector<1x192xf32>
    %303 = arith.mulf %302, %301 : vector<1x192xf32>
    %304 = math.tanh %303 : vector<1x192xf32>
    %cst_87 = arith.constant 5.000000e-01 : f32
    %305 = vector.broadcast %cst_87 : f32 to vector<1x192xf32>
    %306 = arith.mulf %305, %304 : vector<1x192xf32>
    %cst_88 = arith.constant 5.000000e-01 : f32
    %307 = vector.broadcast %cst_88 : f32 to vector<1x192xf32>
    %308 = arith.addf %306, %307 : vector<1x192xf32>
    %309 = vector.extract_strided_slice %300 {offsets = [0, 192], sizes = [1, 64], strides = [1, 1]} : vector<1x256xf32> to vector<1x64xf32>
    %310 = math.tanh %309 : vector<1x64xf32>
    %311 = vector.extract_strided_slice %308 {offsets = [0, 0], sizes = [1, 64], strides = [1, 1]} : vector<1x192xf32> to vector<1x64xf32>
    %312 = vector.extract_strided_slice %308 {offsets = [0, 64], sizes = [1, 64], strides = [1, 1]} : vector<1x192xf32> to vector<1x64xf32>
    %313 = vector.extract_strided_slice %308 {offsets = [0, 128], sizes = [1, 64], strides = [1, 1]} : vector<1x192xf32> to vector<1x64xf32>
    %314 = arith.mulf %312, %242 : vector<1x64xf32>
    %315 = arith.mulf %311, %310 : vector<1x64xf32>
    %316 = arith.addf %314, %315 : vector<1x64xf32>
    %317 = math.tanh %316 : vector<1x64xf32>
    %318 = arith.mulf %313, %317 : vector<1x64xf32>
    %c3_89 = arith.constant 3 : index
    %c0_90 = arith.constant 0 : index
    %319 = vector.load %arg11[%c3_89, %c0_90] : memref<8x64xf32, #tpu.memory_space<vmem>>, vector<1x64xf32>
    tpu.vector_store %arg11[%c3_89, %c0_90], %318 {strides = array<i32>} : memref<8x64xf32, #tpu.memory_space<vmem>>, vector<1x64xf32>,
    %320 = vector.extract_strided_slice %293 {offsets = [0, 256], sizes = [1, 256], strides = [1, 1]} : vector<1x512xf32> to vector<1x256xf32>
    %321 = arith.addf %320, %2 : vector<1x256xf32>
    %322 = vector.extract_strided_slice %295 {offsets = [0, 0], sizes = [1, 256], strides = [1, 1]} : vector<1x512xf32> to vector<1x256xf32>
    %323 = arith.addf %321, %322 : vector<1x256xf32>
    %324 = vector.extract_strided_slice %323 {offsets = [0, 0], sizes = [1, 192], strides = [1, 1]} : vector<1x256xf32> to vector<1x192xf32>
    %cst_91 = arith.constant 5.000000e-01 : f32
    %325 = vector.broadcast %cst_91 : f32 to vector<1x192xf32>
    %326 = arith.mulf %325, %324 : vector<1x192xf32>
    %327 = math.tanh %326 : vector<1x192xf32>
    %cst_92 = arith.constant 5.000000e-01 : f32
    %328 = vector.broadcast %cst_92 : f32 to vector<1x192xf32>
    %329 = arith.mulf %328, %327 : vector<1x192xf32>
    %cst_93 = arith.constant 5.000000e-01 : f32
    %330 = vector.broadcast %cst_93 : f32 to vector<1x192xf32>
    %331 = arith.addf %329, %330 : vector<1x192xf32>
    %332 = vector.extract_strided_slice %323 {offsets = [0, 192], sizes = [1, 64], strides = [1, 1]} : vector<1x256xf32> to vector<1x64xf32>
    %333 = math.tanh %332 : vector<1x64xf32>
    %334 = vector.extract_strided_slice %331 {offsets = [0, 0], sizes = [1, 64], strides = [1, 1]} : vector<1x192xf32> to vector<1x64xf32>
    %335 = vector.extract_strided_slice %331 {offsets = [0, 64], sizes = [1, 64], strides = [1, 1]} : vector<1x192xf32> to vector<1x64xf32>
    %336 = vector.extract_strided_slice %331 {offsets = [0, 128], sizes = [1, 64], strides = [1, 1]} : vector<1x192xf32> to vector<1x64xf32>
    %337 = arith.mulf %335, %265 : vector<1x64xf32>
    %338 = arith.mulf %334, %333 : vector<1x64xf32>
    %339 = arith.addf %337, %338 : vector<1x64xf32>
    %340 = math.tanh %339 : vector<1x64xf32>
    %341 = arith.mulf %336, %340 : vector<1x64xf32>
    %c5 = arith.constant 5 : index
    %342 = memref.load %arg0[%c5] : memref<8xf32, #tpu.memory_space<smem>>
    %343 = vector.broadcast %342 : f32 to vector<1x256xf32>
    %344 = arith.mulf %343, %0 : vector<1x256xf32>
    %345 = arith.addf %344, %1 : vector<1x256xf32>
    %346 = vector.extract_strided_slice %293 {offsets = [0, 0], sizes = [1, 256], strides = [1, 1]} : vector<1x512xf32> to vector<1x256xf32>
    %347 = arith.addf %345, %346 : vector<1x256xf32>
    %348 = vector.extract_strided_slice %347 {offsets = [0, 0], sizes = [1, 192], strides = [1, 1]} : vector<1x256xf32> to vector<1x192xf32>
    %cst_94 = arith.constant 5.000000e-01 : f32
    %349 = vector.broadcast %cst_94 : f32 to vector<1x192xf32>
    %350 = arith.mulf %349, %348 : vector<1x192xf32>
    %351 = math.tanh %350 : vector<1x192xf32>
    %cst_95 = arith.constant 5.000000e-01 : f32
    %352 = vector.broadcast %cst_95 : f32 to vector<1x192xf32>
    %353 = arith.mulf %352, %351 : vector<1x192xf32>
    %cst_96 = arith.constant 5.000000e-01 : f32
    %354 = vector.broadcast %cst_96 : f32 to vector<1x192xf32>
    %355 = arith.addf %353, %354 : vector<1x192xf32>
    %356 = vector.extract_strided_slice %347 {offsets = [0, 192], sizes = [1, 64], strides = [1, 1]} : vector<1x256xf32> to vector<1x64xf32>
    %357 = math.tanh %356 : vector<1x64xf32>
    %358 = vector.extract_strided_slice %355 {offsets = [0, 0], sizes = [1, 64], strides = [1, 1]} : vector<1x192xf32> to vector<1x64xf32>
    %359 = vector.extract_strided_slice %355 {offsets = [0, 64], sizes = [1, 64], strides = [1, 1]} : vector<1x192xf32> to vector<1x64xf32>
    %360 = vector.extract_strided_slice %355 {offsets = [0, 128], sizes = [1, 64], strides = [1, 1]} : vector<1x192xf32> to vector<1x64xf32>
    %361 = arith.mulf %359, %289 : vector<1x64xf32>
    %362 = arith.mulf %358, %357 : vector<1x64xf32>
    %363 = arith.addf %361, %362 : vector<1x64xf32>
    %364 = math.tanh %363 : vector<1x64xf32>
    %365 = arith.mulf %360, %364 : vector<1x64xf32>
    %c0_97 = arith.constant 0 : index
    %c0_98 = arith.constant 0 : index
    %366 = vector.load %arg3[%c0_97, %c0_98] : memref<64x512xf32, #tpu.memory_space<vmem>>, vector<64x512xf32>
    %cst_99 = arith.constant dense<0.000000e+00> : vector<1x512xf32>
    %367 = tpu.matmul %365, %366, %cst_99 {dimension_numbers = #tpu.dot_dimension_numbers<[1], [0], [0], [1], [0, 0, 1, 1], [], []>} : vector<1x64xf32>, vector<64x512xf32>, vector<1x512xf32> -> vector<1x512xf32>
    %c0_100 = arith.constant 0 : index
    %c0_101 = arith.constant 0 : index
    %368 = vector.load %arg4[%c0_100, %c0_101] : memref<64x512xf32, #tpu.memory_space<vmem>>, vector<64x512xf32>
    %cst_102 = arith.constant dense<0.000000e+00> : vector<1x512xf32>
    %369 = tpu.matmul %341, %368, %cst_102 {dimension_numbers = #tpu.dot_dimension_numbers<[1], [0], [0], [1], [0, 0, 1, 1], [], []>} : vector<1x64xf32>, vector<64x512xf32>, vector<1x512xf32> -> vector<1x512xf32>
    %c0_103 = arith.constant 0 : index
    %c0_104 = arith.constant 0 : index
    %370 = vector.load %arg5[%c0_103, %c0_104] : memref<64x256xf32, #tpu.memory_space<vmem>>, vector<64x256xf32>
    %cst_105 = arith.constant dense<0.000000e+00> : vector<1x256xf32>
    %371 = tpu.matmul %318, %370, %cst_105 {dimension_numbers = #tpu.dot_dimension_numbers<[1], [0], [0], [1], [0, 0, 1, 1], [], []>} : vector<1x64xf32>, vector<64x256xf32>, vector<1x256xf32> -> vector<1x256xf32>
    %372 = vector.extract_strided_slice %369 {offsets = [0, 256], sizes = [1, 256], strides = [1, 1]} : vector<1x512xf32> to vector<1x256xf32>
    %373 = arith.addf %372, %3 : vector<1x256xf32>
    %374 = arith.addf %373, %371 : vector<1x256xf32>
    %375 = vector.extract_strided_slice %374 {offsets = [0, 0], sizes = [1, 192], strides = [1, 1]} : vector<1x256xf32> to vector<1x192xf32>
    %cst_106 = arith.constant 5.000000e-01 : f32
    %376 = vector.broadcast %cst_106 : f32 to vector<1x192xf32>
    %377 = arith.mulf %376, %375 : vector<1x192xf32>
    %378 = math.tanh %377 : vector<1x192xf32>
    %cst_107 = arith.constant 5.000000e-01 : f32
    %379 = vector.broadcast %cst_107 : f32 to vector<1x192xf32>
    %380 = arith.mulf %379, %378 : vector<1x192xf32>
    %cst_108 = arith.constant 5.000000e-01 : f32
    %381 = vector.broadcast %cst_108 : f32 to vector<1x192xf32>
    %382 = arith.addf %380, %381 : vector<1x192xf32>
    %383 = vector.extract_strided_slice %374 {offsets = [0, 192], sizes = [1, 64], strides = [1, 1]} : vector<1x256xf32> to vector<1x64xf32>
    %384 = math.tanh %383 : vector<1x64xf32>
    %385 = vector.extract_strided_slice %382 {offsets = [0, 0], sizes = [1, 64], strides = [1, 1]} : vector<1x192xf32> to vector<1x64xf32>
    %386 = vector.extract_strided_slice %382 {offsets = [0, 64], sizes = [1, 64], strides = [1, 1]} : vector<1x192xf32> to vector<1x64xf32>
    %387 = vector.extract_strided_slice %382 {offsets = [0, 128], sizes = [1, 64], strides = [1, 1]} : vector<1x192xf32> to vector<1x64xf32>
    %388 = arith.mulf %386, %316 : vector<1x64xf32>
    %389 = arith.mulf %385, %384 : vector<1x64xf32>
    %390 = arith.addf %388, %389 : vector<1x64xf32>
    %391 = math.tanh %390 : vector<1x64xf32>
    %392 = arith.mulf %387, %391 : vector<1x64xf32>
    %c4_109 = arith.constant 4 : index
    %c0_110 = arith.constant 0 : index
    %393 = vector.load %arg11[%c4_109, %c0_110] : memref<8x64xf32, #tpu.memory_space<vmem>>, vector<1x64xf32>
    tpu.vector_store %arg11[%c4_109, %c0_110], %392 {strides = array<i32>} : memref<8x64xf32, #tpu.memory_space<vmem>>, vector<1x64xf32>,
    %394 = vector.extract_strided_slice %367 {offsets = [0, 256], sizes = [1, 256], strides = [1, 1]} : vector<1x512xf32> to vector<1x256xf32>
    %395 = arith.addf %394, %2 : vector<1x256xf32>
    %396 = vector.extract_strided_slice %369 {offsets = [0, 0], sizes = [1, 256], strides = [1, 1]} : vector<1x512xf32> to vector<1x256xf32>
    %397 = arith.addf %395, %396 : vector<1x256xf32>
    %398 = vector.extract_strided_slice %397 {offsets = [0, 0], sizes = [1, 192], strides = [1, 1]} : vector<1x256xf32> to vector<1x192xf32>
    %cst_111 = arith.constant 5.000000e-01 : f32
    %399 = vector.broadcast %cst_111 : f32 to vector<1x192xf32>
    %400 = arith.mulf %399, %398 : vector<1x192xf32>
    %401 = math.tanh %400 : vector<1x192xf32>
    %cst_112 = arith.constant 5.000000e-01 : f32
    %402 = vector.broadcast %cst_112 : f32 to vector<1x192xf32>
    %403 = arith.mulf %402, %401 : vector<1x192xf32>
    %cst_113 = arith.constant 5.000000e-01 : f32
    %404 = vector.broadcast %cst_113 : f32 to vector<1x192xf32>
    %405 = arith.addf %403, %404 : vector<1x192xf32>
    %406 = vector.extract_strided_slice %397 {offsets = [0, 192], sizes = [1, 64], strides = [1, 1]} : vector<1x256xf32> to vector<1x64xf32>
    %407 = math.tanh %406 : vector<1x64xf32>
    %408 = vector.extract_strided_slice %405 {offsets = [0, 0], sizes = [1, 64], strides = [1, 1]} : vector<1x192xf32> to vector<1x64xf32>
    %409 = vector.extract_strided_slice %405 {offsets = [0, 64], sizes = [1, 64], strides = [1, 1]} : vector<1x192xf32> to vector<1x64xf32>
    %410 = vector.extract_strided_slice %405 {offsets = [0, 128], sizes = [1, 64], strides = [1, 1]} : vector<1x192xf32> to vector<1x64xf32>
    %411 = arith.mulf %409, %339 : vector<1x64xf32>
    %412 = arith.mulf %408, %407 : vector<1x64xf32>
    %413 = arith.addf %411, %412 : vector<1x64xf32>
    %414 = math.tanh %413 : vector<1x64xf32>
    %415 = arith.mulf %410, %414 : vector<1x64xf32>
    %c6 = arith.constant 6 : index
    %416 = memref.load %arg0[%c6] : memref<8xf32, #tpu.memory_space<smem>>
    %417 = vector.broadcast %416 : f32 to vector<1x256xf32>
    %418 = arith.mulf %417, %0 : vector<1x256xf32>
    %419 = arith.addf %418, %1 : vector<1x256xf32>
    %420 = vector.extract_strided_slice %367 {offsets = [0, 0], sizes = [1, 256], strides = [1, 1]} : vector<1x512xf32> to vector<1x256xf32>
    %421 = arith.addf %419, %420 : vector<1x256xf32>
    %422 = vector.extract_strided_slice %421 {offsets = [0, 0], sizes = [1, 192], strides = [1, 1]} : vector<1x256xf32> to vector<1x192xf32>
    %cst_114 = arith.constant 5.000000e-01 : f32
    %423 = vector.broadcast %cst_114 : f32 to vector<1x192xf32>
    %424 = arith.mulf %423, %422 : vector<1x192xf32>
    %425 = math.tanh %424 : vector<1x192xf32>
    %cst_115 = arith.constant 5.000000e-01 : f32
    %426 = vector.broadcast %cst_115 : f32 to vector<1x192xf32>
    %427 = arith.mulf %426, %425 : vector<1x192xf32>
    %cst_116 = arith.constant 5.000000e-01 : f32
    %428 = vector.broadcast %cst_116 : f32 to vector<1x192xf32>
    %429 = arith.addf %427, %428 : vector<1x192xf32>
    %430 = vector.extract_strided_slice %421 {offsets = [0, 192], sizes = [1, 64], strides = [1, 1]} : vector<1x256xf32> to vector<1x64xf32>
    %431 = math.tanh %430 : vector<1x64xf32>
    %432 = vector.extract_strided_slice %429 {offsets = [0, 0], sizes = [1, 64], strides = [1, 1]} : vector<1x192xf32> to vector<1x64xf32>
    %433 = vector.extract_strided_slice %429 {offsets = [0, 64], sizes = [1, 64], strides = [1, 1]} : vector<1x192xf32> to vector<1x64xf32>
    %434 = vector.extract_strided_slice %429 {offsets = [0, 128], sizes = [1, 64], strides = [1, 1]} : vector<1x192xf32> to vector<1x64xf32>
    %435 = arith.mulf %433, %363 : vector<1x64xf32>
    %436 = arith.mulf %432, %431 : vector<1x64xf32>
    %437 = arith.addf %435, %436 : vector<1x64xf32>
    %438 = math.tanh %437 : vector<1x64xf32>
    %439 = arith.mulf %434, %438 : vector<1x64xf32>
    %c0_117 = arith.constant 0 : index
    %c0_118 = arith.constant 0 : index
    %440 = vector.load %arg3[%c0_117, %c0_118] : memref<64x512xf32, #tpu.memory_space<vmem>>, vector<64x512xf32>
    %cst_119 = arith.constant dense<0.000000e+00> : vector<1x512xf32>
    %441 = tpu.matmul %439, %440, %cst_119 {dimension_numbers = #tpu.dot_dimension_numbers<[1], [0], [0], [1], [0, 0, 1, 1], [], []>} : vector<1x64xf32>, vector<64x512xf32>, vector<1x512xf32> -> vector<1x512xf32>
    %c0_120 = arith.constant 0 : index
    %c0_121 = arith.constant 0 : index
    %442 = vector.load %arg4[%c0_120, %c0_121] : memref<64x512xf32, #tpu.memory_space<vmem>>, vector<64x512xf32>
    %cst_122 = arith.constant dense<0.000000e+00> : vector<1x512xf32>
    %443 = tpu.matmul %415, %442, %cst_122 {dimension_numbers = #tpu.dot_dimension_numbers<[1], [0], [0], [1], [0, 0, 1, 1], [], []>} : vector<1x64xf32>, vector<64x512xf32>, vector<1x512xf32> -> vector<1x512xf32>
    %c0_123 = arith.constant 0 : index
    %c0_124 = arith.constant 0 : index
    %444 = vector.load %arg5[%c0_123, %c0_124] : memref<64x256xf32, #tpu.memory_space<vmem>>, vector<64x256xf32>
    %cst_125 = arith.constant dense<0.000000e+00> : vector<1x256xf32>
    %445 = tpu.matmul %392, %444, %cst_125 {dimension_numbers = #tpu.dot_dimension_numbers<[1], [0], [0], [1], [0, 0, 1, 1], [], []>} : vector<1x64xf32>, vector<64x256xf32>, vector<1x256xf32> -> vector<1x256xf32>
    %446 = vector.extract_strided_slice %443 {offsets = [0, 256], sizes = [1, 256], strides = [1, 1]} : vector<1x512xf32> to vector<1x256xf32>
    %447 = arith.addf %446, %3 : vector<1x256xf32>
    %448 = arith.addf %447, %445 : vector<1x256xf32>
    %449 = vector.extract_strided_slice %448 {offsets = [0, 0], sizes = [1, 192], strides = [1, 1]} : vector<1x256xf32> to vector<1x192xf32>
    %cst_126 = arith.constant 5.000000e-01 : f32
    %450 = vector.broadcast %cst_126 : f32 to vector<1x192xf32>
    %451 = arith.mulf %450, %449 : vector<1x192xf32>
    %452 = math.tanh %451 : vector<1x192xf32>
    %cst_127 = arith.constant 5.000000e-01 : f32
    %453 = vector.broadcast %cst_127 : f32 to vector<1x192xf32>
    %454 = arith.mulf %453, %452 : vector<1x192xf32>
    %cst_128 = arith.constant 5.000000e-01 : f32
    %455 = vector.broadcast %cst_128 : f32 to vector<1x192xf32>
    %456 = arith.addf %454, %455 : vector<1x192xf32>
    %457 = vector.extract_strided_slice %448 {offsets = [0, 192], sizes = [1, 64], strides = [1, 1]} : vector<1x256xf32> to vector<1x64xf32>
    %458 = math.tanh %457 : vector<1x64xf32>
    %459 = vector.extract_strided_slice %456 {offsets = [0, 0], sizes = [1, 64], strides = [1, 1]} : vector<1x192xf32> to vector<1x64xf32>
    %460 = vector.extract_strided_slice %456 {offsets = [0, 64], sizes = [1, 64], strides = [1, 1]} : vector<1x192xf32> to vector<1x64xf32>
    %461 = vector.extract_strided_slice %456 {offsets = [0, 128], sizes = [1, 64], strides = [1, 1]} : vector<1x192xf32> to vector<1x64xf32>
    %462 = arith.mulf %460, %390 : vector<1x64xf32>
    %463 = arith.mulf %459, %458 : vector<1x64xf32>
    %464 = arith.addf %462, %463 : vector<1x64xf32>
    %465 = math.tanh %464 : vector<1x64xf32>
    %466 = arith.mulf %461, %465 : vector<1x64xf32>
    %c5_129 = arith.constant 5 : index
    %c0_130 = arith.constant 0 : index
    %467 = vector.load %arg11[%c5_129, %c0_130] : memref<8x64xf32, #tpu.memory_space<vmem>>, vector<1x64xf32>
    tpu.vector_store %arg11[%c5_129, %c0_130], %466 {strides = array<i32>} : memref<8x64xf32, #tpu.memory_space<vmem>>, vector<1x64xf32>,
    %468 = vector.extract_strided_slice %441 {offsets = [0, 256], sizes = [1, 256], strides = [1, 1]} : vector<1x512xf32> to vector<1x256xf32>
    %469 = arith.addf %468, %2 : vector<1x256xf32>
    %470 = vector.extract_strided_slice %443 {offsets = [0, 0], sizes = [1, 256], strides = [1, 1]} : vector<1x512xf32> to vector<1x256xf32>
    %471 = arith.addf %469, %470 : vector<1x256xf32>
    %472 = vector.extract_strided_slice %471 {offsets = [0, 0], sizes = [1, 192], strides = [1, 1]} : vector<1x256xf32> to vector<1x192xf32>
    %cst_131 = arith.constant 5.000000e-01 : f32
    %473 = vector.broadcast %cst_131 : f32 to vector<1x192xf32>
    %474 = arith.mulf %473, %472 : vector<1x192xf32>
    %475 = math.tanh %474 : vector<1x192xf32>
    %cst_132 = arith.constant 5.000000e-01 : f32
    %476 = vector.broadcast %cst_132 : f32 to vector<1x192xf32>
    %477 = arith.mulf %476, %475 : vector<1x192xf32>
    %cst_133 = arith.constant 5.000000e-01 : f32
    %478 = vector.broadcast %cst_133 : f32 to vector<1x192xf32>
    %479 = arith.addf %477, %478 : vector<1x192xf32>
    %480 = vector.extract_strided_slice %471 {offsets = [0, 192], sizes = [1, 64], strides = [1, 1]} : vector<1x256xf32> to vector<1x64xf32>
    %481 = math.tanh %480 : vector<1x64xf32>
    %482 = vector.extract_strided_slice %479 {offsets = [0, 0], sizes = [1, 64], strides = [1, 1]} : vector<1x192xf32> to vector<1x64xf32>
    %483 = vector.extract_strided_slice %479 {offsets = [0, 64], sizes = [1, 64], strides = [1, 1]} : vector<1x192xf32> to vector<1x64xf32>
    %484 = vector.extract_strided_slice %479 {offsets = [0, 128], sizes = [1, 64], strides = [1, 1]} : vector<1x192xf32> to vector<1x64xf32>
    %485 = arith.mulf %483, %413 : vector<1x64xf32>
    %486 = arith.mulf %482, %481 : vector<1x64xf32>
    %487 = arith.addf %485, %486 : vector<1x64xf32>
    %488 = math.tanh %487 : vector<1x64xf32>
    %489 = arith.mulf %484, %488 : vector<1x64xf32>
    %c7 = arith.constant 7 : index
    %490 = memref.load %arg0[%c7] : memref<8xf32, #tpu.memory_space<smem>>
    %491 = vector.broadcast %490 : f32 to vector<1x256xf32>
    %492 = arith.mulf %491, %0 : vector<1x256xf32>
    %493 = arith.addf %492, %1 : vector<1x256xf32>
    %494 = vector.extract_strided_slice %441 {offsets = [0, 0], sizes = [1, 256], strides = [1, 1]} : vector<1x512xf32> to vector<1x256xf32>
    %495 = arith.addf %493, %494 : vector<1x256xf32>
    %496 = vector.extract_strided_slice %495 {offsets = [0, 0], sizes = [1, 192], strides = [1, 1]} : vector<1x256xf32> to vector<1x192xf32>
    %cst_134 = arith.constant 5.000000e-01 : f32
    %497 = vector.broadcast %cst_134 : f32 to vector<1x192xf32>
    %498 = arith.mulf %497, %496 : vector<1x192xf32>
    %499 = math.tanh %498 : vector<1x192xf32>
    %cst_135 = arith.constant 5.000000e-01 : f32
    %500 = vector.broadcast %cst_135 : f32 to vector<1x192xf32>
    %501 = arith.mulf %500, %499 : vector<1x192xf32>
    %cst_136 = arith.constant 5.000000e-01 : f32
    %502 = vector.broadcast %cst_136 : f32 to vector<1x192xf32>
    %503 = arith.addf %501, %502 : vector<1x192xf32>
    %504 = vector.extract_strided_slice %495 {offsets = [0, 192], sizes = [1, 64], strides = [1, 1]} : vector<1x256xf32> to vector<1x64xf32>
    %505 = math.tanh %504 : vector<1x64xf32>
    %506 = vector.extract_strided_slice %503 {offsets = [0, 0], sizes = [1, 64], strides = [1, 1]} : vector<1x192xf32> to vector<1x64xf32>
    %507 = vector.extract_strided_slice %503 {offsets = [0, 64], sizes = [1, 64], strides = [1, 1]} : vector<1x192xf32> to vector<1x64xf32>
    %508 = vector.extract_strided_slice %503 {offsets = [0, 128], sizes = [1, 64], strides = [1, 1]} : vector<1x192xf32> to vector<1x64xf32>
    %509 = arith.mulf %507, %437 : vector<1x64xf32>
    %510 = arith.mulf %506, %505 : vector<1x64xf32>
    %511 = arith.addf %509, %510 : vector<1x64xf32>
    %512 = math.tanh %511 : vector<1x64xf32>
    %513 = arith.mulf %508, %512 : vector<1x64xf32>
    %c0_137 = arith.constant 0 : index
    %c0_138 = arith.constant 0 : index
    %514 = vector.load %arg3[%c0_137, %c0_138] : memref<64x512xf32, #tpu.memory_space<vmem>>, vector<64x512xf32>
    %cst_139 = arith.constant dense<0.000000e+00> : vector<1x512xf32>
    %515 = tpu.matmul %513, %514, %cst_139 {dimension_numbers = #tpu.dot_dimension_numbers<[1], [0], [0], [1], [0, 0, 1, 1], [], []>} : vector<1x64xf32>, vector<64x512xf32>, vector<1x512xf32> -> vector<1x512xf32>
    %c0_140 = arith.constant 0 : index
    %c0_141 = arith.constant 0 : index
    %516 = vector.load %arg4[%c0_140, %c0_141] : memref<64x512xf32, #tpu.memory_space<vmem>>, vector<64x512xf32>
    %cst_142 = arith.constant dense<0.000000e+00> : vector<1x512xf32>
    %517 = tpu.matmul %489, %516, %cst_142 {dimension_numbers = #tpu.dot_dimension_numbers<[1], [0], [0], [1], [0, 0, 1, 1], [], []>} : vector<1x64xf32>, vector<64x512xf32>, vector<1x512xf32> -> vector<1x512xf32>
    %c0_143 = arith.constant 0 : index
    %c0_144 = arith.constant 0 : index
    %518 = vector.load %arg5[%c0_143, %c0_144] : memref<64x256xf32, #tpu.memory_space<vmem>>, vector<64x256xf32>
    %cst_145 = arith.constant dense<0.000000e+00> : vector<1x256xf32>
    %519 = tpu.matmul %466, %518, %cst_145 {dimension_numbers = #tpu.dot_dimension_numbers<[1], [0], [0], [1], [0, 0, 1, 1], [], []>} : vector<1x64xf32>, vector<64x256xf32>, vector<1x256xf32> -> vector<1x256xf32>
    %520 = vector.extract_strided_slice %517 {offsets = [0, 256], sizes = [1, 256], strides = [1, 1]} : vector<1x512xf32> to vector<1x256xf32>
    %521 = arith.addf %520, %3 : vector<1x256xf32>
    %522 = arith.addf %521, %519 : vector<1x256xf32>
    %523 = vector.extract_strided_slice %522 {offsets = [0, 0], sizes = [1, 192], strides = [1, 1]} : vector<1x256xf32> to vector<1x192xf32>
    %cst_146 = arith.constant 5.000000e-01 : f32
    %524 = vector.broadcast %cst_146 : f32 to vector<1x192xf32>
    %525 = arith.mulf %524, %523 : vector<1x192xf32>
    %526 = math.tanh %525 : vector<1x192xf32>
    %cst_147 = arith.constant 5.000000e-01 : f32
    %527 = vector.broadcast %cst_147 : f32 to vector<1x192xf32>
    %528 = arith.mulf %527, %526 : vector<1x192xf32>
    %cst_148 = arith.constant 5.000000e-01 : f32
    %529 = vector.broadcast %cst_148 : f32 to vector<1x192xf32>
    %530 = arith.addf %528, %529 : vector<1x192xf32>
    %531 = vector.extract_strided_slice %522 {offsets = [0, 192], sizes = [1, 64], strides = [1, 1]} : vector<1x256xf32> to vector<1x64xf32>
    %532 = math.tanh %531 : vector<1x64xf32>
    %533 = vector.extract_strided_slice %530 {offsets = [0, 0], sizes = [1, 64], strides = [1, 1]} : vector<1x192xf32> to vector<1x64xf32>
    %534 = vector.extract_strided_slice %530 {offsets = [0, 64], sizes = [1, 64], strides = [1, 1]} : vector<1x192xf32> to vector<1x64xf32>
    %535 = vector.extract_strided_slice %530 {offsets = [0, 128], sizes = [1, 64], strides = [1, 1]} : vector<1x192xf32> to vector<1x64xf32>
    %536 = arith.mulf %534, %464 : vector<1x64xf32>
    %537 = arith.mulf %533, %532 : vector<1x64xf32>
    %538 = arith.addf %536, %537 : vector<1x64xf32>
    %539 = math.tanh %538 : vector<1x64xf32>
    %540 = arith.mulf %535, %539 : vector<1x64xf32>
    %c6_149 = arith.constant 6 : index
    %c0_150 = arith.constant 0 : index
    %541 = vector.load %arg11[%c6_149, %c0_150] : memref<8x64xf32, #tpu.memory_space<vmem>>, vector<1x64xf32>
    tpu.vector_store %arg11[%c6_149, %c0_150], %540 {strides = array<i32>} : memref<8x64xf32, #tpu.memory_space<vmem>>, vector<1x64xf32>,
    %542 = vector.extract_strided_slice %515 {offsets = [0, 256], sizes = [1, 256], strides = [1, 1]} : vector<1x512xf32> to vector<1x256xf32>
    %543 = arith.addf %542, %2 : vector<1x256xf32>
    %544 = vector.extract_strided_slice %517 {offsets = [0, 0], sizes = [1, 256], strides = [1, 1]} : vector<1x512xf32> to vector<1x256xf32>
    %545 = arith.addf %543, %544 : vector<1x256xf32>
    %546 = vector.extract_strided_slice %545 {offsets = [0, 0], sizes = [1, 192], strides = [1, 1]} : vector<1x256xf32> to vector<1x192xf32>
    %cst_151 = arith.constant 5.000000e-01 : f32
    %547 = vector.broadcast %cst_151 : f32 to vector<1x192xf32>
    %548 = arith.mulf %547, %546 : vector<1x192xf32>
    %549 = math.tanh %548 : vector<1x192xf32>
    %cst_152 = arith.constant 5.000000e-01 : f32
    %550 = vector.broadcast %cst_152 : f32 to vector<1x192xf32>
    %551 = arith.mulf %550, %549 : vector<1x192xf32>
    %cst_153 = arith.constant 5.000000e-01 : f32
    %552 = vector.broadcast %cst_153 : f32 to vector<1x192xf32>
    %553 = arith.addf %551, %552 : vector<1x192xf32>
    %554 = vector.extract_strided_slice %545 {offsets = [0, 192], sizes = [1, 64], strides = [1, 1]} : vector<1x256xf32> to vector<1x64xf32>
    %555 = math.tanh %554 : vector<1x64xf32>
    %556 = vector.extract_strided_slice %553 {offsets = [0, 0], sizes = [1, 64], strides = [1, 1]} : vector<1x192xf32> to vector<1x64xf32>
    %557 = vector.extract_strided_slice %553 {offsets = [0, 64], sizes = [1, 64], strides = [1, 1]} : vector<1x192xf32> to vector<1x64xf32>
    %558 = vector.extract_strided_slice %553 {offsets = [0, 128], sizes = [1, 64], strides = [1, 1]} : vector<1x192xf32> to vector<1x64xf32>
    %559 = arith.mulf %557, %487 : vector<1x64xf32>
    %560 = arith.mulf %556, %555 : vector<1x64xf32>
    %561 = arith.addf %559, %560 : vector<1x64xf32>
    %562 = math.tanh %561 : vector<1x64xf32>
    %563 = arith.mulf %558, %562 : vector<1x64xf32>
    %c0_154 = arith.constant 0 : index
    %c0_155 = arith.constant 0 : index
    %564 = vector.load %arg4[%c0_154, %c0_155] : memref<64x512xf32, #tpu.memory_space<vmem>>, vector<64x512xf32>
    %cst_156 = arith.constant dense<0.000000e+00> : vector<1x512xf32>
    %565 = tpu.matmul %563, %564, %cst_156 {dimension_numbers = #tpu.dot_dimension_numbers<[1], [0], [0], [1], [0, 0, 1, 1], [], []>} : vector<1x64xf32>, vector<64x512xf32>, vector<1x512xf32> -> vector<1x512xf32>
    %c0_157 = arith.constant 0 : index
    %c0_158 = arith.constant 0 : index
    %566 = vector.load %arg5[%c0_157, %c0_158] : memref<64x256xf32, #tpu.memory_space<vmem>>, vector<64x256xf32>
    %cst_159 = arith.constant dense<0.000000e+00> : vector<1x256xf32>
    %567 = tpu.matmul %540, %566, %cst_159 {dimension_numbers = #tpu.dot_dimension_numbers<[1], [0], [0], [1], [0, 0, 1, 1], [], []>} : vector<1x64xf32>, vector<64x256xf32>, vector<1x256xf32> -> vector<1x256xf32>
    %568 = vector.extract_strided_slice %565 {offsets = [0, 256], sizes = [1, 256], strides = [1, 1]} : vector<1x512xf32> to vector<1x256xf32>
    %569 = arith.addf %568, %3 : vector<1x256xf32>
    %570 = arith.addf %569, %567 : vector<1x256xf32>
    %571 = vector.extract_strided_slice %570 {offsets = [0, 0], sizes = [1, 192], strides = [1, 1]} : vector<1x256xf32> to vector<1x192xf32>
    %cst_160 = arith.constant 5.000000e-01 : f32
    %572 = vector.broadcast %cst_160 : f32 to vector<1x192xf32>
    %573 = arith.mulf %572, %571 : vector<1x192xf32>
    %574 = math.tanh %573 : vector<1x192xf32>
    %cst_161 = arith.constant 5.000000e-01 : f32
    %575 = vector.broadcast %cst_161 : f32 to vector<1x192xf32>
    %576 = arith.mulf %575, %574 : vector<1x192xf32>
    %cst_162 = arith.constant 5.000000e-01 : f32
    %577 = vector.broadcast %cst_162 : f32 to vector<1x192xf32>
    %578 = arith.addf %576, %577 : vector<1x192xf32>
    %579 = vector.extract_strided_slice %570 {offsets = [0, 192], sizes = [1, 64], strides = [1, 1]} : vector<1x256xf32> to vector<1x64xf32>
    %580 = math.tanh %579 : vector<1x64xf32>
    %581 = vector.extract_strided_slice %578 {offsets = [0, 0], sizes = [1, 64], strides = [1, 1]} : vector<1x192xf32> to vector<1x64xf32>
    %582 = vector.extract_strided_slice %578 {offsets = [0, 64], sizes = [1, 64], strides = [1, 1]} : vector<1x192xf32> to vector<1x64xf32>
    %583 = vector.extract_strided_slice %578 {offsets = [0, 128], sizes = [1, 64], strides = [1, 1]} : vector<1x192xf32> to vector<1x64xf32>
    %584 = arith.mulf %582, %538 : vector<1x64xf32>
    %585 = arith.mulf %581, %580 : vector<1x64xf32>
    %586 = arith.addf %584, %585 : vector<1x64xf32>
    %587 = math.tanh %586 : vector<1x64xf32>
    %588 = arith.mulf %583, %587 : vector<1x64xf32>
    %c7_163 = arith.constant 7 : index
    %c0_164 = arith.constant 0 : index
    %589 = vector.load %arg11[%c7_163, %c0_164] : memref<8x64xf32, #tpu.memory_space<vmem>>, vector<1x64xf32>
    tpu.vector_store %arg11[%c7_163, %c0_164], %588 {strides = array<i32>} : memref<8x64xf32, #tpu.memory_space<vmem>>, vector<1x64xf32>,
    %c0_165 = arith.constant 0 : index
    %c0_166 = arith.constant 0 : index
    %590 = vector.load %arg11[%c0_165, %c0_166] : memref<8x64xf32, #tpu.memory_space<vmem>>, vector<8x64xf32>
    %c0_167 = arith.constant 0 : index
    %c0_168 = arith.constant 0 : index
    %591 = vector.load %arg8[%c0_167, %c0_168] : memref<64x5xf32, #tpu.memory_space<vmem>>, vector<64x5xf32>
    %cst_169 = arith.constant dense<0.000000e+00> : vector<8x5xf32>
    %592 = tpu.matmul %590, %591, %cst_169 {dimension_numbers = #tpu.dot_dimension_numbers<[1], [0], [0], [1], [0, 0, 1, 1], [], []>} : vector<8x64xf32>, vector<64x5xf32>, vector<8x5xf32> -> vector<8x5xf32>
    %c0_170 = arith.constant 0 : index
    %c0_171 = arith.constant 0 : index
    %593 = vector.load %arg9[%c0_170, %c0_171] : memref<1x5xf32, #tpu.memory_space<vmem>>, vector<1x5xf32>
    %594 = vector.broadcast %593 : vector<1x5xf32> to vector<8x5xf32>
    %595 = arith.addf %592, %594 : vector<8x5xf32>
    %c0_172 = arith.constant 0 : index
    %c0_173 = arith.constant 0 : index
    %596 = vector.load %arg10[%c0_172, %c0_173] : memref<8x5xf32, #tpu.memory_space<vmem>>, vector<8x5xf32>
    tpu.vector_store %arg10[%c0_172, %c0_173], %595 {strides = array<i32>} : memref<8x5xf32, #tpu.memory_space<vmem>>, vector<8x5xf32>,
    return
  }
}

</mosaic_0001>

<llo_original>
// kernel: lstm_model_forward.1
$region0: #{lstm_model_forward.1}
  #allocation0 [shape = 'u32[]', space=smem, size = 0x4, offset = 0x4, fixed_abs, tag = 'smem constant byte address 0x4 - core index']
  #allocation1 [shape = 'u32[144,128]{1,0:T(1,128)}', space=vmem, size = 0x12000, scoped, tag = 'internal scratch']
  #allocation2 [shape = 'f32[8,64]{1,0:T(8,128)}', space=vmem, size = 0x1000, scoped, tag = 'scratch operand']
  %s0 = inlined_call_operand.vmem [shape: f32[8], index: 0, kind: input, shape index: {}]
  %s1 = inlined_call_operand.vmem [shape: f32[1,256], index: 1, kind: input, shape index: {}]
  %s2 = inlined_call_operand.vmem [shape: f32[1,256], index: 2, kind: input, shape index: {}]
  %s3 = inlined_call_operand.hbm [shape: f32[64,512], index: 3, kind: input, shape index: {}]
  %s4 = inlined_call_operand.hbm [shape: f32[64,512], index: 4, kind: input, shape index: {}]
  %s5 = inlined_call_operand.hbm [shape: f32[64,256], index: 5, kind: input, shape index: {}]
  %s6 = inlined_call_operand.vmem [shape: f32[1,256], index: 6, kind: input, shape index: {}]
  %s7 = inlined_call_operand.vmem [shape: f32[1,256], index: 7, kind: input, shape index: {}]
  %s8 = inlined_call_operand.vmem [shape: f32[64,5], index: 8, kind: input, shape index: {}]
  %s9 = inlined_call_operand.vmem [shape: f32[1,5], index: 9, kind: input, shape index: {}]
  %s10 = inlined_call_operand.hbm [shape: f32[8,5], index: 10, kind: output, shape index: {}]
  %s11 = sld [smem:[#allocation0]]
  $region66: #{lstm_model_forward.1} parent=0
    _
  %s13 = ssub.s32 1, %s11
  %s14 = scalar_select 0, %s13, %s11
  $region1: #{lstm_model_forward.1} parent=0
    #allocation3 [shape = 'u8[512]{0}', space=smem, size = 0x200, scoped, tag = 'input window, operand 0, single buffered']
    #allocation4 [shape = 's32[1]{0}', space=sflag, size = 0x4, scoped, tag = 'scoped memory for lstm_model_forward.1']
    #allocation5 [shape = 's32[1]{0}', space=sflag, size = 0x4, scoped, tag = 'scoped memory for lstm_model_forward.1']
    #allocation6 [shape = 's32[1]{0}', space=sflag, size = 0x4, scoped, tag = 'scoped memory for lstm_model_forward.1']
    #allocation7 [shape = 'u8[131072]{0}', space=vmem, size = 0x20000, scoped, tag = 'input window, operand 3, single buffered']
    #allocation8 [shape = 'u8[131072]{0}', space=vmem, size = 0x20000, scoped, tag = 'input window, operand 4, single buffered']
    #allocation9 [shape = 's32[1]{0}', space=sflag, size = 0x4, scoped, tag = 'scoped memory for lstm_model_forward.1']
    #allocation10 [shape = 'u8[65536]{0}', space=vmem, size = 0x10000, scoped, tag = 'input window, operand 5, single buffered']
    #allocation11 [shape = 'u8[4096]{0}', space=vmem, size = 0x1000, scoped, tag = 'output window, operand 0, single buffered']
    %15 = vsyncpa [#allocation6], 0
    %16 = vsyncpa [#allocation4], 0
    %17 = vsyncpa [#allocation9], 0
    %18 = vsyncpa [#allocation5], 0
    // Predicated region
    $region2: #{lstm_model_forward.1} parent=1 // pred_check
      _
    $region3: #{lstm_model_forward.1} parent=1 // pred_check_branch
      %20 = sbr.rel (0) target = $region5
    $region4: #{lstm_model_forward.1} parent=1 // pred_region
      %s22 = ssub.s32 16, 16
      %23 = vsyncadd [#allocation6], %s22
      %s25 = sshll.u32 %s0, 4
      %s26 = int_to_ptr.vmem [resolvable:$true] %s25
      %28 = dma.vmem_to_smem %s26, 16, [#allocation3], [#allocation6]
    $region5: #{lstm_model_forward.1} parent=1 // pred_fallthru
      _
    // Predicated region
    $region6: #{lstm_model_forward.1} parent=1 // pred_check
      _
    $region7: #{lstm_model_forward.1} parent=1 // pred_check_branch
      %30 = sbr.rel (0) target = $region9
    $region8: #{lstm_model_forward.1} parent=1 // pred_region
      _
    $region9: #{lstm_model_forward.1} parent=1 // pred_fallthru
      _
    // Predicated region
    $region10: #{lstm_model_forward.1} parent=1 // pred_check
      _
    $region11: #{lstm_model_forward.1} parent=1 // pred_check_branch
      %32 = sbr.rel (0) target = $region13
    $region12: #{lstm_model_forward.1} parent=1 // pred_region
      _
    $region13: #{lstm_model_forward.1} parent=1 // pred_fallthru
      _
    // Predicated region
    $region14: #{lstm_model_forward.1} parent=1 // pred_check
      _
    $region15: #{lstm_model_forward.1} parent=1 // pred_check_branch
      %34 = sbr.rel (0) target = $region17
    $region16: #{lstm_model_forward.1} parent=1 // pred_region
      %s36 = ssub.s32 4096, 4096
      %37 = vsyncadd [#allocation4], %s36
      %s38 = sshll.u32 [#allocation7], 4
      %s39 = int_to_ptr.vmem [resolvable:$true] %s38
      %44 = dma.hbm_to_vmem [thread:$0]  %s3, 4096, %s39, [#allocation4], 512, 512, 32
    $region17: #{lstm_model_forward.1} parent=1 // pred_fallthru
      _
    // Predicated region
    $region18: #{lstm_model_forward.1} parent=1 // pred_check
      _
    $region19: #{lstm_model_forward.1} parent=1 // pred_check_branch
      %46 = sbr.rel (0) target = $region21
    $region20: #{lstm_model_forward.1} parent=1 // pred_region
      %s48 = ssub.s32 4096, 4096
      %49 = vsyncadd [#allocation9], %s48
      %s50 = sshll.u32 [#allocation8], 4
      %s51 = int_to_ptr.vmem [resolvable:$true] %s50
      %56 = dma.hbm_to_vmem [thread:$0]  %s4, 4096, %s51, [#allocation9], 512, 512, 32
    $region21: #{lstm_model_forward.1} parent=1 // pred_fallthru
      _
    // Predicated region
    $region22: #{lstm_model_forward.1} parent=1 // pred_check
      _
    $region23: #{lstm_model_forward.1} parent=1 // pred_check_branch
      %58 = sbr.rel (0) target = $region25
    $region24: #{lstm_model_forward.1} parent=1 // pred_region
      %s60 = ssub.s32 2048, 2048
      %61 = vsyncadd [#allocation9], %s60
      %s62 = sshll.u32 [#allocation10], 4
      %s63 = int_to_ptr.vmem [resolvable:$true] %s62
      %68 = dma.hbm_to_vmem [thread:$0]  %s5, 2048, %s63, [#allocation9], 256, 256, 16
    $region25: #{lstm_model_forward.1} parent=1 // pred_fallthru
      _
    // Predicated region
    $region26: #{lstm_model_forward.1} parent=1 // pred_check
      _
    $region27: #{lstm_model_forward.1} parent=1 // pred_check_branch
      %70 = sbr.rel (0) target = $region29
    $region28: #{lstm_model_forward.1} parent=1 // pred_region
      _
    $region29: #{lstm_model_forward.1} parent=1 // pred_fallthru
      _
    // Predicated region
    $region30: #{lstm_model_forward.1} parent=1 // pred_check
      _
    $region31: #{lstm_model_forward.1} parent=1 // pred_check_branch
      %72 = sbr.rel (0) target = $region33
    $region32: #{lstm_model_forward.1} parent=1 // pred_region
      _
    $region33: #{lstm_model_forward.1} parent=1 // pred_fallthru
      _
    // Predicated region
    $region34: #{lstm_model_forward.1} parent=1 // pred_check
      _
    $region35: #{lstm_model_forward.1} parent=1 // pred_check_branch
      %74 = sbr.rel (0) target = $region37
    $region36: #{lstm_model_forward.1} parent=1 // pred_region
      _
    $region37: #{lstm_model_forward.1} parent=1 // pred_fallthru
      _
    // Predicated region
    $region38: #{lstm_model_forward.1} parent=1 // pred_check
      _
    $region39: #{lstm_model_forward.1} parent=1 // pred_check_branch
      %76 = sbr.rel (0) target = $region41
    $region40: #{lstm_model_forward.1} parent=1 // pred_region
      _
    $region41: #{lstm_model_forward.1} parent=1 // pred_fallthru
      _
    // Predicated region
    $region42: #{lstm_model_forward.1} parent=1 // pred_check
      _
    $region43: #{lstm_model_forward.1} parent=1 // pred_check_branch
      %78 = sbr.rel (0) target = $region45
    $region44: #{lstm_model_forward.1} parent=1 // pred_region
      %79 = dma.done [#allocation6], 16
    $region45: #{lstm_model_forward.1} parent=1 // pred_fallthru
      _
    // Predicated region
    $region46: #{lstm_model_forward.1} parent=1 // pred_check
      _
    $region47: #{lstm_model_forward.1} parent=1 // pred_check_branch
      %81 = sbr.rel (0) target = $region49
    $region48: #{lstm_model_forward.1} parent=1 // pred_region
      %82 = dma.done [#allocation4], 4096
    $region49: #{lstm_model_forward.1} parent=1 // pred_fallthru
      _
    // Predicated region
    $region50: #{lstm_model_forward.1} parent=1 // pred_check
      _
    $region51: #{lstm_model_forward.1} parent=1 // pred_check_branch
      %84 = sbr.rel (0) target = $region53
    $region52: #{lstm_model_forward.1} parent=1 // pred_region
      %85 = dma.done [#allocation9], 4096
    $region53: #{lstm_model_forward.1} parent=1 // pred_fallthru
      _
    // Predicated region
    $region54: #{lstm_model_forward.1} parent=1 // pred_check
      _
    $region55: #{lstm_model_forward.1} parent=1 // pred_check_branch
      %87 = sbr.rel (0) target = $region57
    $region56: #{lstm_model_forward.1} parent=1 // pred_region
      %88 = dma.done [#allocation9], 2048
    $region57: #{lstm_model_forward.1} parent=1 // pred_fallthru
      _
    %89 = sfence
    %v90 = vld [vmem:[%s1] sm:$0x3]
    %v91 = vld [vmem:[%s2] sm:$0x3]
    %v92 = vld [vmem:[%s6] sm:$0x3]
    %v93 = vld [vmem:[%s7] sm:$0x3]
    %s94 = sld [smem:[#allocation3]]
    %v95 = vstv %s94
    %v96 = vmul.f32 %v95, %v90
    %v97 = vadd.f32 %v96, %v91
    %v98 = vmul.f32 %v97, 0.5
    %v99 = vtanh.pop %v98
    %v100 = vmul.f32 %v99, 0.5
    %v101 = vadd.f32 %v100, 0.5
    %103 = vrot.lane.b32.xlu0 %v97, 64
    %v104 = vpop.permute.xlu0 %103
    %v105 = vrot.slane %v104, 1
    %v107 = vtanh.pop %v105
    %v108 = vmul.f32 %v101, 0.0
    %v109 = vmul.f32 %v101, %v107
    %111 = vrot.lane.b32.xlu0 %v109, 64
    %v112 = vpop.permute.xlu0 %111
    %v114 = vadd.f32 %v108, %v112
    %v115 = vtanh.pop %v114
    %v117 = vrot.slane %v101, 1
    %120 = vrot.lane.b32.xlu0 %v115, 64
    %v121 = vpop.permute.xlu0 %120
    %v123 = vmul.f32 %v117, %v121
    %v124 = vld [vmem:[#allocation7] sm:$0xff]
    %v125 = vld [vmem:[#allocation7 + $0x8] sm:$0xff]
    %v126 = vld [vmem:[#allocation7 + $0x10] sm:$0xff]
    %v127 = vld [vmem:[#allocation7 + $0x18] sm:$0xff]
    %v128 = vld [vmem:[#allocation7 + $0x20] sm:$0xff]
    %v129 = vld [vmem:[#allocation7 + $0x28] sm:$0xff]
    %v130 = vld [vmem:[#allocation7 + $0x30] sm:$0xff]
    %v131 = vld [vmem:[#allocation7 + $0x38] sm:$0xff]
    %v132 = vld [vmem:[#allocation7 + $0x40] sm:$0xff]
    %v133 = vld [vmem:[#allocation7 + $0x48] sm:$0xff]
    %v134 = vld [vmem:[#allocation7 + $0x50] sm:$0xff]
    %v135 = vld [vmem:[#allocation7 + $0x58] sm:$0xff]
    %v136 = vld [vmem:[#allocation7 + $0x60] sm:$0xff]
    %v137 = vld [vmem:[#allocation7 + $0x68] sm:$0xff]
    %v138 = vld [vmem:[#allocation7 + $0x70] sm:$0xff]
    %v139 = vld [vmem:[#allocation7 + $0x78] sm:$0xff]
    %v140 = vld [vmem:[#allocation7 + $0x80] sm:$0xff]
    %v141 = vld [vmem:[#allocation7 + $0x88] sm:$0xff]
    %v142 = vld [vmem:[#allocation7 + $0x90] sm:$0xff]
    %v143 = vld [vmem:[#allocation7 + $0x98] sm:$0xff]
    %v144 = vld [vmem:[#allocation7 + $0xa0] sm:$0xff]
    %v145 = vld [vmem:[#allocation7 + $0xa8] sm:$0xff]
    %v146 = vld [vmem:[#allocation7 + $0xb0] sm:$0xff]
    %v147 = vld [vmem:[#allocation7 + $0xb8] sm:$0xff]
    %v148 = vld [vmem:[#allocation7 + $0xc0] sm:$0xff]
    %v149 = vld [vmem:[#allocation7 + $0xc8] sm:$0xff]
    %v150 = vld [vmem:[#allocation7 + $0xd0] sm:$0xff]
    %v151 = vld [vmem:[#allocation7 + $0xd8] sm:$0xff]
    %v152 = vld [vmem:[#allocation7 + $0xe0] sm:$0xff]
    %v153 = vld [vmem:[#allocation7 + $0xe8] sm:$0xff]
    %v154 = vld [vmem:[#allocation7 + $0xf0] sm:$0xff]
    %v155 = vld [vmem:[#allocation7 + $0xf8] sm:$0xff]
    %vm156 = vcmask 523264
    %v158 = vsel %vm156, %v123, 0
    %160 = vmatprep.subr.mxu0 %v125
    %161 = vmatpush1.msra.mxu0 %v124
    %162 = vmatprep.subr.mxu0 %v129
    %163 = vmatpush1.msra.mxu0 %v128
    %164 = vmatprep.subr.mxu0 %v133
    %165 = vmatpush1.msra.mxu0 %v132
    %166 = vmatprep.subr.mxu0 %v137
    %167 = vmatpush1.msra.mxu0 %v136
    %168 = vmatprep.subr.mxu0 %v141
    %169 = vmatpush1.msra.mxu0 %v140
    %170 = vmatprep.subr.mxu0 %v145
    %171 = vmatpush1.msra.mxu0 %v144
    %172 = vmatprep.subr.mxu0 %v149
    %173 = vmatpush1.msra.mxu0 %v148
    %174 = vmatprep.subr.mxu0 %v153
    %175 = vmatpush1.msra.mxu0 %v152
    %176 = vmatprep.subr.mxu0 0.0
    %177 = vmatpush1.msra.mxu0 0.0
    %178 = vmatprep.subr.mxu0 0.0
    %179 = vmatpush1.msra.mxu0 0.0
    %180 = vmatprep.subr.mxu0 0.0
    %181 = vmatpush1.msra.mxu0 0.0
    %182 = vmatprep.subr.mxu0 0.0
    %183 = vmatpush1.msra.mxu0 0.0
    %184 = vmatprep.subr.mxu0 0.0
    %185 = vmatpush1.msra.mxu0 0.0
    %186 = vmatprep.subr.mxu0 0.0
    %187 = vmatpush1.msra.mxu0 0.0
    %188 = vmatprep.subr.mxu0 0.0
    %189 = vmatpush1.msra.mxu0 0.0
    %190 = vmatprep.subr.mxu0 0.0
    %191 = vmatpush1.msra.mxu0 0.0
    %192 = vmatprep.subr.mxu0 0.0
    %193 = vmatpush1.msra.mxu0 0.0
    %194 = vmatprep.subr.mxu0 0.0
    %195 = vmatpush1.msra.mxu0 0.0
    %196 = vmatprep.subr.mxu0 0.0
    %197 = vmatpush1.msra.mxu0 0.0
    %198 = vmatprep.subr.mxu0 0.0
    %199 = vmatpush1.msra.mxu0 0.0
    %200 = vmatprep.subr.mxu0 0.0
    %201 = vmatpush1.msra.mxu0 0.0
    %202 = vmatprep.subr.mxu0 0.0
    %203 = vmatpush1.msra.mxu0 0.0
    %204 = vmatprep.subr.mxu0 0.0
    %205 = vmatpush1.msra.mxu0 0.0
    %206 = vmatprep.subr.mxu0 0.0
    %207 = vmatpush1.msra.mxu0 0.0
    %208 = vmatprep.subr.mxu0 0.0
    %209 = vmatpush1.msra.mxu0 0.0
    %210 = vmatprep.subr.mxu0 0.0
    %211 = vmatpush1.msra.mxu0 0.0
    %212 = vmatprep.subr.mxu0 0.0
    %213 = vmatpush1.msra.mxu0 0.0
    %214 = vmatprep.subr.mxu0 0.0
    %215 = vmatpush1.msra.mxu0 0.0
    %216 = vmatprep.subr.mxu0 0.0
    %217 = vmatpush1.msra.mxu0 0.0
    %218 = vmatprep.subr.mxu0 0.0
    %219 = vmatpush1.msra.mxu0 0.0
    %220 = vmatprep.subr.mxu0 0.0
    %221 = vmatpush1.msra.mxu0 0.0
    %222 = vmatprep.subr.mxu0 0.0
    %223 = vmatpush1.msra.mxu0 0.0
    %224 = vmatprep.mubr.f32.mxu0 0.0
    %225 = vmatmul.mubr.f32.gmra.mrb[0].mxu0 %v158
    %v226 = vpop.f32.mrb[0].mxu0
    %v227 = vadd.f32 0.0, %v226
    %v228 = vpop.f32.mrb[0].mxu0
    %v229 = vadd.f32 0.0, %v228
    %230 = vdwg.mxu0
    %231 = vmatprep.subr.mxu0 %v127
    %232 = vmatpush1.msra.mxu0 %v126
    %233 = vmatprep.subr.mxu0 %v131
    %234 = vmatpush1.msra.mxu0 %v130
    %235 = vmatprep.subr.mxu0 %v135
    %236 = vmatpush1.msra.mxu0 %v134
    %237 = vmatprep.subr.mxu0 %v139
    %238 = vmatpush1.msra.mxu0 %v138
    %239 = vmatprep.subr.mxu0 %v143
    %240 = vmatpush1.msra.mxu0 %v142
    %241 = vmatprep.subr.mxu0 %v147
    %242 = vmatpush1.msra.mxu0 %v146
    %243 = vmatprep.subr.mxu0 %v151
    %244 = vmatpush1.msra.mxu0 %v150
    %245 = vmatprep.subr.mxu0 %v155
    %246 = vmatpush1.msra.mxu0 %v154
    %247 = vmatprep.subr.mxu0 0.0
    %248 = vmatpush1.msra.mxu0 0.0
    %249 = vmatprep.subr.mxu0 0.0
    %250 = vmatpush1.msra.mxu0 0.0
    %251 = vmatprep.subr.mxu0 0.0
    %252 = vmatpush1.msra.mxu0 0.0
    %253 = vmatprep.subr.mxu0 0.0
    %254 = vmatpush1.msra.mxu0 0.0
    %255 = vmatprep.subr.mxu0 0.0
    %256 = vmatpush1.msra.mxu0 0.0
    %257 = vmatprep.subr.mxu0 0.0
    %258 = vmatpush1.msra.mxu0 0.0
    %259 = vmatprep.subr.mxu0 0.0
    %260 = vmatpush1.msra.mxu0 0.0
    %261 = vmatprep.subr.mxu0 0.0
    %262 = vmatpush1.msra.mxu0 0.0
    %263 = vmatprep.subr.mxu0 0.0
    %264 = vmatpush1.msra.mxu0 0.0
    %265 = vmatprep.subr.mxu0 0.0
    %266 = vmatpush1.msra.mxu0 0.0
    %267 = vmatprep.subr.mxu0 0.0
    %268 = vmatpush1.msra.mxu0 0.0
    %269 = vmatprep.subr.mxu0 0.0
    %270 = vmatpush1.msra.mxu0 0.0
    %271 = vmatprep.subr.mxu0 0.0
    %272 = vmatpush1.msra.mxu0 0.0
    %273 = vmatprep.subr.mxu0 0.0
    %274 = vmatpush1.msra.mxu0 0.0
    %275 = vmatprep.subr.mxu0 0.0
    %276 = vmatpush1.msra.mxu0 0.0
    %277 = vmatprep.subr.mxu0 0.0
    %278 = vmatpush1.msra.mxu0 0.0
    %279 = vmatprep.subr.mxu0 0.0
    %280 = vmatpush1.msra.mxu0 0.0
    %281 = vmatprep.subr.mxu0 0.0
    %282 = vmatpush1.msra.mxu0 0.0
    %283 = vmatprep.subr.mxu0 0.0
    %284 = vmatpush1.msra.mxu0 0.0
    %285 = vmatprep.subr.mxu0 0.0
    %286 = vmatpush1.msra.mxu0 0.0
    %287 = vmatprep.subr.mxu0 0.0
    %288 = vmatpush1.msra.mxu0 0.0
    %289 = vmatprep.subr.mxu0 0.0
    %290 = vmatpush1.msra.mxu0 0.0
    %291 = vmatprep.subr.mxu0 0.0
    %292 = vmatpush1.msra.mxu0 0.0
    %293 = vmatprep.subr.mxu0 0.0
    %294 = vmatpush1.msra.mxu0 0.0
    %295 = vmatprep.mubr.f32.mxu0 0.0
    %296 = vmatmul.mubr.f32.gmra.mrb[0].mxu0 %v158
    %v297 = vpop.f32.mrb[0].mxu0
    %v298 = vadd.f32 0.0, %v297
    %v299 = vpop.f32.mrb[0].mxu0
    %v300 = vadd.f32 0.0, %v299
    %301 = vdwg.mxu0
    %v303 = vlaneseq
    %v304 = vshrl.u32 %v303, 7
    %v305 = vsub.s32 0, %v304
    %v306 = vrot.slane %v92, %v305
    %v307 = vlaneseq
    %v308 = vshrl.u32 %v307, 7
    %v309 = vsub.s32 1, %v308
    %v310 = vrot.slane %v92, %v309
    %v313 = vadd.f32 %v298, %v306
    %v314 = vadd.f32 %v300, %v310
    %v315 = vmul.f32 %v313, 0.5
    %v316 = vmul.f32 %v314, 0.5
    %v317 = vtanh.pop %v315
    %v318 = vtanh.pop %v316
    %v319 = vmul.f32 %v317, 0.5
    %v320 = vmul.f32 %v318, 0.5
    %v321 = vadd.f32 %v319, 0.5
    %v322 = vadd.f32 %v320, 0.5
    %v323 = vtanh.pop %v314
    %v324 = vmul.f32 %v321, 0.0
    %326 = vrot.lane.b32.xlu0 %v323, 64
    %v327 = vpop.permute.xlu0 %326
    %v329 = vmul.f32 %v321, %v327
    %331 = vrot.lane.b32.xlu0 %v329, 64
    %v332 = vpop.permute.xlu0 %331
    %v334 = vadd.f32 %v324, %v332
    %v335 = vtanh.pop %v334
    %337 = vrot.lane.b32.xlu0 %v335, 64
    %v338 = vpop.permute.xlu0 %337
    %v340 = vmul.f32 %v322, %v338
    %s341 = sld [smem:[#allocation3 + $0x1]]
    %v342 = vstv %s341
    %v343 = vmul.f32 %v342, %v90
    %v344 = vadd.f32 %v343, %v91
    %v347 = vcombine.low %v227, %v229
    %v349 = vunpack.c.l.s4 1966171168
    %v350 = vunpack.c.0.s8 %v349
    %v351 = vlaneseq
    %v352 = vshrl.u32 %v351, 7
    %v353 = vsub.s32 %v350, %v352
    %v354 = vrot.slane %v347, %v353
    %v356 = vunpack.c.l.s4 1966171168
    %v357 = vunpack.c.0.s8 %v356
    %v358 = vlaneseq
    %v359 = vshrl.u32 %v358, 7
    %v360 = vsub.s32 %v357, %v359
    %v361 = vrot.slane %v354, %v360
    %v363 = vadd.f32 %v344, %v361
    %v364 = vmul.f32 %v363, 0.5
    %v365 = vtanh.pop %v364
    %v366 = vmul.f32 %v365, 0.5
    %v367 = vadd.f32 %v366, 0.5
    %369 = vrot.lane.b32.xlu0 %v363, 64
    %v370 = vpop.permute.xlu0 %369
    %v371 = vrot.slane %v370, 1
    %v373 = vtanh.pop %v371
    %v374 = vmul.f32 %v367, %v114
    %v375 = vmul.f32 %v367, %v373
    %377 = vrot.lane.b32.xlu0 %v375, 64
    %v378 = vpop.permute.xlu0 %377
    %v380 = vadd.f32 %v374, %v378
    %v381 = vtanh.pop %v380
    %v383 = vrot.slane %v367, 1
    %386 = vrot.lane.b32.xlu0 %v381, 64
    %v387 = vpop.permute.xlu0 %386
    %v389 = vmul.f32 %v383, %v387
    %v391 = vsel %vm156, %v389, 0
    %393 = vmatprep.subr.mxu0 %v125
    %394 = vmatpush1.msra.mxu0 %v124
    %395 = vmatprep.subr.mxu0 %v129
    %396 = vmatpush1.msra.mxu0 %v128
    %397 = vmatprep.subr.mxu0 %v133
    %398 = vmatpush1.msra.mxu0 %v132
    %399 = vmatprep.subr.mxu0 %v137
    %400 = vmatpush1.msra.mxu0 %v136
    %401 = vmatprep.subr.mxu0 %v141
    %402 = vmatpush1.msra.mxu0 %v140
    %403 = vmatprep.subr.mxu0 %v145
    %404 = vmatpush1.msra.mxu0 %v144
    %405 = vmatprep.subr.mxu0 %v149
    %406 = vmatpush1.msra.mxu0 %v148
    %407 = vmatprep.subr.mxu0 %v153
    %408 = vmatpush1.msra.mxu0 %v152
    %409 = vmatprep.subr.mxu0 0.0
    %410 = vmatpush1.msra.mxu0 0.0
    %411 = vmatprep.subr.mxu0 0.0
    %412 = vmatpush1.msra.mxu0 0.0
    %413 = vmatprep.subr.mxu0 0.0
    %414 = vmatpush1.msra.mxu0 0.0
    %415 = vmatprep.subr.mxu0 0.0
    %416 = vmatpush1.msra.mxu0 0.0
    %417 = vmatprep.subr.mxu0 0.0
    %418 = vmatpush1.msra.mxu0 0.0
    %419 = vmatprep.subr.mxu0 0.0
    %420 = vmatpush1.msra.mxu0 0.0
    %421 = vmatprep.subr.mxu0 0.0
    %422 = vmatpush1.msra.mxu0 0.0
    %423 = vmatprep.subr.mxu0 0.0
    %424 = vmatpush1.msra.mxu0 0.0
    %425 = vmatprep.subr.mxu0 0.0
    %426 = vmatpush1.msra.mxu0 0.0
    %427 = vmatprep.subr.mxu0 0.0
    %428 = vmatpush1.msra.mxu0 0.0
    %429 = vmatprep.subr.mxu0 0.0
    %430 = vmatpush1.msra.mxu0 0.0
    %431 = vmatprep.subr.mxu0 0.0
    %432 = vmatpush1.msra.mxu0 0.0
    %433 = vmatprep.subr.mxu0 0.0
    %434 = vmatpush1.msra.mxu0 0.0
    %435 = vmatprep.subr.mxu0 0.0
    %436 = vmatpush1.msra.mxu0 0.0
    %437 = vmatprep.subr.mxu0 0.0
    %438 = vmatpush1.msra.mxu0 0.0
    %439 = vmatprep.subr.mxu0 0.0
    %440 = vmatpush1.msra.mxu0 0.0
    %441 = vmatprep.subr.mxu0 0.0
    %442 = vmatpush1.msra.mxu0 0.0
    %443 = vmatprep.subr.mxu0 0.0
    %444 = vmatpush1.msra.mxu0 0.0
    %445 = vmatprep.subr.mxu0 0.0
    %446 = vmatpush1.msra.mxu0 0.0
    %447 = vmatprep.subr.mxu0 0.0
    %448 = vmatpush1.msra.mxu0 0.0
    %449 = vmatprep.subr.mxu0 0.0
    %450 = vmatpush1.msra.mxu0 0.0
    %451 = vmatprep.subr.mxu0 0.0
    %452 = vmatpush1.msra.mxu0 0.0
    %453 = vmatprep.subr.mxu0 0.0
    %454 = vmatpush1.msra.mxu0 0.0
    %455 = vmatprep.subr.mxu0 0.0
    %456 = vmatpush1.msra.mxu0 0.0
    %457 = vmatprep.mubr.f32.mxu0 0.0
    %458 = vmatmul.mubr.f32.gmra.mrb[0].mxu0 %v391
    %v459 = vpop.f32.mrb[0].mxu0
    %v460 = vadd.f32 0.0, %v459
    %v461 = vpop.f32.mrb[0].mxu0
    %v462 = vadd.f32 0.0, %v461
    %463 = vdwg.mxu0
    %464 = vmatprep.subr.mxu0 %v127
    %465 = vmatpush1.msra.mxu0 %v126
    %466 = vmatprep.subr.mxu0 %v131
    %467 = vmatpush1.msra.mxu0 %v130
    %468 = vmatprep.subr.mxu0 %v135
    %469 = vmatpush1.msra.mxu0 %v134
    %470 = vmatprep.subr.mxu0 %v139
    %471 = vmatpush1.msra.mxu0 %v138
    %472 = vmatprep.subr.mxu0 %v143
    %473 = vmatpush1.msra.mxu0 %v142
    %474 = vmatprep.subr.mxu0 %v147
    %475 = vmatpush1.msra.mxu0 %v146
    %476 = vmatprep.subr.mxu0 %v151
    %477 = vmatpush1.msra.mxu0 %v150
    %478 = vmatprep.subr.mxu0 %v155
    %479 = vmatpush1.msra.mxu0 %v154
    %480 = vmatprep.subr.mxu0 0.0
    %481 = vmatpush1.msra.mxu0 0.0
    %482 = vmatprep.subr.mxu0 0.0
    %483 = vmatpush1.msra.mxu0 0.0
    %484 = vmatprep.subr.mxu0 0.0
    %485 = vmatpush1.msra.mxu0 0.0
    %486 = vmatprep.subr.mxu0 0.0
    %487 = vmatpush1.msra.mxu0 0.0
    %488 = vmatprep.subr.mxu0 0.0
    %489 = vmatpush1.msra.mxu0 0.0
    %490 = vmatprep.subr.mxu0 0.0
    %491 = vmatpush1.msra.mxu0 0.0
    %492 = vmatprep.subr.mxu0 0.0
    %493 = vmatpush1.msra.mxu0 0.0
    %494 = vmatprep.subr.mxu0 0.0
    %495 = vmatpush1.msra.mxu0 0.0
    %496 = vmatprep.subr.mxu0 0.0
    %497 = vmatpush1.msra.mxu0 0.0
    %498 = vmatprep.subr.mxu0 0.0
    %499 = vmatpush1.msra.mxu0 0.0
    %500 = vmatprep.subr.mxu0 0.0
    %501 = vmatpush1.msra.mxu0 0.0
    %502 = vmatprep.subr.mxu0 0.0
    %503 = vmatpush1.msra.mxu0 0.0
    %504 = vmatprep.subr.mxu0 0.0
    %505 = vmatpush1.msra.mxu0 0.0
    %506 = vmatprep.subr.mxu0 0.0
    %507 = vmatpush1.msra.mxu0 0.0
    %508 = vmatprep.subr.mxu0 0.0
    %509 = vmatpush1.msra.mxu0 0.0
    %510 = vmatprep.subr.mxu0 0.0
    %511 = vmatpush1.msra.mxu0 0.0
    %512 = vmatprep.subr.mxu0 0.0
    %513 = vmatpush1.msra.mxu0 0.0
    %514 = vmatprep.subr.mxu0 0.0
    %515 = vmatpush1.msra.mxu0 0.0
    %516 = vmatprep.subr.mxu0 0.0
    %517 = vmatpush1.msra.mxu0 0.0
    %518 = vmatprep.subr.mxu0 0.0
    %519 = vmatpush1.msra.mxu0 0.0
    %520 = vmatprep.subr.mxu0 0.0
    %521 = vmatpush1.msra.mxu0 0.0
    %522 = vmatprep.subr.mxu0 0.0
    %523 = vmatpush1.msra.mxu0 0.0
    %524 = vmatprep.subr.mxu0 0.0
    %525 = vmatpush1.msra.mxu0 0.0
    %526 = vmatprep.subr.mxu0 0.0
    %527 = vmatpush1.msra.mxu0 0.0
    %528 = vmatprep.mubr.f32.mxu0 0.0
    %529 = vmatmul.mubr.f32.gmra.mrb[0].mxu0 %v391
    %v530 = vpop.f32.mrb[0].mxu0
    %v531 = vadd.f32 0.0, %v530
    %v532 = vpop.f32.mrb[0].mxu0
    %v533 = vadd.f32 0.0, %v532
    %534 = vdwg.mxu0
    %v535 = vld [vmem:[#allocation8] sm:$0xff]
    %v536 = vld [vmem:[#allocation8 + $0x8] sm:$0xff]
    %v537 = vld [vmem:[#allocation8 + $0x10] sm:$0xff]
    %v538 = vld [vmem:[#allocation8 + $0x18] sm:$0xff]
    %v539 = vld [vmem:[#allocation8 + $0x20] sm:$0xff]
    %v540 = vld [vmem:[#allocation8 + $0x28] sm:$0xff]
    %v541 = vld [vmem:[#allocation8 + $0x30] sm:$0xff]
    %v542 = vld [vmem:[#allocation8 + $0x38] sm:$0xff]
    %v543 = vld [vmem:[#allocation8 + $0x40] sm:$0xff]
    %v544 = vld [vmem:[#allocation8 + $0x48] sm:$0xff]
    %v545 = vld [vmem:[#allocation8 + $0x50] sm:$0xff]
    %v546 = vld [vmem:[#allocation8 + $0x58] sm:$0xff]
    %v547 = vld [vmem:[#allocation8 + $0x60] sm:$0xff]
    %v548 = vld [vmem:[#allocation8 + $0x68] sm:$0xff]
    %v549 = vld [vmem:[#allocation8 + $0x70] sm:$0xff]
    %v550 = vld [vmem:[#allocation8 + $0x78] sm:$0xff]
    %v551 = vld [vmem:[#allocation8 + $0x80] sm:$0xff]
    %v552 = vld [vmem:[#allocation8 + $0x88] sm:$0xff]
    %v553 = vld [vmem:[#allocation8 + $0x90] sm:$0xff]
    %v554 = vld [vmem:[#allocation8 + $0x98] sm:$0xff]
    %v555 = vld [vmem:[#allocation8 + $0xa0] sm:$0xff]
    %v556 = vld [vmem:[#allocation8 + $0xa8] sm:$0xff]
    %v557 = vld [vmem:[#allocation8 + $0xb0] sm:$0xff]
    %v558 = vld [vmem:[#allocation8 + $0xb8] sm:$0xff]
    %v559 = vld [vmem:[#allocation8 + $0xc0] sm:$0xff]
    %v560 = vld [vmem:[#allocation8 + $0xc8] sm:$0xff]
    %v561 = vld [vmem:[#allocation8 + $0xd0] sm:$0xff]
    %v562 = vld [vmem:[#allocation8 + $0xd8] sm:$0xff]
    %v563 = vld [vmem:[#allocation8 + $0xe0] sm:$0xff]
    %v564 = vld [vmem:[#allocation8 + $0xe8] sm:$0xff]
    %v565 = vld [vmem:[#allocation8 + $0xf0] sm:$0xff]
    %v566 = vld [vmem:[#allocation8 + $0xf8] sm:$0xff]
    %v568 = vsel %vm156, %v340, 0
    %570 = vmatprep.subr.mxu0 %v536
    %571 = vmatpush1.msra.mxu0 %v535
    %572 = vmatprep.subr.mxu0 %v540
    %573 = vmatpush1.msra.mxu0 %v539
    %574 = vmatprep.subr.mxu0 %v544
    %575 = vmatpush1.msra.mxu0 %v543
    %576 = vmatprep.subr.mxu0 %v548
    %577 = vmatpush1.msra.mxu0 %v547
    %578 = vmatprep.subr.mxu0 %v552
    %579 = vmatpush1.msra.mxu0 %v551
    %580 = vmatprep.subr.mxu0 %v556
    %581 = vmatpush1.msra.mxu0 %v555
    %582 = vmatprep.subr.mxu0 %v560
    %583 = vmatpush1.msra.mxu0 %v559
    %584 = vmatprep.subr.mxu0 %v564
    %585 = vmatpush1.msra.mxu0 %v563
    %586 = vmatprep.subr.mxu0 0.0
    %587 = vmatpush1.msra.mxu0 0.0
    %588 = vmatprep.subr.mxu0 0.0
    %589 = vmatpush1.msra.mxu0 0.0
    %590 = vmatprep.subr.mxu0 0.0
    %591 = vmatpush1.msra.mxu0 0.0
    %592 = vmatprep.subr.mxu0 0.0
    %593 = vmatpush1.msra.mxu0 0.0
    %594 = vmatprep.subr.mxu0 0.0
    %595 = vmatpush1.msra.mxu0 0.0
    %596 = vmatprep.subr.mxu0 0.0
    %597 = vmatpush1.msra.mxu0 0.0
    %598 = vmatprep.subr.mxu0 0.0
    %599 = vmatpush1.msra.mxu0 0.0
    %600 = vmatprep.subr.mxu0 0.0
    %601 = vmatpush1.msra.mxu0 0.0
    %602 = vmatprep.subr.mxu0 0.0
    %603 = vmatpush1.msra.mxu0 0.0
    %604 = vmatprep.subr.mxu0 0.0
    %605 = vmatpush1.msra.mxu0 0.0
    %606 = vmatprep.subr.mxu0 0.0
    %607 = vmatpush1.msra.mxu0 0.0
    %608 = vmatprep.subr.mxu0 0.0
    %609 = vmatpush1.msra.mxu0 0.0
    %610 = vmatprep.subr.mxu0 0.0
    %611 = vmatpush1.msra.mxu0 0.0
    %612 = vmatprep.subr.mxu0 0.0
    %613 = vmatpush1.msra.mxu0 0.0
    %614 = vmatprep.subr.mxu0 0.0
    %615 = vmatpush1.msra.mxu0 0.0
    %616 = vmatprep.subr.mxu0 0.0
    %617 = vmatpush1.msra.mxu0 0.0
    %618 = vmatprep.subr.mxu0 0.0
    %619 = vmatpush1.msra.mxu0 0.0
    %620 = vmatprep.subr.mxu0 0.0
    %621 = vmatpush1.msra.mxu0 0.0
    %622 = vmatprep.subr.mxu0 0.0
    %623 = vmatpush1.msra.mxu0 0.0
    %624 = vmatprep.subr.mxu0 0.0
    %625 = vmatpush1.msra.mxu0 0.0
    %626 = vmatprep.subr.mxu0 0.0
    %627 = vmatpush1.msra.mxu0 0.0
    %628 = vmatprep.subr.mxu0 0.0
    %629 = vmatpush1.msra.mxu0 0.0
    %630 = vmatprep.subr.mxu0 0.0
    %631 = vmatpush1.msra.mxu0 0.0
    %632 = vmatprep.subr.mxu0 0.0
    %633 = vmatpush1.msra.mxu0 0.0
    %634 = vmatprep.mubr.f32.mxu0 0.0
    %635 = vmatmul.mubr.f32.gmra.mrb[0].mxu0 %v568
    %v636 = vpop.f32.mrb[0].mxu0
    %v637 = vadd.f32 0.0, %v636
    %v638 = vpop.f32.mrb[0].mxu0
    %v639 = vadd.f32 0.0, %v638
    %640 = vdwg.mxu0
    %641 = vmatprep.subr.mxu0 %v538
    %642 = vmatpush1.msra.mxu0 %v537
    %643 = vmatprep.subr.mxu0 %v542
    %644 = vmatpush1.msra.mxu0 %v541
    %645 = vmatprep.subr.mxu0 %v546
    %646 = vmatpush1.msra.mxu0 %v545
    %647 = vmatprep.subr.mxu0 %v550
    %648 = vmatpush1.msra.mxu0 %v549
    %649 = vmatprep.subr.mxu0 %v554
    %650 = vmatpush1.msra.mxu0 %v553
    %651 = vmatprep.subr.mxu0 %v558
    %652 = vmatpush1.msra.mxu0 %v557
    %653 = vmatprep.subr.mxu0 %v562
    %654 = vmatpush1.msra.mxu0 %v561
    %655 = vmatprep.subr.mxu0 %v566
    %656 = vmatpush1.msra.mxu0 %v565
    %657 = vmatprep.subr.mxu0 0.0
    %658 = vmatpush1.msra.mxu0 0.0
    %659 = vmatprep.subr.mxu0 0.0
    %660 = vmatpush1.msra.mxu0 0.0
    %661 = vmatprep.subr.mxu0 0.0
    %662 = vmatpush1.msra.mxu0 0.0
    %663 = vmatprep.subr.mxu0 0.0
    %664 = vmatpush1.msra.mxu0 0.0
    %665 = vmatprep.subr.mxu0 0.0
    %666 = vmatpush1.msra.mxu0 0.0
    %667 = vmatprep.subr.mxu0 0.0
    %668 = vmatpush1.msra.mxu0 0.0
    %669 = vmatprep.subr.mxu0 0.0
    %670 = vmatpush1.msra.mxu0 0.0
    %671 = vmatprep.subr.mxu0 0.0
    %672 = vmatpush1.msra.mxu0 0.0
    %673 = vmatprep.subr.mxu0 0.0
    %674 = vmatpush1.msra.mxu0 0.0
    %675 = vmatprep.subr.mxu0 0.0
    %676 = vmatpush1.msra.mxu0 0.0
    %677 = vmatprep.subr.mxu0 0.0
    %678 = vmatpush1.msra.mxu0 0.0
    %679 = vmatprep.subr.mxu0 0.0
    %680 = vmatpush1.msra.mxu0 0.0
    %681 = vmatprep.subr.mxu0 0.0
    %682 = vmatpush1.msra.mxu0 0.0
    %683 = vmatprep.subr.mxu0 0.0
    %684 = vmatpush1.msra.mxu0 0.0
    %685 = vmatprep.subr.mxu0 0.0
    %686 = vmatpush1.msra.mxu0 0.0
    %687 = vmatprep.subr.mxu0 0.0
    %688 = vmatpush1.msra.mxu0 0.0
    %689 = vmatprep.subr.mxu0 0.0
    %690 = vmatpush1.msra.mxu0 0.0
    %691 = vmatprep.subr.mxu0 0.0
    %692 = vmatpush1.msra.mxu0 0.0
    %693 = vmatprep.subr.mxu0 0.0
    %694 = vmatpush1.msra.mxu0 0.0
    %695 = vmatprep.subr.mxu0 0.0
    %696 = vmatpush1.msra.mxu0 0.0
    %697 = vmatprep.subr.mxu0 0.0
    %698 = vmatpush1.msra.mxu0 0.0
    %699 = vmatprep.subr.mxu0 0.0
    %700 = vmatpush1.msra.mxu0 0.0
    %701 = vmatprep.subr.mxu0 0.0
    %702 = vmatpush1.msra.mxu0 0.0
    %703 = vmatprep.subr.mxu0 0.0
    %704 = vmatpush1.msra.mxu0 0.0
    %705 = vmatprep.mubr.f32.mxu0 0.0
    %706 = vmatmul.mubr.f32.gmra.mrb[0].mxu0 %v568
    %v707 = vpop.f32.mrb[0].mxu0
    %v708 = vadd.f32 0.0, %v707
    %v709 = vpop.f32.mrb[0].mxu0
    %v710 = vadd.f32 0.0, %v709
    %711 = vdwg.mxu0
    %v713 = vlaneseq
    %v714 = vshrl.u32 %v713, 7
    %v715 = vsub.s32 0, %v714
    %v716 = vrot.slane %v93, %v715
    %v717 = vlaneseq
    %v718 = vshrl.u32 %v717, 7
    %v719 = vsub.s32 1, %v718
    %v720 = vrot.slane %v93, %v719
    %v723 = vadd.f32 %v708, %v716
    %v724 = vadd.f32 %v710, %v720
    %v725 = vmul.f32 %v723, 0.5
    %v726 = vmul.f32 %v724, 0.5
    %v727 = vtanh.pop %v725
    %v728 = vtanh.pop %v726
    %v729 = vmul.f32 %v727, 0.5
    %v730 = vmul.f32 %v728, 0.5
    %v731 = vadd.f32 %v729, 0.5
    %v732 = vadd.f32 %v730, 0.5
    %v733 = vtanh.pop %v724
    %v734 = vmul.f32 %v731, 0.0
    %736 = vrot.lane.b32.xlu0 %v733, 64
    %v737 = vpop.permute.xlu0 %736
    %v739 = vmul.f32 %v731, %v737
    %741 = vrot.lane.b32.xlu0 %v739, 64
    %v742 = vpop.permute.xlu0 %741
    %v744 = vadd.f32 %v734, %v742
    %v745 = vtanh.pop %v744
    %747 = vrot.lane.b32.xlu0 %v745, 64
    %v748 = vpop.permute.xlu0 %747
    %v750 = vmul.f32 %v732, %v748
    %vm751 = vcmask 516096
    %752 = vst.msk [vmem:[#allocation2] sm:$0x1] %vm751, %v750
    %v753 = vadd.f32 %v531, %v306
    %v754 = vadd.f32 %v533, %v310
    %v755 = vadd.f32 %v753, %v637
    %v756 = vadd.f32 %v754, %v639
    %v757 = vmul.f32 %v755, 0.5
    %v758 = vmul.f32 %v756, 0.5
    %v759 = vtanh.pop %v757
    %v760 = vtanh.pop %v758
    %v761 = vmul.f32 %v759, 0.5
    %v762 = vmul.f32 %v760, 0.5
    %v763 = vadd.f32 %v761, 0.5
    %v764 = vadd.f32 %v762, 0.5
    %v765 = vtanh.pop %v756
    %v766 = vmul.f32 %v763, %v334
    %768 = vrot.lane.b32.xlu0 %v765, 64
    %v769 = vpop.permute.xlu0 %768
    %v771 = vmul.f32 %v763, %v769
    %773 = vrot.lane.b32.xlu0 %v771, 64
    %v774 = vpop.permute.xlu0 %773
    %v776 = vadd.f32 %v766, %v774
    %v777 = vtanh.pop %v776
    %779 = vrot.lane.b32.xlu0 %v777, 64
    %v780 = vpop.permute.xlu0 %779
    %v782 = vmul.f32 %v764, %v780
    %s783 = sld [smem:[#allocation3 + $0x2]]
    %v784 = vstv %s783
    %v785 = vmul.f32 %v784, %v90
    %v786 = vadd.f32 %v785, %v91
    %v789 = vcombine.low %v460, %v462
    %v791 = vunpack.c.l.s4 1966171168
    %v792 = vunpack.c.0.s8 %v791
    %v793 = vlaneseq
    %v794 = vshrl.u32 %v793, 7
    %v795 = vsub.s32 %v792, %v794
    %v796 = vrot.slane %v789, %v795
    %v798 = vunpack.c.l.s4 1966171168
    %v799 = vunpack.c.0.s8 %v798
    %v800 = vlaneseq
    %v801 = vshrl.u32 %v800, 7
    %v802 = vsub.s32 %v799, %v801
    %v803 = vrot.slane %v796, %v802
    %v805 = vadd.f32 %v786, %v803
    %v806 = vmul.f32 %v805, 0.5
    %v807 = vtanh.pop %v806
    %v808 = vmul.f32 %v807, 0.5
    %v809 = vadd.f32 %v808, 0.5
    %811 = vrot.lane.b32.xlu0 %v805, 64
    %v812 = vpop.permute.xlu0 %811
    %v813 = vrot.slane %v812, 1
    %v815 = vtanh.pop %v813
    %v816 = vmul.f32 %v809, %v380
    %v817 = vmul.f32 %v809, %v815
    %819 = vrot.lane.b32.xlu0 %v817, 64
    %v820 = vpop.permute.xlu0 %819
    %v822 = vadd.f32 %v816, %v820
    %v823 = vtanh.pop %v822
    %v825 = vrot.slane %v809, 1
    %828 = vrot.lane.b32.xlu0 %v823, 64
    %v829 = vpop.permute.xlu0 %828
    %v831 = vmul.f32 %v825, %v829
    %v832 = vld [vmem:[#allocation7] sm:$0xff]
    %v833 = vld [vmem:[#allocation7 + $0x8] sm:$0xff]
    %v834 = vld [vmem:[#allocation7 + $0x10] sm:$0xff]
    %v835 = vld [vmem:[#allocation7 + $0x18] sm:$0xff]
    %v836 = vld [vmem:[#allocation7 + $0x20] sm:$0xff]
    %v837 = vld [vmem:[#allocation7 + $0x28] sm:$0xff]
    %v838 = vld [vmem:[#allocation7 + $0x30] sm:$0xff]
    %v839 = vld [vmem:[#allocation7 + $0x38] sm:$0xff]
    %v840 = vld [vmem:[#allocation7 + $0x40] sm:$0xff]
    %v841 = vld [vmem:[#allocation7 + $0x48] sm:$0xff]
    %v842 = vld [vmem:[#allocation7 + $0x50] sm:$0xff]
    %v843 = vld [vmem:[#allocation7 + $0x58] sm:$0xff]
    %v844 = vld [vmem:[#allocation7 + $0x60] sm:$0xff]
    %v845 = vld [vmem:[#allocation7 + $0x68] sm:$0xff]
    %v846 = vld [vmem:[#allocation7 + $0x70] sm:$0xff]
    %v847 = vld [vmem:[#allocation7 + $0x78] sm:$0xff]
    %v848 = vld [vmem:[#allocation7 + $0x80] sm:$0xff]
    %v849 = vld [vmem:[#allocation7 + $0x88] sm:$0xff]
    %v850 = vld [vmem:[#allocation7 + $0x90] sm:$0xff]
    %v851 = vld [vmem:[#allocation7 + $0x98] sm:$0xff]
    %v852 = vld [vmem:[#allocation7 + $0xa0] sm:$0xff]
    %v853 = vld [vmem:[#allocation7 + $0xa8] sm:$0xff]
    %v854 = vld [vmem:[#allocation7 + $0xb0] sm:$0xff]
    %v855 = vld [vmem:[#allocation7 + $0xb8] sm:$0xff]
    %v856 = vld [vmem:[#allocation7 + $0xc0] sm:$0xff]
    %v857 = vld [vmem:[#allocation7 + $0xc8] sm:$0xff]
    %v858 = vld [vmem:[#allocation7 + $0xd0] sm:$0xff]
    %v859 = vld [vmem:[#allocation7 + $0xd8] sm:$0xff]
    %v860 = vld [vmem:[#allocation7 + $0xe0] sm:$0xff]
    %v861 = vld [vmem:[#allocation7 + $0xe8] sm:$0xff]
    %v862 = vld [vmem:[#allocation7 + $0xf0] sm:$0xff]
    %v863 = vld [vmem:[#allocation7 + $0xf8] sm:$0xff]
    %v865 = vsel %vm156, %v831, 0
    %867 = vmatprep.subr.mxu0 %v833
    %868 = vmatpush1.msra.mxu0 %v832
    %869 = vmatprep.subr.mxu0 %v837
    %870 = vmatpush1.msra.mxu0 %v836
    %871 = vmatprep.subr.mxu0 %v841
    %872 = vmatpush1.msra.mxu0 %v840
    %873 = vmatprep.subr.mxu0 %v845
    %874 = vmatpush1.msra.mxu0 %v844
    %875 = vmatprep.subr.mxu0 %v849
    %876 = vmatpush1.msra.mxu0 %v848
    %877 = vmatprep.subr.mxu0 %v853
    %878 = vmatpush1.msra.mxu0 %v852
    %879 = vmatprep.subr.mxu0 %v857
    %880 = vmatpush1.msra.mxu0 %v856
    %881 = vmatprep.subr.mxu0 %v861
    %882 = vmatpush1.msra.mxu0 %v860
    %883 = vmatprep.subr.mxu0 0.0
    %884 = vmatpush1.msra.mxu0 0.0
    %885 = vmatprep.subr.mxu0 0.0
    %886 = vmatpush1.msra.mxu0 0.0
    %887 = vmatprep.subr.mxu0 0.0
    %888 = vmatpush1.msra.mxu0 0.0
    %889 = vmatprep.subr.mxu0 0.0
    %890 = vmatpush1.msra.mxu0 0.0
    %891 = vmatprep.subr.mxu0 0.0
    %892 = vmatpush1.msra.mxu0 0.0
    %893 = vmatprep.subr.mxu0 0.0
    %894 = vmatpush1.msra.mxu0 0.0
    %895 = vmatprep.subr.mxu0 0.0
    %896 = vmatpush1.msra.mxu0 0.0
    %897 = vmatprep.subr.mxu0 0.0
    %898 = vmatpush1.msra.mxu0 0.0
    %899 = vmatprep.subr.mxu0 0.0
    %900 = vmatpush1.msra.mxu0 0.0
    %901 = vmatprep.subr.mxu0 0.0
    %902 = vmatpush1.msra.mxu0 0.0
    %903 = vmatprep.subr.mxu0 0.0
    %904 = vmatpush1.msra.mxu0 0.0
    %905 = vmatprep.subr.mxu0 0.0
    %906 = vmatpush1.msra.mxu0 0.0
    %907 = vmatprep.subr.mxu0 0.0
    %908 = vmatpush1.msra.mxu0 0.0
    %909 = vmatprep.subr.mxu0 0.0
    %910 = vmatpush1.msra.mxu0 0.0
    %911 = vmatprep.subr.mxu0 0.0
    %912 = vmatpush1.msra.mxu0 0.0
    %913 = vmatprep.subr.mxu0 0.0
    %914 = vmatpush1.msra.mxu0 0.0
    %915 = vmatprep.subr.mxu0 0.0
    %916 = vmatpush1.msra.mxu0 0.0
    %917 = vmatprep.subr.mxu0 0.0
    %918 = vmatpush1.msra.mxu0 0.0
    %919 = vmatprep.subr.mxu0 0.0
    %920 = vmatpush1.msra.mxu0 0.0
    %921 = vmatprep.subr.mxu0 0.0
    %922 = vmatpush1.msra.mxu0 0.0
    %923 = vmatprep.subr.mxu0 0.0
    %924 = vmatpush1.msra.mxu0 0.0
    %925 = vmatprep.subr.mxu0 0.0
    %926 = vmatpush1.msra.mxu0 0.0
    %927 = vmatprep.subr.mxu0 0.0
    %928 = vmatpush1.msra.mxu0 0.0
    %929 = vmatprep.subr.mxu0 0.0
    %930 = vmatpush1.msra.mxu0 0.0
    %931 = vmatprep.mubr.f32.mxu0 0.0
    %932 = vmatmul.mubr.f32.gmra.mrb[0].mxu0 %v865
    %v933 = vpop.f32.mrb[0].mxu0
    %v934 = vadd.f32 0.0, %v933
    %v935 = vpop.f32.mrb[0].mxu0
    %v936 = vadd.f32 0.0, %v935
    %937 = vdwg.mxu0
    %938 = vmatprep.subr.mxu0 %v835
    %939 = vmatpush1.msra.mxu0 %v834
    %940 = vmatprep.subr.mxu0 %v839
    %941 = vmatpush1.msra.mxu0 %v838
    %942 = vmatprep.subr.mxu0 %v843
    %943 = vmatpush1.msra.mxu0 %v842
    %944 = vmatprep.subr.mxu0 %v847
    %945 = vmatpush1.msra.mxu0 %v846
    %946 = vmatprep.subr.mxu0 %v851
    %947 = vmatpush1.msra.mxu0 %v850
    %948 = vmatprep.subr.mxu0 %v855
    %949 = vmatpush1.msra.mxu0 %v854
    %950 = vmatprep.subr.mxu0 %v859
    %951 = vmatpush1.msra.mxu0 %v858
    %952 = vmatprep.subr.mxu0 %v863
    %953 = vmatpush1.msra.mxu0 %v862
    %954 = vmatprep.subr.mxu0 0.0
    %955 = vmatpush1.msra.mxu0 0.0
    %956 = vmatprep.subr.mxu0 0.0
    %957 = vmatpush1.msra.mxu0 0.0
    %958 = vmatprep.subr.mxu0 0.0
    %959 = vmatpush1.msra.mxu0 0.0
    %960 = vmatprep.subr.mxu0 0.0
    %961 = vmatpush1.msra.mxu0 0.0
    %962 = vmatprep.subr.mxu0 0.0
    %963 = vmatpush1.msra.mxu0 0.0
    %964 = vmatprep.subr.mxu0 0.0
    %965 = vmatpush1.msra.mxu0 0.0
    %966 = vmatprep.subr.mxu0 0.0
    %967 = vmatpush1.msra.mxu0 0.0
    %968 = vmatprep.subr.mxu0 0.0
    %969 = vmatpush1.msra.mxu0 0.0
    %970 = vmatprep.subr.mxu0 0.0
    %971 = vmatpush1.msra.mxu0 0.0
    %972 = vmatprep.subr.mxu0 0.0
    %973 = vmatpush1.msra.mxu0 0.0
    %974 = vmatprep.subr.mxu0 0.0
    %975 = vmatpush1.msra.mxu0 0.0
    %976 = vmatprep.subr.mxu0 0.0
    %977 = vmatpush1.msra.mxu0 0.0
    %978 = vmatprep.subr.mxu0 0.0
    %979 = vmatpush1.msra.mxu0 0.0
    %980 = vmatprep.subr.mxu0 0.0
    %981 = vmatpush1.msra.mxu0 0.0
    %982 = vmatprep.subr.mxu0 0.0
    %983 = vmatpush1.msra.mxu0 0.0
    %984 = vmatprep.subr.mxu0 0.0
    %985 = vmatpush1.msra.mxu0 0.0
    %986 = vmatprep.subr.mxu0 0.0
    %987 = vmatpush1.msra.mxu0 0.0
    %988 = vmatprep.subr.mxu0 0.0
    %989 = vmatpush1.msra.mxu0 0.0
    %990 = vmatprep.subr.mxu0 0.0
    %991 = vmatpush1.msra.mxu0 0.0
    %992 = vmatprep.subr.mxu0 0.0
    %993 = vmatpush1.msra.mxu0 0.0
    %994 = vmatprep.subr.mxu0 0.0
    %995 = vmatpush1.msra.mxu0 0.0
    %996 = vmatprep.subr.mxu0 0.0
    %997 = vmatpush1.msra.mxu0 0.0
    %998 = vmatprep.subr.mxu0 0.0
    %999 = vmatpush1.msra.mxu0 0.0
    %1000 = vmatprep.subr.mxu0 0.0
    %1001 = vmatpush1.msra.mxu0 0.0
    %1002 = vmatprep.mubr.f32.mxu0 0.0
    %1003 = vmatmul.mubr.f32.gmra.mrb[0].mxu0 %v865
    %v1004 = vpop.f32.mrb[0].mxu0
    %v1005 = vadd.f32 0.0, %v1004
    %v1006 = vpop.f32.mrb[0].mxu0
    %v1007 = vadd.f32 0.0, %v1006
    %1008 = vdwg.mxu0
    %v1009 = vld [vmem:[#allocation8] sm:$0xff]
    %v1010 = vld [vmem:[#allocation8 + $0x8] sm:$0xff]
    %v1011 = vld [vmem:[#allocation8 + $0x10] sm:$0xff]
    %v1012 = vld [vmem:[#allocation8 + $0x18] sm:$0xff]
    %v1013 = vld [vmem:[#allocation8 + $0x20] sm:$0xff]
    %v1014 = vld [vmem:[#allocation8 + $0x28] sm:$0xff]
    %v1015 = vld [vmem:[#allocation8 + $0x30] sm:$0xff]
    %v1016 = vld [vmem:[#allocation8 + $0x38] sm:$0xff]
    %v1017 = vld [vmem:[#allocation8 + $0x40] sm:$0xff]
    %v1018 = vld [vmem:[#allocation8 + $0x48] sm:$0xff]
    %v1019 = vld [vmem:[#allocation8 + $0x50] sm:$0xff]
    %v1020 = vld [vmem:[#allocation8 + $0x58] sm:$0xff]
    %v1021 = vld [vmem:[#allocation8 + $0x60] sm:$0xff]
    %v1022 = vld [vmem:[#allocation8 + $0x68] sm:$0xff]
    %v1023 = vld [vmem:[#allocation8 + $0x70] sm:$0xff]
    %v1024 = vld [vmem:[#allocation8 + $0x78] sm:$0xff]
    %v1025 = vld [vmem:[#allocation8 + $0x80] sm:$0xff]
    %v1026 = vld [vmem:[#allocation8 + $0x88] sm:$0xff]
    %v1027 = vld [vmem:[#allocation8 + $0x90] sm:$0xff]
    %v1028 = vld [vmem:[#allocation8 + $0x98] sm:$0xff]
    %v1029 = vld [vmem:[#allocation8 + $0xa0] sm:$0xff]
    %v1030 = vld [vmem:[#allocation8 + $0xa8] sm:$0xff]
    %v1031 = vld [vmem:[#allocation8 + $0xb0] sm:$0xff]
    %v1032 = vld [vmem:[#allocation8 + $0xb8] sm:$0xff]
    %v1033 = vld [vmem:[#allocation8 + $0xc0] sm:$0xff]
    %v1034 = vld [vmem:[#allocation8 + $0xc8] sm:$0xff]
    %v1035 = vld [vmem:[#allocation8 + $0xd0] sm:$0xff]
    %v1036 = vld [vmem:[#allocation8 + $0xd8] sm:$0xff]
    %v1037 = vld [vmem:[#allocation8 + $0xe0] sm:$0xff]
    %v1038 = vld [vmem:[#allocation8 + $0xe8] sm:$0xff]
    %v1039 = vld [vmem:[#allocation8 + $0xf0] sm:$0xff]
    %v1040 = vld [vmem:[#allocation8 + $0xf8] sm:$0xff]
    %v1042 = vsel %vm156, %v782, 0
    %1044 = vmatprep.subr.mxu0 %v1010
    %1045 = vmatpush1.msra.mxu0 %v1009
    %1046 = vmatprep.subr.mxu0 %v1014
    %1047 = vmatpush1.msra.mxu0 %v1013
    %1048 = vmatprep.subr.mxu0 %v1018
    %1049 = vmatpush1.msra.mxu0 %v1017
    %1050 = vmatprep.subr.mxu0 %v1022
    %1051 = vmatpush1.msra.mxu0 %v1021
    %1052 = vmatprep.subr.mxu0 %v1026
    %1053 = vmatpush1.msra.mxu0 %v1025
    %1054 = vmatprep.subr.mxu0 %v1030
    %1055 = vmatpush1.msra.mxu0 %v1029
    %1056 = vmatprep.subr.mxu0 %v1034
    %1057 = vmatpush1.msra.mxu0 %v1033
    %1058 = vmatprep.subr.mxu0 %v1038
    %1059 = vmatpush1.msra.mxu0 %v1037
    %1060 = vmatprep.subr.mxu0 0.0
    %1061 = vmatpush1.msra.mxu0 0.0
    %1062 = vmatprep.subr.mxu0 0.0
    %1063 = vmatpush1.msra.mxu0 0.0
    %1064 = vmatprep.subr.mxu0 0.0
    %1065 = vmatpush1.msra.mxu0 0.0
    %1066 = vmatprep.subr.mxu0 0.0
    %1067 = vmatpush1.msra.mxu0 0.0
    %1068 = vmatprep.subr.mxu0 0.0
    %1069 = vmatpush1.msra.mxu0 0.0
    %1070 = vmatprep.subr.mxu0 0.0
    %1071 = vmatpush1.msra.mxu0 0.0
    %1072 = vmatprep.subr.mxu0 0.0
    %1073 = vmatpush1.msra.mxu0 0.0
    %1074 = vmatprep.subr.mxu0 0.0
    %1075 = vmatpush1.msra.mxu0 0.0
    %1076 = vmatprep.subr.mxu0 0.0
    %1077 = vmatpush1.msra.mxu0 0.0
    %1078 = vmatprep.subr.mxu0 0.0
    %1079 = vmatpush1.msra.mxu0 0.0
    %1080 = vmatprep.subr.mxu0 0.0
    %1081 = vmatpush1.msra.mxu0 0.0
    %1082 = vmatprep.subr.mxu0 0.0
    %1083 = vmatpush1.msra.mxu0 0.0
    %1084 = vmatprep.subr.mxu0 0.0
    %1085 = vmatpush1.msra.mxu0 0.0
    %1086 = vmatprep.subr.mxu0 0.0
    %1087 = vmatpush1.msra.mxu0 0.0
    %1088 = vmatprep.subr.mxu0 0.0
    %1089 = vmatpush1.msra.mxu0 0.0
    %1090 = vmatprep.subr.mxu0 0.0
    %1091 = vmatpush1.msra.mxu0 0.0
    %1092 = vmatprep.subr.mxu0 0.0
    %1093 = vmatpush1.msra.mxu0 0.0
    %1094 = vmatprep.subr.mxu0 0.0
    %1095 = vmatpush1.msra.mxu0 0.0
    %1096 = vmatprep.subr.mxu0 0.0
    %1097 = vmatpush1.msra.mxu0 0.0
    %1098 = vmatprep.subr.mxu0 0.0
    %1099 = vmatpush1.msra.mxu0 0.0
    %1100 = vmatprep.subr.mxu0 0.0
    %1101 = vmatpush1.msra.mxu0 0.0
    %1102 = vmatprep.subr.mxu0 0.0
    %1103 = vmatpush1.msra.mxu0 0.0
    %1104 = vmatprep.subr.mxu0 0.0
    %1105 = vmatpush1.msra.mxu0 0.0
    %1106 = vmatprep.subr.mxu0 0.0
    %1107 = vmatpush1.msra.mxu0 0.0
    %1108 = vmatprep.mubr.f32.mxu0 0.0
    %1109 = vmatmul.mubr.f32.gmra.mrb[0].mxu0 %v1042
    %v1110 = vpop.f32.mrb[0].mxu0
    %v1111 = vadd.f32 0.0, %v1110
    %v1112 = vpop.f32.mrb[0].mxu0
    %v1113 = vadd.f32 0.0, %v1112
    %1114 = vdwg.mxu0
    %1115 = vmatprep.subr.mxu0 %v1012
    %1116 = vmatpush1.msra.mxu0 %v1011
    %1117 = vmatprep.subr.mxu0 %v1016
    %1118 = vmatpush1.msra.mxu0 %v1015
    %1119 = vmatprep.subr.mxu0 %v1020
    %1120 = vmatpush1.msra.mxu0 %v1019
    %1121 = vmatprep.subr.mxu0 %v1024
    %1122 = vmatpush1.msra.mxu0 %v1023
    %1123 = vmatprep.subr.mxu0 %v1028
    %1124 = vmatpush1.msra.mxu0 %v1027
    %1125 = vmatprep.subr.mxu0 %v1032
    %1126 = vmatpush1.msra.mxu0 %v1031
    %1127 = vmatprep.subr.mxu0 %v1036
    %1128 = vmatpush1.msra.mxu0 %v1035
    %1129 = vmatprep.subr.mxu0 %v1040
    %1130 = vmatpush1.msra.mxu0 %v1039
    %1131 = vmatprep.subr.mxu0 0.0
    %1132 = vmatpush1.msra.mxu0 0.0
    %1133 = vmatprep.subr.mxu0 0.0
    %1134 = vmatpush1.msra.mxu0 0.0
    %1135 = vmatprep.subr.mxu0 0.0
    %1136 = vmatpush1.msra.mxu0 0.0
    %1137 = vmatprep.subr.mxu0 0.0
    %1138 = vmatpush1.msra.mxu0 0.0
    %1139 = vmatprep.subr.mxu0 0.0
    %1140 = vmatpush1.msra.mxu0 0.0
    %1141 = vmatprep.subr.mxu0 0.0
    %1142 = vmatpush1.msra.mxu0 0.0
    %1143 = vmatprep.subr.mxu0 0.0
    %1144 = vmatpush1.msra.mxu0 0.0
    %1145 = vmatprep.subr.mxu0 0.0
    %1146 = vmatpush1.msra.mxu0 0.0
    %1147 = vmatprep.subr.mxu0 0.0
    %1148 = vmatpush1.msra.mxu0 0.0
    %1149 = vmatprep.subr.mxu0 0.0
    %1150 = vmatpush1.msra.mxu0 0.0
    %1151 = vmatprep.subr.mxu0 0.0
    %1152 = vmatpush1.msra.mxu0 0.0
    %1153 = vmatprep.subr.mxu0 0.0
    %1154 = vmatpush1.msra.mxu0 0.0
    %1155 = vmatprep.subr.mxu0 0.0
    %1156 = vmatpush1.msra.mxu0 0.0
    %1157 = vmatprep.subr.mxu0 0.0
    %1158 = vmatpush1.msra.mxu0 0.0
    %1159 = vmatprep.subr.mxu0 0.0
    %1160 = vmatpush1.msra.mxu0 0.0
    %1161 = vmatprep.subr.mxu0 0.0
    %1162 = vmatpush1.msra.mxu0 0.0
    %1163 = vmatprep.subr.mxu0 0.0
    %1164 = vmatpush1.msra.mxu0 0.0
    %1165 = vmatprep.subr.mxu0 0.0
    %1166 = vmatpush1.msra.mxu0 0.0
    %1167 = vmatprep.subr.mxu0 0.0
    %1168 = vmatpush1.msra.mxu0 0.0
    %1169 = vmatprep.subr.mxu0 0.0
    %1170 = vmatpush1.msra.mxu0 0.0
    %1171 = vmatprep.subr.mxu0 0.0
    %1172 = vmatpush1.msra.mxu0 0.0
    %1173 = vmatprep.subr.mxu0 0.0
    %1174 = vmatpush1.msra.mxu0 0.0
    %1175 = vmatprep.subr.mxu0 0.0
    %1176 = vmatpush1.msra.mxu0 0.0
    %1177 = vmatprep.subr.mxu0 0.0
    %1178 = vmatpush1.msra.mxu0 0.0
    %1179 = vmatprep.mubr.f32.mxu0 0.0
    %1180 = vmatmul.mubr.f32.gmra.mrb[0].mxu0 %v1042
    %v1181 = vpop.f32.mrb[0].mxu0
    %v1182 = vadd.f32 0.0, %v1181
    %v1183 = vpop.f32.mrb[0].mxu0
    %v1184 = vadd.f32 0.0, %v1183
    %1185 = vdwg.mxu0
    %v1186 = vld [vmem:[#allocation10] sm:$0xff]
    %v1187 = vld [vmem:[#allocation10 + $0x8] sm:$0xff]
    %v1188 = vld [vmem:[#allocation10 + $0x10] sm:$0xff]
    %v1189 = vld [vmem:[#allocation10 + $0x18] sm:$0xff]
    %v1190 = vld [vmem:[#allocation10 + $0x20] sm:$0xff]
    %v1191 = vld [vmem:[#allocation10 + $0x28] sm:$0xff]
    %v1192 = vld [vmem:[#allocation10 + $0x30] sm:$0xff]
    %v1193 = vld [vmem:[#allocation10 + $0x38] sm:$0xff]
    %v1194 = vld [vmem:[#allocation10 + $0x40] sm:$0xff]
    %v1195 = vld [vmem:[#allocation10 + $0x48] sm:$0xff]
    %v1196 = vld [vmem:[#allocation10 + $0x50] sm:$0xff]
    %v1197 = vld [vmem:[#allocation10 + $0x58] sm:$0xff]
    %v1198 = vld [vmem:[#allocation10 + $0x60] sm:$0xff]
    %v1199 = vld [vmem:[#allocation10 + $0x68] sm:$0xff]
    %v1200 = vld [vmem:[#allocation10 + $0x70] sm:$0xff]
    %v1201 = vld [vmem:[#allocation10 + $0x78] sm:$0xff]
    %v1203 = vsel %vm156, %v750, 0
    %1205 = vmatprep.subr.mxu0 %v1187
    %1206 = vmatpush1.msra.mxu0 %v1186
    %1207 = vmatprep.subr.mxu0 %v1189
    %1208 = vmatpush1.msra.mxu0 %v1188
    %1209 = vmatprep.subr.mxu0 %v1191
    %1210 = vmatpush1.msra.mxu0 %v1190
    %1211 = vmatprep.subr.mxu0 %v1193
    %1212 = vmatpush1.msra.mxu0 %v1192
    %1213 = vmatprep.subr.mxu0 %v1195
    %1214 = vmatpush1.msra.mxu0 %v1194
    %1215 = vmatprep.subr.mxu0 %v1197
    %1216 = vmatpush1.msra.mxu0 %v1196
    %1217 = vmatprep.subr.mxu0 %v1199
    %1218 = vmatpush1.msra.mxu0 %v1198
    %1219 = vmatprep.subr.mxu0 %v1201
    %1220 = vmatpush1.msra.mxu0 %v1200
    %1221 = vmatprep.subr.mxu0 0.0
    %1222 = vmatpush1.msra.mxu0 0.0
    %1223 = vmatprep.subr.mxu0 0.0
    %1224 = vmatpush1.msra.mxu0 0.0
    %1225 = vmatprep.subr.mxu0 0.0
    %1226 = vmatpush1.msra.mxu0 0.0
    %1227 = vmatprep.subr.mxu0 0.0
    %1228 = vmatpush1.msra.mxu0 0.0
    %1229 = vmatprep.subr.mxu0 0.0
    %1230 = vmatpush1.msra.mxu0 0.0
    %1231 = vmatprep.subr.mxu0 0.0
    %1232 = vmatpush1.msra.mxu0 0.0
    %1233 = vmatprep.subr.mxu0 0.0
    %1234 = vmatpush1.msra.mxu0 0.0
    %1235 = vmatprep.subr.mxu0 0.0
    %1236 = vmatpush1.msra.mxu0 0.0
    %1237 = vmatprep.subr.mxu0 0.0
    %1238 = vmatpush1.msra.mxu0 0.0
    %1239 = vmatprep.subr.mxu0 0.0
    %1240 = vmatpush1.msra.mxu0 0.0
    %1241 = vmatprep.subr.mxu0 0.0
    %1242 = vmatpush1.msra.mxu0 0.0
    %1243 = vmatprep.subr.mxu0 0.0
    %1244 = vmatpush1.msra.mxu0 0.0
    %1245 = vmatprep.subr.mxu0 0.0
    %1246 = vmatpush1.msra.mxu0 0.0
    %1247 = vmatprep.subr.mxu0 0.0
    %1248 = vmatpush1.msra.mxu0 0.0
    %1249 = vmatprep.subr.mxu0 0.0
    %1250 = vmatpush1.msra.mxu0 0.0
    %1251 = vmatprep.subr.mxu0 0.0
    %1252 = vmatpush1.msra.mxu0 0.0
    %1253 = vmatprep.subr.mxu0 0.0
    %1254 = vmatpush1.msra.mxu0 0.0
    %1255 = vmatprep.subr.mxu0 0.0
    %1256 = vmatpush1.msra.mxu0 0.0
    %1257 = vmatprep.subr.mxu0 0.0
    %1258 = vmatpush1.msra.mxu0 0.0
    %1259 = vmatprep.subr.mxu0 0.0
    %1260 = vmatpush1.msra.mxu0 0.0
    %1261 = vmatprep.subr.mxu0 0.0
    %1262 = vmatpush1.msra.mxu0 0.0
    %1263 = vmatprep.subr.mxu0 0.0
    %1264 = vmatpush1.msra.mxu0 0.0
    %1265 = vmatprep.subr.mxu0 0.0
    %1266 = vmatpush1.msra.mxu0 0.0
    %1267 = vmatprep.subr.mxu0 0.0
    %1268 = vmatpush1.msra.mxu0 0.0
    %1269 = vmatprep.mubr.f32.mxu0 0.0
    %1270 = vmatmul.mubr.f32.gmra.mrb[0].mxu0 %v1203
    %v1271 = vpop.f32.mrb[0].mxu0
    %v1272 = vadd.f32 0.0, %v1271
    %v1273 = vpop.f32.mrb[0].mxu0
    %v1274 = vadd.f32 0.0, %v1273
    %1275 = vdwg.mxu0
    %v1276 = vadd.f32 %v1182, %v716
    %v1277 = vadd.f32 %v1184, %v720
    %v1278 = vadd.f32 %v1276, %v1272
    %v1279 = vadd.f32 %v1277, %v1274
    %v1280 = vmul.f32 %v1278, 0.5
    %v1281 = vmul.f32 %v1279, 0.5
    %v1282 = vtanh.pop %v1280
    %v1283 = vtanh.pop %v1281
    %v1284 = vmul.f32 %v1282, 0.5
    %v1285 = vmul.f32 %v1283, 0.5
    %v1286 = vadd.f32 %v1284, 0.5
    %v1287 = vadd.f32 %v1285, 0.5
    %v1288 = vtanh.pop %v1279
    %v1289 = vmul.f32 %v1286, %v744
    %1291 = vrot.lane.b32.xlu0 %v1288, 64
    %v1292 = vpop.permute.xlu0 %1291
    %v1294 = vmul.f32 %v1286, %v1292
    %1296 = vrot.lane.b32.xlu0 %v1294, 64
    %v1297 = vpop.permute.xlu0 %1296
    %v1299 = vadd.f32 %v1289, %v1297
    %v1300 = vtanh.pop %v1299
    %1302 = vrot.lane.b32.xlu0 %v1300, 64
    %v1303 = vpop.permute.xlu0 %1302
    %v1305 = vmul.f32 %v1287, %v1303
    %1306 = vst.msk [vmem:[#allocation2 + $0x1] sm:$0x1] %vm751, %v1305
    %v1307 = vadd.f32 %v1005, %v306
    %v1308 = vadd.f32 %v1007, %v310
    %v1309 = vadd.f32 %v1307, %v1111
    %v1310 = vadd.f32 %v1308, %v1113
    %v1311 = vmul.f32 %v1309, 0.5
    %v1312 = vmul.f32 %v1310, 0.5
    %v1313 = vtanh.pop %v1311
    %v1314 = vtanh.pop %v1312
    %v1315 = vmul.f32 %v1313, 0.5
    %v1316 = vmul.f32 %v1314, 0.5
    %v1317 = vadd.f32 %v1315, 0.5
    %v1318 = vadd.f32 %v1316, 0.5
    %v1319 = vtanh.pop %v1310
    %v1320 = vmul.f32 %v1317, %v776
    %1322 = vrot.lane.b32.xlu0 %v1319, 64
    %v1323 = vpop.permute.xlu0 %1322
    %v1325 = vmul.f32 %v1317, %v1323
    %1327 = vrot.lane.b32.xlu0 %v1325, 64
    %v1328 = vpop.permute.xlu0 %1327
    %v1330 = vadd.f32 %v1320, %v1328
    %v1331 = vtanh.pop %v1330
    %1333 = vrot.lane.b32.xlu0 %v1331, 64
    %v1334 = vpop.permute.xlu0 %1333
    %v1336 = vmul.f32 %v1318, %v1334
    %s1337 = sld [smem:[#allocation3 + $0x3]]
    %v1338 = vstv %s1337
    %v1339 = vmul.f32 %v1338, %v90
    %v1340 = vadd.f32 %v1339, %v91
    %v1343 = vcombine.low %v934, %v936
    %v1345 = vunpack.c.l.s4 1966171168
    %v1346 = vunpack.c.0.s8 %v1345
    %v1347 = vlaneseq
    %v1348 = vshrl.u32 %v1347, 7
    %v1349 = vsub.s32 %v1346, %v1348
    %v1350 = vrot.slane %v1343, %v1349
    %v1352 = vunpack.c.l.s4 1966171168
    %v1353 = vunpack.c.0.s8 %v1352
    %v1354 = vlaneseq
    %v1355 = vshrl.u32 %v1354, 7
    %v1356 = vsub.s32 %v1353, %v1355
    %v1357 = vrot.slane %v1350, %v1356
    %v1359 = vadd.f32 %v1340, %v1357
    %v1360 = vmul.f32 %v1359, 0.5
    %v1361 = vtanh.pop %v1360
    %v1362 = vmul.f32 %v1361, 0.5
    %v1363 = vadd.f32 %v1362, 0.5
    %1365 = vrot.lane.b32.xlu0 %v1359, 64
    %v1366 = vpop.permute.xlu0 %1365
    %v1367 = vrot.slane %v1366, 1
    %v1369 = vtanh.pop %v1367
    %v1370 = vmul.f32 %v1363, %v822
    %v1371 = vmul.f32 %v1363, %v1369
    %1373 = vrot.lane.b32.xlu0 %v1371, 64
    %v1374 = vpop.permute.xlu0 %1373
    %v1376 = vadd.f32 %v1370, %v1374
    %v1377 = vtanh.pop %v1376
    %v1379 = vrot.slane %v1363, 1
    %1382 = vrot.lane.b32.xlu0 %v1377, 64
    %v1383 = vpop.permute.xlu0 %1382
    %v1385 = vmul.f32 %v1379, %v1383
    %v1386 = vld [vmem:[#allocation7] sm:$0xff]
    %v1387 = vld [vmem:[#allocation7 + $0x8] sm:$0xff]
    %v1388 = vld [vmem:[#allocation7 + $0x10] sm:$0xff]
    %v1389 = vld [vmem:[#allocation7 + $0x18] sm:$0xff]
    %v1390 = vld [vmem:[#allocation7 + $0x20] sm:$0xff]
    %v1391 = vld [vmem:[#allocation7 + $0x28] sm:$0xff]
    %v1392 = vld [vmem:[#allocation7 + $0x30] sm:$0xff]
    %v1393 = vld [vmem:[#allocation7 + $0x38] sm:$0xff]
    %v1394 = vld [vmem:[#allocation7 + $0x40] sm:$0xff]
    %v1395 = vld [vmem:[#allocation7 + $0x48] sm:$0xff]
    %v1396 = vld [vmem:[#allocation7 + $0x50] sm:$0xff]
    %v1397 = vld [vmem:[#allocation7 + $0x58] sm:$0xff]
    %v1398 = vld [vmem:[#allocation7 + $0x60] sm:$0xff]
    %v1399 = vld [vmem:[#allocation7 + $0x68] sm:$0xff]
    %v1400 = vld [vmem:[#allocation7 + $0x70] sm:$0xff]
    %v1401 = vld [vmem:[#allocation7 + $0x78] sm:$0xff]
    %v1402 = vld [vmem:[#allocation7 + $0x80] sm:$0xff]
    %v1403 = vld [vmem:[#allocation7 + $0x88] sm:$0xff]
    %v1404 = vld [vmem:[#allocation7 + $0x90] sm:$0xff]
    %v1405 = vld [vmem:[#allocation7 + $0x98] sm:$0xff]
    %v1406 = vld [vmem:[#allocation7 + $0xa0] sm:$0xff]
    %v1407 = vld [vmem:[#allocation7 + $0xa8] sm:$0xff]
    %v1408 = vld [vmem:[#allocation7 + $0xb0] sm:$0xff]
    %v1409 = vld [vmem:[#allocation7 + $0xb8] sm:$0xff]
    %v1410 = vld [vmem:[#allocation7 + $0xc0] sm:$0xff]
    %v1411 = vld [vmem:[#allocation7 + $0xc8] sm:$0xff]
    %v1412 = vld [vmem:[#allocation7 + $0xd0] sm:$0xff]
    %v1413 = vld [vmem:[#allocation7 + $0xd8] sm:$0xff]
    %v1414 = vld [vmem:[#allocation7 + $0xe0] sm:$0xff]
    %v1415 = vld [vmem:[#allocation7 + $0xe8] sm:$0xff]
    %v1416 = vld [vmem:[#allocation7 + $0xf0] sm:$0xff]
    %v1417 = vld [vmem:[#allocation7 + $0xf8] sm:$0xff]
    %v1419 = vsel %vm156, %v1385, 0
    %1421 = vmatprep.subr.mxu0 %v1387
    %1422 = vmatpush1.msra.mxu0 %v1386
    %1423 = vmatprep.subr.mxu0 %v1391
    %1424 = vmatpush1.msra.mxu0 %v1390
    %1425 = vmatprep.subr.mxu0 %v1395
    %1426 = vmatpush1.msra.mxu0 %v1394
    %1427 = vmatprep.subr.mxu0 %v1399
    %1428 = vmatpush1.msra.mxu0 %v1398
    %1429 = vmatprep.subr.mxu0 %v1403
    %1430 = vmatpush1.msra.mxu0 %v1402
    %1431 = vmatprep.subr.mxu0 %v1407
    %1432 = vmatpush1.msra.mxu0 %v1406
    %1433 = vmatprep.subr.mxu0 %v1411
    %1434 = vmatpush1.msra.mxu0 %v1410
    %1435 = vmatprep.subr.mxu0 %v1415
    %1436 = vmatpush1.msra.mxu0 %v1414
    %1437 = vmatprep.subr.mxu0 0.0
    %1438 = vmatpush1.msra.mxu0 0.0
    %1439 = vmatprep.subr.mxu0 0.0
    %1440 = vmatpush1.msra.mxu0 0.0
    %1441 = vmatprep.subr.mxu0 0.0
    %1442 = vmatpush1.msra.mxu0 0.0
    %1443 = vmatprep.subr.mxu0 0.0
    %1444 = vmatpush1.msra.mxu0 0.0
    %1445 = vmatprep.subr.mxu0 0.0
    %1446 = vmatpush1.msra.mxu0 0.0
    %1447 = vmatprep.subr.mxu0 0.0
    %1448 = vmatpush1.msra.mxu0 0.0
    %1449 = vmatprep.subr.mxu0 0.0
    %1450 = vmatpush1.msra.mxu0 0.0
    %1451 = vmatprep.subr.mxu0 0.0
    %1452 = vmatpush1.msra.mxu0 0.0
    %1453 = vmatprep.subr.mxu0 0.0
    %1454 = vmatpush1.msra.mxu0 0.0
    %1455 = vmatprep.subr.mxu0 0.0
    %1456 = vmatpush1.msra.mxu0 0.0
    %1457 = vmatprep.subr.mxu0 0.0
    %1458 = vmatpush1.msra.mxu0 0.0
    %1459 = vmatprep.subr.mxu0 0.0
    %1460 = vmatpush1.msra.mxu0 0.0
    %1461 = vmatprep.subr.mxu0 0.0
    %1462 = vmatpush1.msra.mxu0 0.0
    %1463 = vmatprep.subr.mxu0 0.0
    %1464 = vmatpush1.msra.mxu0 0.0
    %1465 = vmatprep.subr.mxu0 0.0
    %1466 = vmatpush1.msra.mxu0 0.0
    %1467 = vmatprep.subr.mxu0 0.0
    %1468 = vmatpush1.msra.mxu0 0.0
    %1469 = vmatprep.subr.mxu0 0.0
    %1470 = vmatpush1.msra.mxu0 0.0
    %1471 = vmatprep.subr.mxu0 0.0
    %1472 = vmatpush1.msra.mxu0 0.0
    %1473 = vmatprep.subr.mxu0 0.0
    %1474 = vmatpush1.msra.mxu0 0.0
    %1475 = vmatprep.subr.mxu0 0.0
    %1476 = vmatpush1.msra.mxu0 0.0
    %1477 = vmatprep.subr.mxu0 0.0
    %1478 = vmatpush1.msra.mxu0 0.0
    %1479 = vmatprep.subr.mxu0 0.0
    %1480 = vmatpush1.msra.mxu0 0.0
    %1481 = vmatprep.subr.mxu0 0.0
    %1482 = vmatpush1.msra.mxu0 0.0
    %1483 = vmatprep.subr.mxu0 0.0
    %1484 = vmatpush1.msra.mxu0 0.0
    %1485 = vmatprep.mubr.f32.mxu0 0.0
    %1486 = vmatmul.mubr.f32.gmra.mrb[0].mxu0 %v1419
    %v1487 = vpop.f32.mrb[0].mxu0
    %v1488 = vadd.f32 0.0, %v1487
    %v1489 = vpop.f32.mrb[0].mxu0
    %v1490 = vadd.f32 0.0, %v1489
    %1491 = vdwg.mxu0
    %1492 = vmatprep.subr.mxu0 %v1389
    %1493 = vmatpush1.msra.mxu0 %v1388
    %1494 = vmatprep.subr.mxu0 %v1393
    %1495 = vmatpush1.msra.mxu0 %v1392
    %1496 = vmatprep.subr.mxu0 %v1397
    %1497 = vmatpush1.msra.mxu0 %v1396
    %1498 = vmatprep.subr.mxu0 %v1401
    %1499 = vmatpush1.msra.mxu0 %v1400
    %1500 = vmatprep.subr.mxu0 %v1405
    %1501 = vmatpush1.msra.mxu0 %v1404
    %1502 = vmatprep.subr.mxu0 %v1409
    %1503 = vmatpush1.msra.mxu0 %v1408
    %1504 = vmatprep.subr.mxu0 %v1413
    %1505 = vmatpush1.msra.mxu0 %v1412
    %1506 = vmatprep.subr.mxu0 %v1417
    %1507 = vmatpush1.msra.mxu0 %v1416
    %1508 = vmatprep.subr.mxu0 0.0
    %1509 = vmatpush1.msra.mxu0 0.0
    %1510 = vmatprep.subr.mxu0 0.0
    %1511 = vmatpush1.msra.mxu0 0.0
    %1512 = vmatprep.subr.mxu0 0.0
    %1513 = vmatpush1.msra.mxu0 0.0
    %1514 = vmatprep.subr.mxu0 0.0
    %1515 = vmatpush1.msra.mxu0 0.0
    %1516 = vmatprep.subr.mxu0 0.0
    %1517 = vmatpush1.msra.mxu0 0.0
    %1518 = vmatprep.subr.mxu0 0.0
    %1519 = vmatpush1.msra.mxu0 0.0
    %1520 = vmatprep.subr.mxu0 0.0
    %1521 = vmatpush1.msra.mxu0 0.0
    %1522 = vmatprep.subr.mxu0 0.0
    %1523 = vmatpush1.msra.mxu0 0.0
    %1524 = vmatprep.subr.mxu0 0.0
    %1525 = vmatpush1.msra.mxu0 0.0
    %1526 = vmatprep.subr.mxu0 0.0
    %1527 = vmatpush1.msra.mxu0 0.0
    %1528 = vmatprep.subr.mxu0 0.0
    %1529 = vmatpush1.msra.mxu0 0.0
    %1530 = vmatprep.subr.mxu0 0.0
    %1531 = vmatpush1.msra.mxu0 0.0
    %1532 = vmatprep.subr.mxu0 0.0
    %1533 = vmatpush1.msra.mxu0 0.0
    %1534 = vmatprep.subr.mxu0 0.0
    %1535 = vmatpush1.msra.mxu0 0.0
    %1536 = vmatprep.subr.mxu0 0.0
    %1537 = vmatpush1.msra.mxu0 0.0
    %1538 = vmatprep.subr.mxu0 0.0
    %1539 = vmatpush1.msra.mxu0 0.0
    %1540 = vmatprep.subr.mxu0 0.0
    %1541 = vmatpush1.msra.mxu0 0.0
    %1542 = vmatprep.subr.mxu0 0.0
    %1543 = vmatpush1.msra.mxu0 0.0
    %1544 = vmatprep.subr.mxu0 0.0
    %1545 = vmatpush1.msra.mxu0 0.0
    %1546 = vmatprep.subr.mxu0 0.0
    %1547 = vmatpush1.msra.mxu0 0.0
    %1548 = vmatprep.subr.mxu0 0.0
    %1549 = vmatpush1.msra.mxu0 0.0
    %1550 = vmatprep.subr.mxu0 0.0
    %1551 = vmatpush1.msra.mxu0 0.0
    %1552 = vmatprep.subr.mxu0 0.0
    %1553 = vmatpush1.msra.mxu0 0.0
    %1554 = vmatprep.subr.mxu0 0.0
    %1555 = vmatpush1.msra.mxu0 0.0
    %1556 = vmatprep.mubr.f32.mxu0 0.0
    %1557 = vmatmul.mubr.f32.gmra.mrb[0].mxu0 %v1419
    %v1558 = vpop.f32.mrb[0].mxu0
    %v1559 = vadd.f32 0.0, %v1558
    %v1560 = vpop.f32.mrb[0].mxu0
    %v1561 = vadd.f32 0.0, %v1560
    %1562 = vdwg.mxu0
    %v1563 = vld [vmem:[#allocation8] sm:$0xff]
    %v1564 = vld [vmem:[#allocation8 + $0x8] sm:$0xff]
    %v1565 = vld [vmem:[#allocation8 + $0x10] sm:$0xff]
    %v1566 = vld [vmem:[#allocation8 + $0x18] sm:$0xff]
    %v1567 = vld [vmem:[#allocation8 + $0x20] sm:$0xff]
    %v1568 = vld [vmem:[#allocation8 + $0x28] sm:$0xff]
    %v1569 = vld [vmem:[#allocation8 + $0x30] sm:$0xff]
    %v1570 = vld [vmem:[#allocation8 + $0x38] sm:$0xff]
    %v1571 = vld [vmem:[#allocation8 + $0x40] sm:$0xff]
    %v1572 = vld [vmem:[#allocation8 + $0x48] sm:$0xff]
    %v1573 = vld [vmem:[#allocation8 + $0x50] sm:$0xff]
    %v1574 = vld [vmem:[#allocation8 + $0x58] sm:$0xff]
    %v1575 = vld [vmem:[#allocation8 + $0x60] sm:$0xff]
    %v1576 = vld [vmem:[#allocation8 + $0x68] sm:$0xff]
    %v1577 = vld [vmem:[#allocation8 + $0x70] sm:$0xff]
    %v1578 = vld [vmem:[#allocation8 + $0x78] sm:$0xff]
    %v1579 = vld [vmem:[#allocation8 + $0x80] sm:$0xff]
    %v1580 = vld [vmem:[#allocation8 + $0x88] sm:$0xff]
    %v1581 = vld [vmem:[#allocation8 + $0x90] sm:$0xff]
    %v1582 = vld [vmem:[#allocation8 + $0x98] sm:$0xff]
    %v1583 = vld [vmem:[#allocation8 + $0xa0] sm:$0xff]
    %v1584 = vld [vmem:[#allocation8 + $0xa8] sm:$0xff]
    %v1585 = vld [vmem:[#allocation8 + $0xb0] sm:$0xff]
    %v1586 = vld [vmem:[#allocation8 + $0xb8] sm:$0xff]
    %v1587 = vld [vmem:[#allocation8 + $0xc0] sm:$0xff]
    %v1588 = vld [vmem:[#allocation8 + $0xc8] sm:$0xff]
    %v1589 = vld [vmem:[#allocation8 + $0xd0] sm:$0xff]
    %v1590 = vld [vmem:[#allocation8 + $0xd8] sm:$0xff]
    %v1591 = vld [vmem:[#allocation8 + $0xe0] sm:$0xff]
    %v1592 = vld [vmem:[#allocation8 + $0xe8] sm:$0xff]
    %v1593 = vld [vmem:[#allocation8 + $0xf0] sm:$0xff]
    %v1594 = vld [vmem:[#allocation8 + $0xf8] sm:$0xff]
    %v1596 = vsel %vm156, %v1336, 0
    %1598 = vmatprep.subr.mxu0 %v1564
    %1599 = vmatpush1.msra.mxu0 %v1563
    %1600 = vmatprep.subr.mxu0 %v1568
    %1601 = vmatpush1.msra.mxu0 %v1567
    %1602 = vmatprep.subr.mxu0 %v1572
    %1603 = vmatpush1.msra.mxu0 %v1571
    %1604 = vmatprep.subr.mxu0 %v1576
    %1605 = vmatpush1.msra.mxu0 %v1575
    %1606 = vmatprep.subr.mxu0 %v1580
    %1607 = vmatpush1.msra.mxu0 %v1579
    %1608 = vmatprep.subr.mxu0 %v1584
    %1609 = vmatpush1.msra.mxu0 %v1583
    %1610 = vmatprep.subr.mxu0 %v1588
    %1611 = vmatpush1.msra.mxu0 %v1587
    %1612 = vmatprep.subr.mxu0 %v1592
    %1613 = vmatpush1.msra.mxu0 %v1591
    %1614 = vmatprep.subr.mxu0 0.0
    %1615 = vmatpush1.msra.mxu0 0.0
    %1616 = vmatprep.subr.mxu0 0.0
    %1617 = vmatpush1.msra.mxu0 0.0
    %1618 = vmatprep.subr.mxu0 0.0
    %1619 = vmatpush1.msra.mxu0 0.0
    %1620 = vmatprep.subr.mxu0 0.0
    %1621 = vmatpush1.msra.mxu0 0.0
    %1622 = vmatprep.subr.mxu0 0.0
    %1623 = vmatpush1.msra.mxu0 0.0
    %1624 = vmatprep.subr.mxu0 0.0
    %1625 = vmatpush1.msra.mxu0 0.0
    %1626 = vmatprep.subr.mxu0 0.0
    %1627 = vmatpush1.msra.mxu0 0.0
    %1628 = vmatprep.subr.mxu0 0.0
    %1629 = vmatpush1.msra.mxu0 0.0
    %1630 = vmatprep.subr.mxu0 0.0
    %1631 = vmatpush1.msra.mxu0 0.0
    %1632 = vmatprep.subr.mxu0 0.0
    %1633 = vmatpush1.msra.mxu0 0.0
    %1634 = vmatprep.subr.mxu0 0.0
    %1635 = vmatpush1.msra.mxu0 0.0
    %1636 = vmatprep.subr.mxu0 0.0
    %1637 = vmatpush1.msra.mxu0 0.0
    %1638 = vmatprep.subr.mxu0 0.0
    %1639 = vmatpush1.msra.mxu0 0.0
    %1640 = vmatprep.subr.mxu0 0.0
    %1641 = vmatpush1.msra.mxu0 0.0
    %1642 = vmatprep.subr.mxu0 0.0
    %1643 = vmatpush1.msra.mxu0 0.0
    %1644 = vmatprep.subr.mxu0 0.0
    %1645 = vmatpush1.msra.mxu0 0.0
    %1646 = vmatprep.subr.mxu0 0.0
    %1647 = vmatpush1.msra.mxu0 0.0
    %1648 = vmatprep.subr.mxu0 0.0
    %1649 = vmatpush1.msra.mxu0 0.0
    %1650 = vmatprep.subr.mxu0 0.0
    %1651 = vmatpush1.msra.mxu0 0.0
    %1652 = vmatprep.subr.mxu0 0.0
    %1653 = vmatpush1.msra.mxu0 0.0
    %1654 = vmatprep.subr.mxu0 0.0
    %1655 = vmatpush1.msra.mxu0 0.0
    %1656 = vmatprep.subr.mxu0 0.0
    %1657 = vmatpush1.msra.mxu0 0.0
    %1658 = vmatprep.subr.mxu0 0.0
    %1659 = vmatpush1.msra.mxu0 0.0
    %1660 = vmatprep.subr.mxu0 0.0
    %1661 = vmatpush1.msra.mxu0 0.0
    %1662 = vmatprep.mubr.f32.mxu0 0.0
    %1663 = vmatmul.mubr.f32.gmra.mrb[0].mxu0 %v1596
    %v1664 = vpop.f32.mrb[0].mxu0
    %v1665 = vadd.f32 0.0, %v1664
    %v1666 = vpop.f32.mrb[0].mxu0
    %v1667 = vadd.f32 0.0, %v1666
    %1668 = vdwg.mxu0
    %1669 = vmatprep.subr.mxu0 %v1566
    %1670 = vmatpush1.msra.mxu0 %v1565
    %1671 = vmatprep.subr.mxu0 %v1570
    %1672 = vmatpush1.msra.mxu0 %v1569
    %1673 = vmatprep.subr.mxu0 %v1574
    %1674 = vmatpush1.msra.mxu0 %v1573
    %1675 = vmatprep.subr.mxu0 %v1578
    %1676 = vmatpush1.msra.mxu0 %v1577
    %1677 = vmatprep.subr.mxu0 %v1582
    %1678 = vmatpush1.msra.mxu0 %v1581
    %1679 = vmatprep.subr.mxu0 %v1586
    %1680 = vmatpush1.msra.mxu0 %v1585
    %1681 = vmatprep.subr.mxu0 %v1590
    %1682 = vmatpush1.msra.mxu0 %v1589
    %1683 = vmatprep.subr.mxu0 %v1594
    %1684 = vmatpush1.msra.mxu0 %v1593
    %1685 = vmatprep.subr.mxu0 0.0
    %1686 = vmatpush1.msra.mxu0 0.0
    %1687 = vmatprep.subr.mxu0 0.0
    %1688 = vmatpush1.msra.mxu0 0.0
    %1689 = vmatprep.subr.mxu0 0.0
    %1690 = vmatpush1.msra.mxu0 0.0
    %1691 = vmatprep.subr.mxu0 0.0
    %1692 = vmatpush1.msra.mxu0 0.0
    %1693 = vmatprep.subr.mxu0 0.0
    %1694 = vmatpush1.msra.mxu0 0.0
    %1695 = vmatprep.subr.mxu0 0.0
    %1696 = vmatpush1.msra.mxu0 0.0
    %1697 = vmatprep.subr.mxu0 0.0
    %1698 = vmatpush1.msra.mxu0 0.0
    %1699 = vmatprep.subr.mxu0 0.0
    %1700 = vmatpush1.msra.mxu0 0.0
    %1701 = vmatprep.subr.mxu0 0.0
    %1702 = vmatpush1.msra.mxu0 0.0
    %1703 = vmatprep.subr.mxu0 0.0
    %1704 = vmatpush1.msra.mxu0 0.0
    %1705 = vmatprep.subr.mxu0 0.0
    %1706 = vmatpush1.msra.mxu0 0.0
    %1707 = vmatprep.subr.mxu0 0.0
    %1708 = vmatpush1.msra.mxu0 0.0
    %1709 = vmatprep.subr.mxu0 0.0
    %1710 = vmatpush1.msra.mxu0 0.0
    %1711 = vmatprep.subr.mxu0 0.0
    %1712 = vmatpush1.msra.mxu0 0.0
    %1713 = vmatprep.subr.mxu0 0.0
    %1714 = vmatpush1.msra.mxu0 0.0
    %1715 = vmatprep.subr.mxu0 0.0
    %1716 = vmatpush1.msra.mxu0 0.0
    %1717 = vmatprep.subr.mxu0 0.0
    %1718 = vmatpush1.msra.mxu0 0.0
    %1719 = vmatprep.subr.mxu0 0.0
    %1720 = vmatpush1.msra.mxu0 0.0
    %1721 = vmatprep.subr.mxu0 0.0
    %1722 = vmatpush1.msra.mxu0 0.0
    %1723 = vmatprep.subr.mxu0 0.0
    %1724 = vmatpush1.msra.mxu0 0.0
    %1725 = vmatprep.subr.mxu0 0.0
    %1726 = vmatpush1.msra.mxu0 0.0
    %1727 = vmatprep.subr.mxu0 0.0
    %1728 = vmatpush1.msra.mxu0 0.0
    %1729 = vmatprep.subr.mxu0 0.0
    %1730 = vmatpush1.msra.mxu0 0.0
    %1731 = vmatprep.subr.mxu0 0.0
    %1732 = vmatpush1.msra.mxu0 0.0
    %1733 = vmatprep.mubr.f32.mxu0 0.0
    %1734 = vmatmul.mubr.f32.gmra.mrb[0].mxu0 %v1596
    %v1735 = vpop.f32.mrb[0].mxu0
    %v1736 = vadd.f32 0.0, %v1735
    %v1737 = vpop.f32.mrb[0].mxu0
    %v1738 = vadd.f32 0.0, %v1737
    %1739 = vdwg.mxu0
    %v1740 = vld [vmem:[#allocation10] sm:$0xff]
    %v1741 = vld [vmem:[#allocation10 + $0x8] sm:$0xff]
    %v1742 = vld [vmem:[#allocation10 + $0x10] sm:$0xff]
    %v1743 = vld [vmem:[#allocation10 + $0x18] sm:$0xff]
    %v1744 = vld [vmem:[#allocation10 + $0x20] sm:$0xff]
    %v1745 = vld [vmem:[#allocation10 + $0x28] sm:$0xff]
    %v1746 = vld [vmem:[#allocation10 + $0x30] sm:$0xff]
    %v1747 = vld [vmem:[#allocation10 + $0x38] sm:$0xff]
    %v1748 = vld [vmem:[#allocation10 + $0x40] sm:$0xff]
    %v1749 = vld [vmem:[#allocation10 + $0x48] sm:$0xff]
    %v1750 = vld [vmem:[#allocation10 + $0x50] sm:$0xff]
    %v1751 = vld [vmem:[#allocation10 + $0x58] sm:$0xff]
    %v1752 = vld [vmem:[#allocation10 + $0x60] sm:$0xff]
    %v1753 = vld [vmem:[#allocation10 + $0x68] sm:$0xff]
    %v1754 = vld [vmem:[#allocation10 + $0x70] sm:$0xff]
    %v1755 = vld [vmem:[#allocation10 + $0x78] sm:$0xff]
    %v1757 = vsel %vm156, %v1305, 0
    %1759 = vmatprep.subr.mxu0 %v1741
    %1760 = vmatpush1.msra.mxu0 %v1740
    %1761 = vmatprep.subr.mxu0 %v1743
    %1762 = vmatpush1.msra.mxu0 %v1742
    %1763 = vmatprep.subr.mxu0 %v1745
    %1764 = vmatpush1.msra.mxu0 %v1744
    %1765 = vmatprep.subr.mxu0 %v1747
    %1766 = vmatpush1.msra.mxu0 %v1746
    %1767 = vmatprep.subr.mxu0 %v1749
    %1768 = vmatpush1.msra.mxu0 %v1748
    %1769 = vmatprep.subr.mxu0 %v1751
    %1770 = vmatpush1.msra.mxu0 %v1750
    %1771 = vmatprep.subr.mxu0 %v1753
    %1772 = vmatpush1.msra.mxu0 %v1752
    %1773 = vmatprep.subr.mxu0 %v1755
    %1774 = vmatpush1.msra.mxu0 %v1754
    %1775 = vmatprep.subr.mxu0 0.0
    %1776 = vmatpush1.msra.mxu0 0.0
    %1777 = vmatprep.subr.mxu0 0.0
    %1778 = vmatpush1.msra.mxu0 0.0
    %1779 = vmatprep.subr.mxu0 0.0
    %1780 = vmatpush1.msra.mxu0 0.0
    %1781 = vmatprep.subr.mxu0 0.0
    %1782 = vmatpush1.msra.mxu0 0.0
    %1783 = vmatprep.subr.mxu0 0.0
    %1784 = vmatpush1.msra.mxu0 0.0
    %1785 = vmatprep.subr.mxu0 0.0
    %1786 = vmatpush1.msra.mxu0 0.0
    %1787 = vmatprep.subr.mxu0 0.0
    %1788 = vmatpush1.msra.mxu0 0.0
    %1789 = vmatprep.subr.mxu0 0.0
    %1790 = vmatpush1.msra.mxu0 0.0
    %1791 = vmatprep.subr.mxu0 0.0
    %1792 = vmatpush1.msra.mxu0 0.0
    %1793 = vmatprep.subr.mxu0 0.0
    %1794 = vmatpush1.msra.mxu0 0.0
    %1795 = vmatprep.subr.mxu0 0.0
    %1796 = vmatpush1.msra.mxu0 0.0
    %1797 = vmatprep.subr.mxu0 0.0
    %1798 = vmatpush1.msra.mxu0 0.0
    %1799 = vmatprep.subr.mxu0 0.0
    %1800 = vmatpush1.msra.mxu0 0.0
    %1801 = vmatprep.subr.mxu0 0.0
    %1802 = vmatpush1.msra.mxu0 0.0
    %1803 = vmatprep.subr.mxu0 0.0
    %1804 = vmatpush1.msra.mxu0 0.0
    %1805 = vmatprep.subr.mxu0 0.0
    %1806 = vmatpush1.msra.mxu0 0.0
    %1807 = vmatprep.subr.mxu0 0.0
    %1808 = vmatpush1.msra.mxu0 0.0
    %1809 = vmatprep.subr.mxu0 0.0
    %1810 = vmatpush1.msra.mxu0 0.0
    %1811 = vmatprep.subr.mxu0 0.0
    %1812 = vmatpush1.msra.mxu0 0.0
    %1813 = vmatprep.subr.mxu0 0.0
    %1814 = vmatpush1.msra.mxu0 0.0
    %1815 = vmatprep.subr.mxu0 0.0
    %1816 = vmatpush1.msra.mxu0 0.0
    %1817 = vmatprep.subr.mxu0 0.0
    %1818 = vmatpush1.msra.mxu0 0.0
    %1819 = vmatprep.subr.mxu0 0.0
    %1820 = vmatpush1.msra.mxu0 0.0
    %1821 = vmatprep.subr.mxu0 0.0
    %1822 = vmatpush1.msra.mxu0 0.0
    %1823 = vmatprep.mubr.f32.mxu0 0.0
    %1824 = vmatmul.mubr.f32.gmra.mrb[0].mxu0 %v1757
    %v1825 = vpop.f32.mrb[0].mxu0
    %v1826 = vadd.f32 0.0, %v1825
    %v1827 = vpop.f32.mrb[0].mxu0
    %v1828 = vadd.f32 0.0, %v1827
    %1829 = vdwg.mxu0
    %v1830 = vadd.f32 %v1736, %v716
    %v1831 = vadd.f32 %v1738, %v720
    %v1832 = vadd.f32 %v1830, %v1826
    %v1833 = vadd.f32 %v1831, %v1828
    %v1834 = vmul.f32 %v1832, 0.5
    %v1835 = vmul.f32 %v1833, 0.5
    %v1836 = vtanh.pop %v1834
    %v1837 = vtanh.pop %v1835
    %v1838 = vmul.f32 %v1836, 0.5
    %v1839 = vmul.f32 %v1837, 0.5
    %v1840 = vadd.f32 %v1838, 0.5
    %v1841 = vadd.f32 %v1839, 0.5
    %v1842 = vtanh.pop %v1833
    %v1843 = vmul.f32 %v1840, %v1299
    %1845 = vrot.lane.b32.xlu0 %v1842, 64
    %v1846 = vpop.permute.xlu0 %1845
    %v1848 = vmul.f32 %v1840, %v1846
    %1850 = vrot.lane.b32.xlu0 %v1848, 64
    %v1851 = vpop.permute.xlu0 %1850
    %v1853 = vadd.f32 %v1843, %v1851
    %v1854 = vtanh.pop %v1853
    %1856 = vrot.lane.b32.xlu0 %v1854, 64
    %v1857 = vpop.permute.xlu0 %1856
    %v1859 = vmul.f32 %v1841, %v1857
    %1860 = vst.msk [vmem:[#allocation2 + $0x2] sm:$0x1] %vm751, %v1859
    %v1861 = vadd.f32 %v1559, %v306
    %v1862 = vadd.f32 %v1561, %v310
    %v1863 = vadd.f32 %v1861, %v1665
    %v1864 = vadd.f32 %v1862, %v1667
    %v1865 = vmul.f32 %v1863, 0.5
    %v1866 = vmul.f32 %v1864, 0.5
    %v1867 = vtanh.pop %v1865
    %v1868 = vtanh.pop %v1866
    %v1869 = vmul.f32 %v1867, 0.5
    %v1870 = vmul.f32 %v1868, 0.5
    %v1871 = vadd.f32 %v1869, 0.5
    %v1872 = vadd.f32 %v1870, 0.5
    %v1873 = vtanh.pop %v1864
    %v1874 = vmul.f32 %v1871, %v1330
    %1876 = vrot.lane.b32.xlu0 %v1873, 64
    %v1877 = vpop.permute.xlu0 %1876
    %v1879 = vmul.f32 %v1871, %v1877
    %1881 = vrot.lane.b32.xlu0 %v1879, 64
    %v1882 = vpop.permute.xlu0 %1881
    %v1884 = vadd.f32 %v1874, %v1882
    %v1885 = vtanh.pop %v1884
    %1887 = vrot.lane.b32.xlu0 %v1885, 64
    %v1888 = vpop.permute.xlu0 %1887
    %v1890 = vmul.f32 %v1872, %v1888
    %s1891 = sld [smem:[#allocation3 + $0x4]]
    %v1892 = vstv %s1891
    %v1893 = vmul.f32 %v1892, %v90
    %v1894 = vadd.f32 %v1893, %v91
    %v1897 = vcombine.low %v1488, %v1490
    %v1899 = vunpack.c.l.s4 1966171168
    %v1900 = vunpack.c.0.s8 %v1899
    %v1901 = vlaneseq
    %v1902 = vshrl.u32 %v1901, 7
    %v1903 = vsub.s32 %v1900, %v1902
    %v1904 = vrot.slane %v1897, %v1903
    %v1906 = vunpack.c.l.s4 1966171168
    %v1907 = vunpack.c.0.s8 %v1906
    %v1908 = vlaneseq
    %v1909 = vshrl.u32 %v1908, 7
    %v1910 = vsub.s32 %v1907, %v1909
    %v1911 = vrot.slane %v1904, %v1910
    %v1913 = vadd.f32 %v1894, %v1911
    %v1914 = vmul.f32 %v1913, 0.5
    %v1915 = vtanh.pop %v1914
    %v1916 = vmul.f32 %v1915, 0.5
    %v1917 = vadd.f32 %v1916, 0.5
    %1919 = vrot.lane.b32.xlu0 %v1913, 64
    %v1920 = vpop.permute.xlu0 %1919
    %v1921 = vrot.slane %v1920, 1
    %v1923 = vtanh.pop %v1921
    %v1924 = vmul.f32 %v1917, %v1376
    %v1925 = vmul.f32 %v1917, %v1923
    %1927 = vrot.lane.b32.xlu0 %v1925, 64
    %v1928 = vpop.permute.xlu0 %1927
    %v1930 = vadd.f32 %v1924, %v1928
    %v1931 = vtanh.pop %v1930
    %v1933 = vrot.slane %v1917, 1
    %1936 = vrot.lane.b32.xlu0 %v1931, 64
    %v1937 = vpop.permute.xlu0 %1936
    %v1939 = vmul.f32 %v1933, %v1937
    %v1940 = vld [vmem:[#allocation7] sm:$0xff]
    %v1941 = vld [vmem:[#allocation7 + $0x8] sm:$0xff]
    %v1942 = vld [vmem:[#allocation7 + $0x10] sm:$0xff]
    %v1943 = vld [vmem:[#allocation7 + $0x18] sm:$0xff]
    %v1944 = vld [vmem:[#allocation7 + $0x20] sm:$0xff]
    %v1945 = vld [vmem:[#allocation7 + $0x28] sm:$0xff]
    %v1946 = vld [vmem:[#allocation7 + $0x30] sm:$0xff]
    %v1947 = vld [vmem:[#allocation7 + $0x38] sm:$0xff]
    %v1948 = vld [vmem:[#allocation7 + $0x40] sm:$0xff]
    %v1949 = vld [vmem:[#allocation7 + $0x48] sm:$0xff]
    %v1950 = vld [vmem:[#allocation7 + $0x50] sm:$0xff]
    %v1951 = vld [vmem:[#allocation7 + $0x58] sm:$0xff]
    %v1952 = vld [vmem:[#allocation7 + $0x60] sm:$0xff]
    %v1953 = vld [vmem:[#allocation7 + $0x68] sm:$0xff]
    %v1954 = vld [vmem:[#allocation7 + $0x70] sm:$0xff]
    %v1955 = vld [vmem:[#allocation7 + $0x78] sm:$0xff]
    %v1956 = vld [vmem:[#allocation7 + $0x80] sm:$0xff]
    %v1957 = vld [vmem:[#allocation7 + $0x88] sm:$0xff]
    %v1958 = vld [vmem:[#allocation7 + $0x90] sm:$0xff]
    %v1959 = vld [vmem:[#allocation7 + $0x98] sm:$0xff]
    %v1960 = vld [vmem:[#allocation7 + $0xa0] sm:$0xff]
    %v1961 = vld [vmem:[#allocation7 + $0xa8] sm:$0xff]
    %v1962 = vld [vmem:[#allocation7 + $0xb0] sm:$0xff]
    %v1963 = vld [vmem:[#allocation7 + $0xb8] sm:$0xff]
    %v1964 = vld [vmem:[#allocation7 + $0xc0] sm:$0xff]
    %v1965 = vld [vmem:[#allocation7 + $0xc8] sm:$0xff]
    %v1966 = vld [vmem:[#allocation7 + $0xd0] sm:$0xff]
    %v1967 = vld [vmem:[#allocation7 + $0xd8] sm:$0xff]
    %v1968 = vld [vmem:[#allocation7 + $0xe0] sm:$0xff]
    %v1969 = vld [vmem:[#allocation7 + $0xe8] sm:$0xff]
    %v1970 = vld [vmem:[#allocation7 + $0xf0] sm:$0xff]
    %v1971 = vld [vmem:[#allocation7 + $0xf8] sm:$0xff]
    %v1973 = vsel %vm156, %v1939, 0
    %1975 = vmatprep.subr.mxu0 %v1941
    %1976 = vmatpush1.msra.mxu0 %v1940
    %1977 = vmatprep.subr.mxu0 %v1945
    %1978 = vmatpush1.msra.mxu0 %v1944
    %1979 = vmatprep.subr.mxu0 %v1949
    %1980 = vmatpush1.msra.mxu0 %v1948
    %1981 = vmatprep.subr.mxu0 %v1953
    %1982 = vmatpush1.msra.mxu0 %v1952
    %1983 = vmatprep.subr.mxu0 %v1957
    %1984 = vmatpush1.msra.mxu0 %v1956
    %1985 = vmatprep.subr.mxu0 %v1961
    %1986 = vmatpush1.msra.mxu0 %v1960
    %1987 = vmatprep.subr.mxu0 %v1965
    %1988 = vmatpush1.msra.mxu0 %v1964
    %1989 = vmatprep.subr.mxu0 %v1969
    %1990 = vmatpush1.msra.mxu0 %v1968
    %1991 = vmatprep.subr.mxu0 0.0
    %1992 = vmatpush1.msra.mxu0 0.0
    %1993 = vmatprep.subr.mxu0 0.0
    %1994 = vmatpush1.msra.mxu0 0.0
    %1995 = vmatprep.subr.mxu0 0.0
    %1996 = vmatpush1.msra.mxu0 0.0
    %1997 = vmatprep.subr.mxu0 0.0
    %1998 = vmatpush1.msra.mxu0 0.0
    %1999 = vmatprep.subr.mxu0 0.0
    %2000 = vmatpush1.msra.mxu0 0.0
    %2001 = vmatprep.subr.mxu0 0.0
    %2002 = vmatpush1.msra.mxu0 0.0
    %2003 = vmatprep.subr.mxu0 0.0
    %2004 = vmatpush1.msra.mxu0 0.0
    %2005 = vmatprep.subr.mxu0 0.0
    %2006 = vmatpush1.msra.mxu0 0.0
    %2007 = vmatprep.subr.mxu0 0.0
    %2008 = vmatpush1.msra.mxu0 0.0
    %2009 = vmatprep.subr.mxu0 0.0
    %2010 = vmatpush1.msra.mxu0 0.0
    %2011 = vmatprep.subr.mxu0 0.0
    %2012 = vmatpush1.msra.mxu0 0.0
    %2013 = vmatprep.subr.mxu0 0.0
    %2014 = vmatpush1.msra.mxu0 0.0
    %2015 = vmatprep.subr.mxu0 0.0
    %2016 = vmatpush1.msra.mxu0 0.0
    %2017 = vmatprep.subr.mxu0 0.0
    %2018 = vmatpush1.msra.mxu0 0.0
    %2019 = vmatprep.subr.mxu0 0.0
    %2020 = vmatpush1.msra.mxu0 0.0
    %2021 = vmatprep.subr.mxu0 0.0
    %2022 = vmatpush1.msra.mxu0 0.0
    %2023 = vmatprep.subr.mxu0 0.0
    %2024 = vmatpush1.msra.mxu0 0.0
    %2025 = vmatprep.subr.mxu0 0.0
    %2026 = vmatpush1.msra.mxu0 0.0
    %2027 = vmatprep.subr.mxu0 0.0
    %2028 = vmatpush1.msra.mxu0 0.0
    %2029 = vmatprep.subr.mxu0 0.0
    %2030 = vmatpush1.msra.mxu0 0.0
    %2031 = vmatprep.subr.mxu0 0.0
    %2032 = vmatpush1.msra.mxu0 0.0
    %2033 = vmatprep.subr.mxu0 0.0
    %2034 = vmatpush1.msra.mxu0 0.0
    %2035 = vmatprep.subr.mxu0 0.0
    %2036 = vmatpush1.msra.mxu0 0.0
    %2037 = vmatprep.subr.mxu0 0.0
    %2038 = vmatpush1.msra.mxu0 0.0
    %2039 = vmatprep.mubr.f32.mxu0 0.0
    %2040 = vmatmul.mubr.f32.gmra.mrb[0].mxu0 %v1973
    %v2041 = vpop.f32.mrb[0].mxu0
    %v2042 = vadd.f32 0.0, %v2041
    %v2043 = vpop.f32.mrb[0].mxu0
    %v2044 = vadd.f32 0.0, %v2043
    %2045 = vdwg.mxu0
    %2046 = vmatprep.subr.mxu0 %v1943
    %2047 = vmatpush1.msra.mxu0 %v1942
    %2048 = vmatprep.subr.mxu0 %v1947
    %2049 = vmatpush1.msra.mxu0 %v1946
    %2050 = vmatprep.subr.mxu0 %v1951
    %2051 = vmatpush1.msra.mxu0 %v1950
    %2052 = vmatprep.subr.mxu0 %v1955
    %2053 = vmatpush1.msra.mxu0 %v1954
    %2054 = vmatprep.subr.mxu0 %v1959
    %2055 = vmatpush1.msra.mxu0 %v1958
    %2056 = vmatprep.subr.mxu0 %v1963
    %2057 = vmatpush1.msra.mxu0 %v1962
    %2058 = vmatprep.subr.mxu0 %v1967
    %2059 = vmatpush1.msra.mxu0 %v1966
    %2060 = vmatprep.subr.mxu0 %v1971
    %2061 = vmatpush1.msra.mxu0 %v1970
    %2062 = vmatprep.subr.mxu0 0.0
    %2063 = vmatpush1.msra.mxu0 0.0
    %2064 = vmatprep.subr.mxu0 0.0
    %2065 = vmatpush1.msra.mxu0 0.0
    %2066 = vmatprep.subr.mxu0 0.0
    %2067 = vmatpush1.msra.mxu0 0.0
    %2068 = vmatprep.subr.mxu0 0.0
    %2069 = vmatpush1.msra.mxu0 0.0
    %2070 = vmatprep.subr.mxu0 0.0
    %2071 = vmatpush1.msra.mxu0 0.0
    %2072 = vmatprep.subr.mxu0 0.0
    %2073 = vmatpush1.msra.mxu0 0.0
    %2074 = vmatprep.subr.mxu0 0.0
    %2075 = vmatpush1.msra.mxu0 0.0
    %2076 = vmatprep.subr.mxu0 0.0
    %2077 = vmatpush1.msra.mxu0 0.0
    %2078 = vmatprep.subr.mxu0 0.0
    %2079 = vmatpush1.msra.mxu0 0.0
    %2080 = vmatprep.subr.mxu0 0.0
    %2081 = vmatpush1.msra.mxu0 0.0
    %2082 = vmatprep.subr.mxu0 0.0
    %2083 = vmatpush1.msra.mxu0 0.0
    %2084 = vmatprep.subr.mxu0 0.0
    %2085 = vmatpush1.msra.mxu0 0.0
    %2086 = vmatprep.subr.mxu0 0.0
    %2087 = vmatpush1.msra.mxu0 0.0
    %2088 = vmatprep.subr.mxu0 0.0
    %2089 = vmatpush1.msra.mxu0 0.0
    %2090 = vmatprep.subr.mxu0 0.0
    %2091 = vmatpush1.msra.mxu0 0.0
    %2092 = vmatprep.subr.mxu0 0.0
    %2093 = vmatpush1.msra.mxu0 0.0
    %2094 = vmatprep.subr.mxu0 0.0
    %2095 = vmatpush1.msra.mxu0 0.0
    %2096 = vmatprep.subr.mxu0 0.0
    %2097 = vmatpush1.msra.mxu0 0.0
    %2098 = vmatprep.subr.mxu0 0.0
    %2099 = vmatpush1.msra.mxu0 0.0
    %2100 = vmatprep.subr.mxu0 0.0
    %2101 = vmatpush1.msra.mxu0 0.0
    %2102 = vmatprep.subr.mxu0 0.0
    %2103 = vmatpush1.msra.mxu0 0.0
    %2104 = vmatprep.subr.mxu0 0.0
    %2105 = vmatpush1.msra.mxu0 0.0
    %2106 = vmatprep.subr.mxu0 0.0
    %2107 = vmatpush1.msra.mxu0 0.0
    %2108 = vmatprep.subr.mxu0 0.0
    %2109 = vmatpush1.msra.mxu0 0.0
    %2110 = vmatprep.mubr.f32.mxu0 0.0
    %2111 = vmatmul.mubr.f32.gmra.mrb[0].mxu0 %v1973
    %v2112 = vpop.f32.mrb[0].mxu0
    %v2113 = vadd.f32 0.0, %v2112
    %v2114 = vpop.f32.mrb[0].mxu0
    %v2115 = vadd.f32 0.0, %v2114
    %2116 = vdwg.mxu0
    %v2117 = vld [vmem:[#allocation8] sm:$0xff]
    %v2118 = vld [vmem:[#allocation8 + $0x8] sm:$0xff]
    %v2119 = vld [vmem:[#allocation8 + $0x10] sm:$0xff]
    %v2120 = vld [vmem:[#allocation8 + $0x18] sm:$0xff]
    %v2121 = vld [vmem:[#allocation8 + $0x20] sm:$0xff]
    %v2122 = vld [vmem:[#allocation8 + $0x28] sm:$0xff]
    %v2123 = vld [vmem:[#allocation8 + $0x30] sm:$0xff]
    %v2124 = vld [vmem:[#allocation8 + $0x38] sm:$0xff]
    %v2125 = vld [vmem:[#allocation8 + $0x40] sm:$0xff]
    %v2126 = vld [vmem:[#allocation8 + $0x48] sm:$0xff]
    %v2127 = vld [vmem:[#allocation8 + $0x50] sm:$0xff]
    %v2128 = vld [vmem:[#allocation8 + $0x58] sm:$0xff]
    %v2129 = vld [vmem:[#allocation8 + $0x60] sm:$0xff]
    %v2130 = vld [vmem:[#allocation8 + $0x68] sm:$0xff]
    %v2131 = vld [vmem:[#allocation8 + $0x70] sm:$0xff]
    %v2132 = vld [vmem:[#allocation8 + $0x78] sm:$0xff]
    %v2133 = vld [vmem:[#allocation8 + $0x80] sm:$0xff]
    %v2134 = vld [vmem:[#allocation8 + $0x88] sm:$0xff]
    %v2135 = vld [vmem:[#allocation8 + $0x90] sm:$0xff]
    %v2136 = vld [vmem:[#allocation8 + $0x98] sm:$0xff]
    %v2137 = vld [vmem:[#allocation8 + $0xa0] sm:$0xff]
    %v2138 = vld [vmem:[#allocation8 + $0xa8] sm:$0xff]
    %v2139 = vld [vmem:[#allocation8 + $0xb0] sm:$0xff]
    %v2140 = vld [vmem:[#allocation8 + $0xb8] sm:$0xff]
    %v2141 = vld [vmem:[#allocation8 + $0xc0] sm:$0xff]
    %v2142 = vld [vmem:[#allocation8 + $0xc8] sm:$0xff]
    %v2143 = vld [vmem:[#allocation8 + $0xd0] sm:$0xff]
    %v2144 = vld [vmem:[#allocation8 + $0xd8] sm:$0xff]
    %v2145 = vld [vmem:[#allocation8 + $0xe0] sm:$0xff]
    %v2146 = vld [vmem:[#allocation8 + $0xe8] sm:$0xff]
    %v2147 = vld [vmem:[#allocation8 + $0xf0] sm:$0xff]
    %v2148 = vld [vmem:[#allocation8 + $0xf8] sm:$0xff]
    %v2150 = vsel %vm156, %v1890, 0
    %2152 = vmatprep.subr.mxu0 %v2118
    %2153 = vmatpush1.msra.mxu0 %v2117
    %2154 = vmatprep.subr.mxu0 %v2122
    %2155 = vmatpush1.msra.mxu0 %v2121
    %2156 = vmatprep.subr.mxu0 %v2126
    %2157 = vmatpush1.msra.mxu0 %v2125
    %2158 = vmatprep.subr.mxu0 %v2130
    %2159 = vmatpush1.msra.mxu0 %v2129
    %2160 = vmatprep.subr.mxu0 %v2134
    %2161 = vmatpush1.msra.mxu0 %v2133
    %2162 = vmatprep.subr.mxu0 %v2138
    %2163 = vmatpush1.msra.mxu0 %v2137
    %2164 = vmatprep.subr.mxu0 %v2142
    %2165 = vmatpush1.msra.mxu0 %v2141
    %2166 = vmatprep.subr.mxu0 %v2146
    %2167 = vmatpush1.msra.mxu0 %v2145
    %2168 = vmatprep.subr.mxu0 0.0
    %2169 = vmatpush1.msra.mxu0 0.0
    %2170 = vmatprep.subr.mxu0 0.0
    %2171 = vmatpush1.msra.mxu0 0.0
    %2172 = vmatprep.subr.mxu0 0.0
    %2173 = vmatpush1.msra.mxu0 0.0
    %2174 = vmatprep.subr.mxu0 0.0
    %2175 = vmatpush1.msra.mxu0 0.0
    %2176 = vmatprep.subr.mxu0 0.0
    %2177 = vmatpush1.msra.mxu0 0.0
    %2178 = vmatprep.subr.mxu0 0.0
    %2179 = vmatpush1.msra.mxu0 0.0
    %2180 = vmatprep.subr.mxu0 0.0
    %2181 = vmatpush1.msra.mxu0 0.0
    %2182 = vmatprep.subr.mxu0 0.0
    %2183 = vmatpush1.msra.mxu0 0.0
    %2184 = vmatprep.subr.mxu0 0.0
    %2185 = vmatpush1.msra.mxu0 0.0
    %2186 = vmatprep.subr.mxu0 0.0
    %2187 = vmatpush1.msra.mxu0 0.0
    %2188 = vmatprep.subr.mxu0 0.0
    %2189 = vmatpush1.msra.mxu0 0.0
    %2190 = vmatprep.subr.mxu0 0.0
    %2191 = vmatpush1.msra.mxu0 0.0
    %2192 = vmatprep.subr.mxu0 0.0
    %2193 = vmatpush1.msra.mxu0 0.0
    %2194 = vmatprep.subr.mxu0 0.0
    %2195 = vmatpush1.msra.mxu0 0.0
    %2196 = vmatprep.subr.mxu0 0.0
    %2197 = vmatpush1.msra.mxu0 0.0
    %2198 = vmatprep.subr.mxu0 0.0
    %2199 = vmatpush1.msra.mxu0 0.0
    %2200 = vmatprep.subr.mxu0 0.0
    %2201 = vmatpush1.msra.mxu0 0.0
    %2202 = vmatprep.subr.mxu0 0.0
    %2203 = vmatpush1.msra.mxu0 0.0
    %2204 = vmatprep.subr.mxu0 0.0
    %2205 = vmatpush1.msra.mxu0 0.0
    %2206 = vmatprep.subr.mxu0 0.0
    %2207 = vmatpush1.msra.mxu0 0.0
    %2208 = vmatprep.subr.mxu0 0.0
    %2209 = vmatpush1.msra.mxu0 0.0
    %2210 = vmatprep.subr.mxu0 0.0
    %2211 = vmatpush1.msra.mxu0 0.0
    %2212 = vmatprep.subr.mxu0 0.0
    %2213 = vmatpush1.msra.mxu0 0.0
    %2214 = vmatprep.subr.mxu0 0.0
    %2215 = vmatpush1.msra.mxu0 0.0
    %2216 = vmatprep.mubr.f32.mxu0 0.0
    %2217 = vmatmul.mubr.f32.gmra.mrb[0].mxu0 %v2150
    %v2218 = vpop.f32.mrb[0].mxu0
    %v2219 = vadd.f32 0.0, %v2218
    %v2220 = vpop.f32.mrb[0].mxu0
    %v2221 = vadd.f32 0.0, %v2220
    %2222 = vdwg.mxu0
    %2223 = vmatprep.subr.mxu0 %v2120
    %2224 = vmatpush1.msra.mxu0 %v2119
    %2225 = vmatprep.subr.mxu0 %v2124
    %2226 = vmatpush1.msra.mxu0 %v2123
    %2227 = vmatprep.subr.mxu0 %v2128
    %2228 = vmatpush1.msra.mxu0 %v2127
    %2229 = vmatprep.subr.mxu0 %v2132
    %2230 = vmatpush1.msra.mxu0 %v2131
    %2231 = vmatprep.subr.mxu0 %v2136
    %2232 = vmatpush1.msra.mxu0 %v2135
    %2233 = vmatprep.subr.mxu0 %v2140
    %2234 = vmatpush1.msra.mxu0 %v2139
    %2235 = vmatprep.subr.mxu0 %v2144
    %2236 = vmatpush1.msra.mxu0 %v2143
    %2237 = vmatprep.subr.mxu0 %v2148
    %2238 = vmatpush1.msra.mxu0 %v2147
    %2239 = vmatprep.subr.mxu0 0.0
    %2240 = vmatpush1.msra.mxu0 0.0
    %2241 = vmatprep.subr.mxu0 0.0
    %2242 = vmatpush1.msra.mxu0 0.0
    %2243 = vmatprep.subr.mxu0 0.0
    %2244 = vmatpush1.msra.mxu0 0.0
    %2245 = vmatprep.subr.mxu0 0.0
    %2246 = vmatpush1.msra.mxu0 0.0
    %2247 = vmatprep.subr.mxu0 0.0
    %2248 = vmatpush1.msra.mxu0 0.0
    %2249 = vmatprep.subr.mxu0 0.0
    %2250 = vmatpush1.msra.mxu0 0.0
    %2251 = vmatprep.subr.mxu0 0.0
    %2252 = vmatpush1.msra.mxu0 0.0
    %2253 = vmatprep.subr.mxu0 0.0
    %2254 = vmatpush1.msra.mxu0 0.0
    %2255 = vmatprep.subr.mxu0 0.0
    %2256 = vmatpush1.msra.mxu0 0.0
    %2257 = vmatprep.subr.mxu0 0.0
    %2258 = vmatpush1.msra.mxu0 0.0
    %2259 = vmatprep.subr.mxu0 0.0
    %2260 = vmatpush1.msra.mxu0 0.0
    %2261 = vmatprep.subr.mxu0 0.0
    %2262 = vmatpush1.msra.mxu0 0.0
    %2263 = vmatprep.subr.mxu0 0.0
    %2264 = vmatpush1.msra.mxu0 0.0
    %2265 = vmatprep.subr.mxu0 0.0
    %2266 = vmatpush1.msra.mxu0 0.0
    %2267 = vmatprep.subr.mxu0 0.0
    %2268 = vmatpush1.msra.mxu0 0.0
    %2269 = vmatprep.subr.mxu0 0.0
    %2270 = vmatpush1.msra.mxu0 0.0
    %2271 = vmatprep.subr.mxu0 0.0
    %2272 = vmatpush1.msra.mxu0 0.0
    %2273 = vmatprep.subr.mxu0 0.0
    %2274 = vmatpush1.msra.mxu0 0.0
    %2275 = vmatprep.subr.mxu0 0.0
    %2276 = vmatpush1.msra.mxu0 0.0
    %2277 = vmatprep.subr.mxu0 0.0
    %2278 = vmatpush1.msra.mxu0 0.0
    %2279 = vmatprep.subr.mxu0 0.0
    %2280 = vmatpush1.msra.mxu0 0.0
    %2281 = vmatprep.subr.mxu0 0.0
    %2282 = vmatpush1.msra.mxu0 0.0
    %2283 = vmatprep.subr.mxu0 0.0
    %2284 = vmatpush1.msra.mxu0 0.0
    %2285 = vmatprep.subr.mxu0 0.0
    %2286 = vmatpush1.msra.mxu0 0.0
    %2287 = vmatprep.mubr.f32.mxu0 0.0
    %2288 = vmatmul.mubr.f32.gmra.mrb[0].mxu0 %v2150
    %v2289 = vpop.f32.mrb[0].mxu0
    %v2290 = vadd.f32 0.0, %v2289
    %v2291 = vpop.f32.mrb[0].mxu0
    %v2292 = vadd.f32 0.0, %v2291
    %2293 = vdwg.mxu0
    %v2294 = vld [vmem:[#allocation10] sm:$0xff]
    %v2295 = vld [vmem:[#allocation10 + $0x8] sm:$0xff]
    %v2296 = vld [vmem:[#allocation10 + $0x10] sm:$0xff]
    %v2297 = vld [vmem:[#allocation10 + $0x18] sm:$0xff]
    %v2298 = vld [vmem:[#allocation10 + $0x20] sm:$0xff]
    %v2299 = vld [vmem:[#allocation10 + $0x28] sm:$0xff]
    %v2300 = vld [vmem:[#allocation10 + $0x30] sm:$0xff]
    %v2301 = vld [vmem:[#allocation10 + $0x38] sm:$0xff]
    %v2302 = vld [vmem:[#allocation10 + $0x40] sm:$0xff]
    %v2303 = vld [vmem:[#allocation10 + $0x48] sm:$0xff]
    %v2304 = vld [vmem:[#allocation10 + $0x50] sm:$0xff]
    %v2305 = vld [vmem:[#allocation10 + $0x58] sm:$0xff]
    %v2306 = vld [vmem:[#allocation10 + $0x60] sm:$0xff]
    %v2307 = vld [vmem:[#allocation10 + $0x68] sm:$0xff]
    %v2308 = vld [vmem:[#allocation10 + $0x70] sm:$0xff]
    %v2309 = vld [vmem:[#allocation10 + $0x78] sm:$0xff]
    %v2311 = vsel %vm156, %v1859, 0
    %2313 = vmatprep.subr.mxu0 %v2295
    %2314 = vmatpush1.msra.mxu0 %v2294
    %2315 = vmatprep.subr.mxu0 %v2297
    %2316 = vmatpush1.msra.mxu0 %v2296
    %2317 = vmatprep.subr.mxu0 %v2299
    %2318 = vmatpush1.msra.mxu0 %v2298
    %2319 = vmatprep.subr.mxu0 %v2301
    %2320 = vmatpush1.msra.mxu0 %v2300
    %2321 = vmatprep.subr.mxu0 %v2303
    %2322 = vmatpush1.msra.mxu0 %v2302
    %2323 = vmatprep.subr.mxu0 %v2305
    %2324 = vmatpush1.msra.mxu0 %v2304
    %2325 = vmatprep.subr.mxu0 %v2307
    %2326 = vmatpush1.msra.mxu0 %v2306
    %2327 = vmatprep.subr.mxu0 %v2309
    %2328 = vmatpush1.msra.mxu0 %v2308
    %2329 = vmatprep.subr.mxu0 0.0
    %2330 = vmatpush1.msra.mxu0 0.0
    %2331 = vmatprep.subr.mxu0 0.0
    %2332 = vmatpush1.msra.mxu0 0.0
    %2333 = vmatprep.subr.mxu0 0.0
    %2334 = vmatpush1.msra.mxu0 0.0
    %2335 = vmatprep.subr.mxu0 0.0
    %2336 = vmatpush1.msra.mxu0 0.0
    %2337 = vmatprep.subr.mxu0 0.0
    %2338 = vmatpush1.msra.mxu0 0.0
    %2339 = vmatprep.subr.mxu0 0.0
    %2340 = vmatpush1.msra.mxu0 0.0
    %2341 = vmatprep.subr.mxu0 0.0
    %2342 = vmatpush1.msra.mxu0 0.0
    %2343 = vmatprep.subr.mxu0 0.0
    %2344 = vmatpush1.msra.mxu0 0.0
    %2345 = vmatprep.subr.mxu0 0.0
    %2346 = vmatpush1.msra.mxu0 0.0
    %2347 = vmatprep.subr.mxu0 0.0
    %2348 = vmatpush1.msra.mxu0 0.0
    %2349 = vmatprep.subr.mxu0 0.0
    %2350 = vmatpush1.msra.mxu0 0.0
    %2351 = vmatprep.subr.mxu0 0.0
    %2352 = vmatpush1.msra.mxu0 0.0
    %2353 = vmatprep.subr.mxu0 0.0
    %2354 = vmatpush1.msra.mxu0 0.0
    %2355 = vmatprep.subr.mxu0 0.0
    %2356 = vmatpush1.msra.mxu0 0.0
    %2357 = vmatprep.subr.mxu0 0.0
    %2358 = vmatpush1.msra.mxu0 0.0
    %2359 = vmatprep.subr.mxu0 0.0
    %2360 = vmatpush1.msra.mxu0 0.0
    %2361 = vmatprep.subr.mxu0 0.0
    %2362 = vmatpush1.msra.mxu0 0.0
    %2363 = vmatprep.subr.mxu0 0.0
    %2364 = vmatpush1.msra.mxu0 0.0
    %2365 = vmatprep.subr.mxu0 0.0
    %2366 = vmatpush1.msra.mxu0 0.0
    %2367 = vmatprep.subr.mxu0 0.0
    %2368 = vmatpush1.msra.mxu0 0.0
    %2369 = vmatprep.subr.mxu0 0.0
    %2370 = vmatpush1.msra.mxu0 0.0
    %2371 = vmatprep.subr.mxu0 0.0
    %2372 = vmatpush1.msra.mxu0 0.0
    %2373 = vmatprep.subr.mxu0 0.0
    %2374 = vmatpush1.msra.mxu0 0.0
    %2375 = vmatprep.subr.mxu0 0.0
    %2376 = vmatpush1.msra.mxu0 0.0
    %2377 = vmatprep.mubr.f32.mxu0 0.0
    %2378 = vmatmul.mubr.f32.gmra.mrb[0].mxu0 %v2311
    %v2379 = vpop.f32.mrb[0].mxu0
    %v2380 = vadd.f32 0.0, %v2379
    %v2381 = vpop.f32.mrb[0].mxu0
    %v2382 = vadd.f32 0.0, %v2381
    %2383 = vdwg.mxu0
    %v2384 = vadd.f32 %v2290, %v716
    %v2385 = vadd.f32 %v2292, %v720
    %v2386 = vadd.f32 %v2384, %v2380
    %v2387 = vadd.f32 %v2385, %v2382
    %v2388 = vmul.f32 %v2386, 0.5
    %v2389 = vmul.f32 %v2387, 0.5
    %v2390 = vtanh.pop %v2388
    %v2391 = vtanh.pop %v2389
    %v2392 = vmul.f32 %v2390, 0.5
    %v2393 = vmul.f32 %v2391, 0.5
    %v2394 = vadd.f32 %v2392, 0.5
    %v2395 = vadd.f32 %v2393, 0.5
    %v2396 = vtanh.pop %v2387
    %v2397 = vmul.f32 %v2394, %v1853
    %2399 = vrot.lane.b32.xlu0 %v2396, 64
    %v2400 = vpop.permute.xlu0 %2399
    %v2402 = vmul.f32 %v2394, %v2400
    %2404 = vrot.lane.b32.xlu0 %v2402, 64
    %v2405 = vpop.permute.xlu0 %2404
    %v2407 = vadd.f32 %v2397, %v2405
    %v2408 = vtanh.pop %v2407
    %2410 = vrot.lane.b32.xlu0 %v2408, 64
    %v2411 = vpop.permute.xlu0 %2410
    %v2413 = vmul.f32 %v2395, %v2411
    %2414 = vst.msk [vmem:[#allocation2 + $0x3] sm:$0x1] %vm751, %v2413
    %v2415 = vadd.f32 %v2113, %v306
    %v2416 = vadd.f32 %v2115, %v310
    %v2417 = vadd.f32 %v2415, %v2219
    %v2418 = vadd.f32 %v2416, %v2221
    %v2419 = vmul.f32 %v2417, 0.5
    %v2420 = vmul.f32 %v2418, 0.5
    %v2421 = vtanh.pop %v2419
    %v2422 = vtanh.pop %v2420
    %v2423 = vmul.f32 %v2421, 0.5
    %v2424 = vmul.f32 %v2422, 0.5
    %v2425 = vadd.f32 %v2423, 0.5
    %v2426 = vadd.f32 %v2424, 0.5
    %v2427 = vtanh.pop %v2418
    %v2428 = vmul.f32 %v2425, %v1884
    %2430 = vrot.lane.b32.xlu0 %v2427, 64
    %v2431 = vpop.permute.xlu0 %2430
    %v2433 = vmul.f32 %v2425, %v2431
    %2435 = vrot.lane.b32.xlu0 %v2433, 64
    %v2436 = vpop.permute.xlu0 %2435
    %v2438 = vadd.f32 %v2428, %v2436
    %v2439 = vtanh.pop %v2438
    %2441 = vrot.lane.b32.xlu0 %v2439, 64
    %v2442 = vpop.permute.xlu0 %2441
    %v2444 = vmul.f32 %v2426, %v2442
    %s2445 = sld [smem:[#allocation3 + $0x5]]
    %v2446 = vstv %s2445
    %v2447 = vmul.f32 %v2446, %v90
    %v2448 = vadd.f32 %v2447, %v91
    %v2451 = vcombine.low %v2042, %v2044
    %v2453 = vunpack.c.l.s4 1966171168
    %v2454 = vunpack.c.0.s8 %v2453
    %v2455 = vlaneseq
    %v2456 = vshrl.u32 %v2455, 7
    %v2457 = vsub.s32 %v2454, %v2456
    %v2458 = vrot.slane %v2451, %v2457
    %v2460 = vunpack.c.l.s4 1966171168
    %v2461 = vunpack.c.0.s8 %v2460
    %v2462 = vlaneseq
    %v2463 = vshrl.u32 %v2462, 7
    %v2464 = vsub.s32 %v2461, %v2463
    %v2465 = vrot.slane %v2458, %v2464
    %v2467 = vadd.f32 %v2448, %v2465
    %v2468 = vmul.f32 %v2467, 0.5
    %v2469 = vtanh.pop %v2468
    %v2470 = vmul.f32 %v2469, 0.5
    %v2471 = vadd.f32 %v2470, 0.5
    %2473 = vrot.lane.b32.xlu0 %v2467, 64
    %v2474 = vpop.permute.xlu0 %2473
    %v2475 = vrot.slane %v2474, 1
    %v2477 = vtanh.pop %v2475
    %v2478 = vmul.f32 %v2471, %v1930
    %v2479 = vmul.f32 %v2471, %v2477
    %2481 = vrot.lane.b32.xlu0 %v2479, 64
    %v2482 = vpop.permute.xlu0 %2481
    %v2484 = vadd.f32 %v2478, %v2482
    %v2485 = vtanh.pop %v2484
    %v2487 = vrot.slane %v2471, 1
    %2490 = vrot.lane.b32.xlu0 %v2485, 64
    %v2491 = vpop.permute.xlu0 %2490
    %v2493 = vmul.f32 %v2487, %v2491
    %v2494 = vld [vmem:[#allocation7] sm:$0xff]
    %v2495 = vld [vmem:[#allocation7 + $0x8] sm:$0xff]
    %v2496 = vld [vmem:[#allocation7 + $0x10] sm:$0xff]
    %v2497 = vld [vmem:[#allocation7 + $0x18] sm:$0xff]
    %v2498 = vld [vmem:[#allocation7 + $0x20] sm:$0xff]
    %v2499 = vld [vmem:[#allocation7 + $0x28] sm:$0xff]
    %v2500 = vld [vmem:[#allocation7 + $0x30] sm:$0xff]
    %v2501 = vld [vmem:[#allocation7 + $0x38] sm:$0xff]
    %v2502 = vld [vmem:[#allocation7 + $0x40] sm:$0xff]
    %v2503 = vld [vmem:[#allocation7 + $0x48] sm:$0xff]
    %v2504 = vld [vmem:[#allocation7 + $0x50] sm:$0xff]
    %v2505 = vld [vmem:[#allocation7 + $0x58] sm:$0xff]
    %v2506 = vld [vmem:[#allocation7 + $0x60] sm:$0xff]
    %v2507 = vld [vmem:[#allocation7 + $0x68] sm:$0xff]
    %v2508 = vld [vmem:[#allocation7 + $0x70] sm:$0xff]
    %v2509 = vld [vmem:[#allocation7 + $0x78] sm:$0xff]
    %v2510 = vld [vmem:[#allocation7 + $0x80] sm:$0xff]
    %v2511 = vld [vmem:[#allocation7 + $0x88] sm:$0xff]
    %v2512 = vld [vmem:[#allocation7 + $0x90] sm:$0xff]
    %v2513 = vld [vmem:[#allocation7 + $0x98] sm:$0xff]
    %v2514 = vld [vmem:[#allocation7 + $0xa0] sm:$0xff]
    %v2515 = vld [vmem:[#allocation7 + $0xa8] sm:$0xff]
    %v2516 = vld [vmem:[#allocation7 + $0xb0] sm:$0xff]
    %v2517 = vld [vmem:[#allocation7 + $0xb8] sm:$0xff]
    %v2518 = vld [vmem:[#allocation7 + $0xc0] sm:$0xff]
    %v2519 = vld [vmem:[#allocation7 + $0xc8] sm:$0xff]
    %v2520 = vld [vmem:[#allocation7 + $0xd0] sm:$0xff]
    %v2521 = vld [vmem:[#allocation7 + $0xd8] sm:$0xff]
    %v2522 = vld [vmem:[#allocation7 + $0xe0] sm:$0xff]
    %v2523 = vld [vmem:[#allocation7 + $0xe8] sm:$0xff]
    %v2524 = vld [vmem:[#allocation7 + $0xf0] sm:$0xff]
    %v2525 = vld [vmem:[#allocation7 + $0xf8] sm:$0xff]
    %v2527 = vsel %vm156, %v2493, 0
    %2529 = vmatprep.subr.mxu0 %v2495
    %2530 = vmatpush1.msra.mxu0 %v2494
    %2531 = vmatprep.subr.mxu0 %v2499
    %2532 = vmatpush1.msra.mxu0 %v2498
    %2533 = vmatprep.subr.mxu0 %v2503
    %2534 = vmatpush1.msra.mxu0 %v2502
    %2535 = vmatprep.subr.mxu0 %v2507
    %2536 = vmatpush1.msra.mxu0 %v2506
    %2537 = vmatprep.subr.mxu0 %v2511
    %2538 = vmatpush1.msra.mxu0 %v2510
    %2539 = vmatprep.subr.mxu0 %v2515
    %2540 = vmatpush1.msra.mxu0 %v2514
    %2541 = vmatprep.subr.mxu0 %v2519
    %2542 = vmatpush1.msra.mxu0 %v2518
    %2543 = vmatprep.subr.mxu0 %v2523
    %2544 = vmatpush1.msra.mxu0 %v2522
    %2545 = vmatprep.subr.mxu0 0.0
    %2546 = vmatpush1.msra.mxu0 0.0
    %2547 = vmatprep.subr.mxu0 0.0
    %2548 = vmatpush1.msra.mxu0 0.0
    %2549 = vmatprep.subr.mxu0 0.0
    %2550 = vmatpush1.msra.mxu0 0.0
    %2551 = vmatprep.subr.mxu0 0.0
    %2552 = vmatpush1.msra.mxu0 0.0
    %2553 = vmatprep.subr.mxu0 0.0
    %2554 = vmatpush1.msra.mxu0 0.0
    %2555 = vmatprep.subr.mxu0 0.0
    %2556 = vmatpush1.msra.mxu0 0.0
    %2557 = vmatprep.subr.mxu0 0.0
    %2558 = vmatpush1.msra.mxu0 0.0
    %2559 = vmatprep.subr.mxu0 0.0
    %2560 = vmatpush1.msra.mxu0 0.0
    %2561 = vmatprep.subr.mxu0 0.0
    %2562 = vmatpush1.msra.mxu0 0.0
    %2563 = vmatprep.subr.mxu0 0.0
    %2564 = vmatpush1.msra.mxu0 0.0
    %2565 = vmatprep.subr.mxu0 0.0
    %2566 = vmatpush1.msra.mxu0 0.0
    %2567 = vmatprep.subr.mxu0 0.0
    %2568 = vmatpush1.msra.mxu0 0.0
    %2569 = vmatprep.subr.mxu0 0.0
    %2570 = vmatpush1.msra.mxu0 0.0
    %2571 = vmatprep.subr.mxu0 0.0
    %2572 = vmatpush1.msra.mxu0 0.0
    %2573 = vmatprep.subr.mxu0 0.0
    %2574 = vmatpush1.msra.mxu0 0.0
    %2575 = vmatprep.subr.mxu0 0.0
    %2576 = vmatpush1.msra.mxu0 0.0
    %2577 = vmatprep.subr.mxu0 0.0
    %2578 = vmatpush1.msra.mxu0 0.0
    %2579 = vmatprep.subr.mxu0 0.0
    %2580 = vmatpush1.msra.mxu0 0.0
    %2581 = vmatprep.subr.mxu0 0.0
    %2582 = vmatpush1.msra.mxu0 0.0
    %2583 = vmatprep.subr.mxu0 0.0
    %2584 = vmatpush1.msra.mxu0 0.0
    %2585 = vmatprep.subr.mxu0 0.0
    %2586 = vmatpush1.msra.mxu0 0.0
    %2587 = vmatprep.subr.mxu0 0.0
    %2588 = vmatpush1.msra.mxu0 0.0
    %2589 = vmatprep.subr.mxu0 0.0
    %2590 = vmatpush1.msra.mxu0 0.0
    %2591 = vmatprep.subr.mxu0 0.0
    %2592 = vmatpush1.msra.mxu0 0.0
    %2593 = vmatprep.mubr.f32.mxu0 0.0
    %2594 = vmatmul.mubr.f32.gmra.mrb[0].mxu0 %v2527
    %v2595 = vpop.f32.mrb[0].mxu0
    %v2596 = vadd.f32 0.0, %v2595
    %v2597 = vpop.f32.mrb[0].mxu0
    %v2598 = vadd.f32 0.0, %v2597
    %2599 = vdwg.mxu0
    %2600 = vmatprep.subr.mxu0 %v2497
    %2601 = vmatpush1.msra.mxu0 %v2496
    %2602 = vmatprep.subr.mxu0 %v2501
    %2603 = vmatpush1.msra.mxu0 %v2500
    %2604 = vmatprep.subr.mxu0 %v2505
    %2605 = vmatpush1.msra.mxu0 %v2504
    %2606 = vmatprep.subr.mxu0 %v2509
    %2607 = vmatpush1.msra.mxu0 %v2508
    %2608 = vmatprep.subr.mxu0 %v2513
    %2609 = vmatpush1.msra.mxu0 %v2512
    %2610 = vmatprep.subr.mxu0 %v2517
    %2611 = vmatpush1.msra.mxu0 %v2516
    %2612 = vmatprep.subr.mxu0 %v2521
    %2613 = vmatpush1.msra.mxu0 %v2520
    %2614 = vmatprep.subr.mxu0 %v2525
    %2615 = vmatpush1.msra.mxu0 %v2524
    %2616 = vmatprep.subr.mxu0 0.0
    %2617 = vmatpush1.msra.mxu0 0.0
    %2618 = vmatprep.subr.mxu0 0.0
    %2619 = vmatpush1.msra.mxu0 0.0
    %2620 = vmatprep.subr.mxu0 0.0
    %2621 = vmatpush1.msra.mxu0 0.0
    %2622 = vmatprep.subr.mxu0 0.0
    %2623 = vmatpush1.msra.mxu0 0.0
    %2624 = vmatprep.subr.mxu0 0.0
    %2625 = vmatpush1.msra.mxu0 0.0
    %2626 = vmatprep.subr.mxu0 0.0
    %2627 = vmatpush1.msra.mxu0 0.0
    %2628 = vmatprep.subr.mxu0 0.0
    %2629 = vmatpush1.msra.mxu0 0.0
    %2630 = vmatprep.subr.mxu0 0.0
    %2631 = vmatpush1.msra.mxu0 0.0
    %2632 = vmatprep.subr.mxu0 0.0
    %2633 = vmatpush1.msra.mxu0 0.0
    %2634 = vmatprep.subr.mxu0 0.0
    %2635 = vmatpush1.msra.mxu0 0.0
    %2636 = vmatprep.subr.mxu0 0.0
    %2637 = vmatpush1.msra.mxu0 0.0
    %2638 = vmatprep.subr.mxu0 0.0
    %2639 = vmatpush1.msra.mxu0 0.0
    %2640 = vmatprep.subr.mxu0 0.0
    %2641 = vmatpush1.msra.mxu0 0.0
    %2642 = vmatprep.subr.mxu0 0.0
    %2643 = vmatpush1.msra.mxu0 0.0
    %2644 = vmatprep.subr.mxu0 0.0
    %2645 = vmatpush1.msra.mxu0 0.0
    %2646 = vmatprep.subr.mxu0 0.0
    %2647 = vmatpush1.msra.mxu0 0.0
    %2648 = vmatprep.subr.mxu0 0.0
    %2649 = vmatpush1.msra.mxu0 0.0
    %2650 = vmatprep.subr.mxu0 0.0
    %2651 = vmatpush1.msra.mxu0 0.0
    %2652 = vmatprep.subr.mxu0 0.0
    %2653 = vmatpush1.msra.mxu0 0.0
    %2654 = vmatprep.subr.mxu0 0.0
    %2655 = vmatpush1.msra.mxu0 0.0
    %2656 = vmatprep.subr.mxu0 0.0
    %2657 = vmatpush1.msra.mxu0 0.0
    %2658 = vmatprep.subr.mxu0 0.0
    %2659 = vmatpush1.msra.mxu0 0.0
    %2660 = vmatprep.subr.mxu0 0.0
    %2661 = vmatpush1.msra.mxu0 0.0
    %2662 = vmatprep.subr.mxu0 0.0
    %2663 = vmatpush1.msra.mxu0 0.0
    %2664 = vmatprep.mubr.f32.mxu0 0.0
    %2665 = vmatmul.mubr.f32.gmra.mrb[0].mxu0 %v2527
    %v2666 = vpop.f32.mrb[0].mxu0
    %v2667 = vadd.f32 0.0, %v2666
    %v2668 = vpop.f32.mrb[0].mxu0
    %v2669 = vadd.f32 0.0, %v2668
    %2670 = vdwg.mxu0
    %v2671 = vld [vmem:[#allocation8] sm:$0xff]
    %v2672 = vld [vmem:[#allocation8 + $0x8] sm:$0xff]
    %v2673 = vld [vmem:[#allocation8 + $0x10] sm:$0xff]
    %v2674 = vld [vmem:[#allocation8 + $0x18] sm:$0xff]
    %v2675 = vld [vmem:[#allocation8 + $0x20] sm:$0xff]
    %v2676 = vld [vmem:[#allocation8 + $0x28] sm:$0xff]
    %v2677 = vld [vmem:[#allocation8 + $0x30] sm:$0xff]
    %v2678 = vld [vmem:[#allocation8 + $0x38] sm:$0xff]
    %v2679 = vld [vmem:[#allocation8 + $0x40] sm:$0xff]
    %v2680 = vld [vmem:[#allocation8 + $0x48] sm:$0xff]
    %v2681 = vld [vmem:[#allocation8 + $0x50] sm:$0xff]
    %v2682 = vld [vmem:[#allocation8 + $0x58] sm:$0xff]
    %v2683 = vld [vmem:[#allocation8 + $0x60] sm:$0xff]
    %v2684 = vld [vmem:[#allocation8 + $0x68] sm:$0xff]
    %v2685 = vld [vmem:[#allocation8 + $0x70] sm:$0xff]
    %v2686 = vld [vmem:[#allocation8 + $0x78] sm:$0xff]
    %v2687 = vld [vmem:[#allocation8 + $0x80] sm:$0xff]
    %v2688 = vld [vmem:[#allocation8 + $0x88] sm:$0xff]
    %v2689 = vld [vmem:[#allocation8 + $0x90] sm:$0xff]
    %v2690 = vld [vmem:[#allocation8 + $0x98] sm:$0xff]
    %v2691 = vld [vmem:[#allocation8 + $0xa0] sm:$0xff]
    %v2692 = vld [vmem:[#allocation8 + $0xa8] sm:$0xff]
    %v2693 = vld [vmem:[#allocation8 + $0xb0] sm:$0xff]
    %v2694 = vld [vmem:[#allocation8 + $0xb8] sm:$0xff]
    %v2695 = vld [vmem:[#allocation8 + $0xc0] sm:$0xff]
    %v2696 = vld [vmem:[#allocation8 + $0xc8] sm:$0xff]
    %v2697 = vld [vmem:[#allocation8 + $0xd0] sm:$0xff]
    %v2698 = vld [vmem:[#allocation8 + $0xd8] sm:$0xff]
    %v2699 = vld [vmem:[#allocation8 + $0xe0] sm:$0xff]
    %v2700 = vld [vmem:[#allocation8 + $0xe8] sm:$0xff]
    %v2701 = vld [vmem:[#allocation8 + $0xf0] sm:$0xff]
    %v2702 = vld [vmem:[#allocation8 + $0xf8] sm:$0xff]
    %v2704 = vsel %vm156, %v2444, 0
    %2706 = vmatprep.subr.mxu0 %v2672
    %2707 = vmatpush1.msra.mxu0 %v2671
    %2708 = vmatprep.subr.mxu0 %v2676
    %2709 = vmatpush1.msra.mxu0 %v2675
    %2710 = vmatprep.subr.mxu0 %v2680
    %2711 = vmatpush1.msra.mxu0 %v2679
    %2712 = vmatprep.subr.mxu0 %v2684
    %2713 = vmatpush1.msra.mxu0 %v2683
    %2714 = vmatprep.subr.mxu0 %v2688
    %2715 = vmatpush1.msra.mxu0 %v2687
    %2716 = vmatprep.subr.mxu0 %v2692
    %2717 = vmatpush1.msra.mxu0 %v2691
    %2718 = vmatprep.subr.mxu0 %v2696
    %2719 = vmatpush1.msra.mxu0 %v2695
    %2720 = vmatprep.subr.mxu0 %v2700
    %2721 = vmatpush1.msra.mxu0 %v2699
    %2722 = vmatprep.subr.mxu0 0.0
    %2723 = vmatpush1.msra.mxu0 0.0
    %2724 = vmatprep.subr.mxu0 0.0
    %2725 = vmatpush1.msra.mxu0 0.0
    %2726 = vmatprep.subr.mxu0 0.0
    %2727 = vmatpush1.msra.mxu0 0.0
    %2728 = vmatprep.subr.mxu0 0.0
    %2729 = vmatpush1.msra.mxu0 0.0
    %2730 = vmatprep.subr.mxu0 0.0
    %2731 = vmatpush1.msra.mxu0 0.0
    %2732 = vmatprep.subr.mxu0 0.0
    %2733 = vmatpush1.msra.mxu0 0.0
    %2734 = vmatprep.subr.mxu0 0.0
    %2735 = vmatpush1.msra.mxu0 0.0
    %2736 = vmatprep.subr.mxu0 0.0
    %2737 = vmatpush1.msra.mxu0 0.0
    %2738 = vmatprep.subr.mxu0 0.0
    %2739 = vmatpush1.msra.mxu0 0.0
    %2740 = vmatprep.subr.mxu0 0.0
    %2741 = vmatpush1.msra.mxu0 0.0
    %2742 = vmatprep.subr.mxu0 0.0
    %2743 = vmatpush1.msra.mxu0 0.0
    %2744 = vmatprep.subr.mxu0 0.0
    %2745 = vmatpush1.msra.mxu0 0.0
    %2746 = vmatprep.subr.mxu0 0.0
    %2747 = vmatpush1.msra.mxu0 0.0
    %2748 = vmatprep.subr.mxu0 0.0
    %2749 = vmatpush1.msra.mxu0 0.0
    %2750 = vmatprep.subr.mxu0 0.0
    %2751 = vmatpush1.msra.mxu0 0.0
    %2752 = vmatprep.subr.mxu0 0.0
    %2753 = vmatpush1.msra.mxu0 0.0
    %2754 = vmatprep.subr.mxu0 0.0
    %2755 = vmatpush1.msra.mxu0 0.0
    %2756 = vmatprep.subr.mxu0 0.0
    %2757 = vmatpush1.msra.mxu0 0.0
    %2758 = vmatprep.subr.mxu0 0.0
    %2759 = vmatpush1.msra.mxu0 0.0
    %2760 = vmatprep.subr.mxu0 0.0
    %2761 = vmatpush1.msra.mxu0 0.0
    %2762 = vmatprep.subr.mxu0 0.0
    %2763 = vmatpush1.msra.mxu0 0.0
    %2764 = vmatprep.subr.mxu0 0.0
    %2765 = vmatpush1.msra.mxu0 0.0
    %2766 = vmatprep.subr.mxu0 0.0
    %2767 = vmatpush1.msra.mxu0 0.0
    %2768 = vmatprep.subr.mxu0 0.0
    %2769 = vmatpush1.msra.mxu0 0.0
    %2770 = vmatprep.mubr.f32.mxu0 0.0
    %2771 = vmatmul.mubr.f32.gmra.mrb[0].mxu0 %v2704
    %v2772 = vpop.f32.mrb[0].mxu0
    %v2773 = vadd.f32 0.0, %v2772
    %v2774 = vpop.f32.mrb[0].mxu0
    %v2775 = vadd.f32 0.0, %v2774
    %2776 = vdwg.mxu0
    %2777 = vmatprep.subr.mxu0 %v2674
    %2778 = vmatpush1.msra.mxu0 %v2673
    %2779 = vmatprep.subr.mxu0 %v2678
    %2780 = vmatpush1.msra.mxu0 %v2677
    %2781 = vmatprep.subr.mxu0 %v2682
    %2782 = vmatpush1.msra.mxu0 %v2681
    %2783 = vmatprep.subr.mxu0 %v2686
    %2784 = vmatpush1.msra.mxu0 %v2685
    %2785 = vmatprep.subr.mxu0 %v2690
    %2786 = vmatpush1.msra.mxu0 %v2689
    %2787 = vmatprep.subr.mxu0 %v2694
    %2788 = vmatpush1.msra.mxu0 %v2693
    %2789 = vmatprep.subr.mxu0 %v2698
    %2790 = vmatpush1.msra.mxu0 %v2697
    %2791 = vmatprep.subr.mxu0 %v2702
    %2792 = vmatpush1.msra.mxu0 %v2701
    %2793 = vmatprep.subr.mxu0 0.0
    %2794 = vmatpush1.msra.mxu0 0.0
    %2795 = vmatprep.subr.mxu0 0.0
    %2796 = vmatpush1.msra.mxu0 0.0
    %2797 = vmatprep.subr.mxu0 0.0
    %2798 = vmatpush1.msra.mxu0 0.0
    %2799 = vmatprep.subr.mxu0 0.0
    %2800 = vmatpush1.msra.mxu0 0.0
    %2801 = vmatprep.subr.mxu0 0.0
    %2802 = vmatpush1.msra.mxu0 0.0
    %2803 = vmatprep.subr.mxu0 0.0
    %2804 = vmatpush1.msra.mxu0 0.0
    %2805 = vmatprep.subr.mxu0 0.0
    %2806 = vmatpush1.msra.mxu0 0.0
    %2807 = vmatprep.subr.mxu0 0.0
    %2808 = vmatpush1.msra.mxu0 0.0
    %2809 = vmatprep.subr.mxu0 0.0
    %2810 = vmatpush1.msra.mxu0 0.0
    %2811 = vmatprep.subr.mxu0 0.0
    %2812 = vmatpush1.msra.mxu0 0.0
    %2813 = vmatprep.subr.mxu0 0.0
    %2814 = vmatpush1.msra.mxu0 0.0
    %2815 = vmatprep.subr.mxu0 0.0
    %2816 = vmatpush1.msra.mxu0 0.0
    %2817 = vmatprep.subr.mxu0 0.0
    %2818 = vmatpush1.msra.mxu0 0.0
    %2819 = vmatprep.subr.mxu0 0.0
    %2820 = vmatpush1.msra.mxu0 0.0
    %2821 = vmatprep.subr.mxu0 0.0
    %2822 = vmatpush1.msra.mxu0 0.0
    %2823 = vmatprep.subr.mxu0 0.0
    %2824 = vmatpush1.msra.mxu0 0.0
    %2825 = vmatprep.subr.mxu0 0.0
    %2826 = vmatpush1.msra.mxu0 0.0
    %2827 = vmatprep.subr.mxu0 0.0
    %2828 = vmatpush1.msra.mxu0 0.0
    %2829 = vmatprep.subr.mxu0 0.0
    %2830 = vmatpush1.msra.mxu0 0.0
    %2831 = vmatprep.subr.mxu0 0.0
    %2832 = vmatpush1.msra.mxu0 0.0
    %2833 = vmatprep.subr.mxu0 0.0
    %2834 = vmatpush1.msra.mxu0 0.0
    %2835 = vmatprep.subr.mxu0 0.0
    %2836 = vmatpush1.msra.mxu0 0.0
    %2837 = vmatprep.subr.mxu0 0.0
    %2838 = vmatpush1.msra.mxu0 0.0
    %2839 = vmatprep.subr.mxu0 0.0
    %2840 = vmatpush1.msra.mxu0 0.0
    %2841 = vmatprep.mubr.f32.mxu0 0.0
    %2842 = vmatmul.mubr.f32.gmra.mrb[0].mxu0 %v2704
    %v2843 = vpop.f32.mrb[0].mxu0
    %v2844 = vadd.f32 0.0, %v2843
    %v2845 = vpop.f32.mrb[0].mxu0
    %v2846 = vadd.f32 0.0, %v2845
    %2847 = vdwg.mxu0
    %v2848 = vld [vmem:[#allocation10] sm:$0xff]
    %v2849 = vld [vmem:[#allocation10 + $0x8] sm:$0xff]
    %v2850 = vld [vmem:[#allocation10 + $0x10] sm:$0xff]
    %v2851 = vld [vmem:[#allocation10 + $0x18] sm:$0xff]
    %v2852 = vld [vmem:[#allocation10 + $0x20] sm:$0xff]
    %v2853 = vld [vmem:[#allocation10 + $0x28] sm:$0xff]
    %v2854 = vld [vmem:[#allocation10 + $0x30] sm:$0xff]
    %v2855 = vld [vmem:[#allocation10 + $0x38] sm:$0xff]
    %v2856 = vld [vmem:[#allocation10 + $0x40] sm:$0xff]
    %v2857 = vld [vmem:[#allocation10 + $0x48] sm:$0xff]
    %v2858 = vld [vmem:[#allocation10 + $0x50] sm:$0xff]
    %v2859 = vld [vmem:[#allocation10 + $0x58] sm:$0xff]
    %v2860 = vld [vmem:[#allocation10 + $0x60] sm:$0xff]
    %v2861 = vld [vmem:[#allocation10 + $0x68] sm:$0xff]
    %v2862 = vld [vmem:[#allocation10 + $0x70] sm:$0xff]
    %v2863 = vld [vmem:[#allocation10 + $0x78] sm:$0xff]
    %v2865 = vsel %vm156, %v2413, 0
    %2867 = vmatprep.subr.mxu0 %v2849
    %2868 = vmatpush1.msra.mxu0 %v2848
    %2869 = vmatprep.subr.mxu0 %v2851
    %2870 = vmatpush1.msra.mxu0 %v2850
    %2871 = vmatprep.subr.mxu0 %v2853
    %2872 = vmatpush1.msra.mxu0 %v2852
    %2873 = vmatprep.subr.mxu0 %v2855
    %2874 = vmatpush1.msra.mxu0 %v2854
    %2875 = vmatprep.subr.mxu0 %v2857
    %2876 = vmatpush1.msra.mxu0 %v2856
    %2877 = vmatprep.subr.mxu0 %v2859
    %2878 = vmatpush1.msra.mxu0 %v2858
    %2879 = vmatprep.subr.mxu0 %v2861
    %2880 = vmatpush1.msra.mxu0 %v2860
    %2881 = vmatprep.subr.mxu0 %v2863
    %2882 = vmatpush1.msra.mxu0 %v2862
    %2883 = vmatprep.subr.mxu0 0.0
    %2884 = vmatpush1.msra.mxu0 0.0
    %2885 = vmatprep.subr.mxu0 0.0
    %2886 = vmatpush1.msra.mxu0 0.0
    %2887 = vmatprep.subr.mxu0 0.0
    %2888 = vmatpush1.msra.mxu0 0.0
    %2889 = vmatprep.subr.mxu0 0.0
    %2890 = vmatpush1.msra.mxu0 0.0
    %2891 = vmatprep.subr.mxu0 0.0
    %2892 = vmatpush1.msra.mxu0 0.0
    %2893 = vmatprep.subr.mxu0 0.0
    %2894 = vmatpush1.msra.mxu0 0.0
    %2895 = vmatprep.subr.mxu0 0.0
    %2896 = vmatpush1.msra.mxu0 0.0
    %2897 = vmatprep.subr.mxu0 0.0
    %2898 = vmatpush1.msra.mxu0 0.0
    %2899 = vmatprep.subr.mxu0 0.0
    %2900 = vmatpush1.msra.mxu0 0.0
    %2901 = vmatprep.subr.mxu0 0.0
    %2902 = vmatpush1.msra.mxu0 0.0
    %2903 = vmatprep.subr.mxu0 0.0
    %2904 = vmatpush1.msra.mxu0 0.0
    %2905 = vmatprep.subr.mxu0 0.0
    %2906 = vmatpush1.msra.mxu0 0.0
    %2907 = vmatprep.subr.mxu0 0.0
    %2908 = vmatpush1.msra.mxu0 0.0
    %2909 = vmatprep.subr.mxu0 0.0
    %2910 = vmatpush1.msra.mxu0 0.0
    %2911 = vmatprep.subr.mxu0 0.0
    %2912 = vmatpush1.msra.mxu0 0.0
    %2913 = vmatprep.subr.mxu0 0.0
    %2914 = vmatpush1.msra.mxu0 0.0
    %2915 = vmatprep.subr.mxu0 0.0
    %2916 = vmatpush1.msra.mxu0 0.0
    %2917 = vmatprep.subr.mxu0 0.0
    %2918 = vmatpush1.msra.mxu0 0.0
    %2919 = vmatprep.subr.mxu0 0.0
    %2920 = vmatpush1.msra.mxu0 0.0
    %2921 = vmatprep.subr.mxu0 0.0
    %2922 = vmatpush1.msra.mxu0 0.0
    %2923 = vmatprep.subr.mxu0 0.0
    %2924 = vmatpush1.msra.mxu0 0.0
    %2925 = vmatprep.subr.mxu0 0.0
    %2926 = vmatpush1.msra.mxu0 0.0
    %2927 = vmatprep.subr.mxu0 0.0
    %2928 = vmatpush1.msra.mxu0 0.0
    %2929 = vmatprep.subr.mxu0 0.0
    %2930 = vmatpush1.msra.mxu0 0.0
    %2931 = vmatprep.mubr.f32.mxu0 0.0
    %2932 = vmatmul.mubr.f32.gmra.mrb[0].mxu0 %v2865
    %v2933 = vpop.f32.mrb[0].mxu0
    %v2934 = vadd.f32 0.0, %v2933
    %v2935 = vpop.f32.mrb[0].mxu0
    %v2936 = vadd.f32 0.0, %v2935
    %2937 = vdwg.mxu0
    %v2938 = vadd.f32 %v2844, %v716
    %v2939 = vadd.f32 %v2846, %v720
    %v2940 = vadd.f32 %v2938, %v2934
    %v2941 = vadd.f32 %v2939, %v2936
    %v2942 = vmul.f32 %v2940, 0.5
    %v2943 = vmul.f32 %v2941, 0.5
    %v2944 = vtanh.pop %v2942
    %v2945 = vtanh.pop %v2943
    %v2946 = vmul.f32 %v2944, 0.5
    %v2947 = vmul.f32 %v2945, 0.5
    %v2948 = vadd.f32 %v2946, 0.5
    %v2949 = vadd.f32 %v2947, 0.5
    %v2950 = vtanh.pop %v2941
    %v2951 = vmul.f32 %v2948, %v2407
    %2953 = vrot.lane.b32.xlu0 %v2950, 64
    %v2954 = vpop.permute.xlu0 %2953
    %v2956 = vmul.f32 %v2948, %v2954
    %2958 = vrot.lane.b32.xlu0 %v2956, 64
    %v2959 = vpop.permute.xlu0 %2958
    %v2961 = vadd.f32 %v2951, %v2959
    %v2962 = vtanh.pop %v2961
    %2964 = vrot.lane.b32.xlu0 %v2962, 64
    %v2965 = vpop.permute.xlu0 %2964
    %v2967 = vmul.f32 %v2949, %v2965
    %2968 = vst.msk [vmem:[#allocation2 + $0x4] sm:$0x1] %vm751, %v2967
    %v2969 = vadd.f32 %v2667, %v306
    %v2970 = vadd.f32 %v2669, %v310
    %v2971 = vadd.f32 %v2969, %v2773
    %v2972 = vadd.f32 %v2970, %v2775
    %v2973 = vmul.f32 %v2971, 0.5
    %v2974 = vmul.f32 %v2972, 0.5
    %v2975 = vtanh.pop %v2973
    %v2976 = vtanh.pop %v2974
    %v2977 = vmul.f32 %v2975, 0.5
    %v2978 = vmul.f32 %v2976, 0.5
    %v2979 = vadd.f32 %v2977, 0.5
    %v2980 = vadd.f32 %v2978, 0.5
    %v2981 = vtanh.pop %v2972
    %v2982 = vmul.f32 %v2979, %v2438
    %2984 = vrot.lane.b32.xlu0 %v2981, 64
    %v2985 = vpop.permute.xlu0 %2984
    %v2987 = vmul.f32 %v2979, %v2985
    %2989 = vrot.lane.b32.xlu0 %v2987, 64
    %v2990 = vpop.permute.xlu0 %2989
    %v2992 = vadd.f32 %v2982, %v2990
    %v2993 = vtanh.pop %v2992
    %2995 = vrot.lane.b32.xlu0 %v2993, 64
    %v2996 = vpop.permute.xlu0 %2995
    %v2998 = vmul.f32 %v2980, %v2996
    %s2999 = sld [smem:[#allocation3 + $0x6]]
    %v3000 = vstv %s2999
    %v3001 = vmul.f32 %v3000, %v90
    %v3002 = vadd.f32 %v3001, %v91
    %v3005 = vcombine.low %v2596, %v2598
    %v3007 = vunpack.c.l.s4 1966171168
    %v3008 = vunpack.c.0.s8 %v3007
    %v3009 = vlaneseq
    %v3010 = vshrl.u32 %v3009, 7
    %v3011 = vsub.s32 %v3008, %v3010
    %v3012 = vrot.slane %v3005, %v3011
    %v3014 = vunpack.c.l.s4 1966171168
    %v3015 = vunpack.c.0.s8 %v3014
    %v3016 = vlaneseq
    %v3017 = vshrl.u32 %v3016, 7
    %v3018 = vsub.s32 %v3015, %v3017
    %v3019 = vrot.slane %v3012, %v3018
    %v3021 = vadd.f32 %v3002, %v3019
    %v3022 = vmul.f32 %v3021, 0.5
    %v3023 = vtanh.pop %v3022
    %v3024 = vmul.f32 %v3023, 0.5
    %v3025 = vadd.f32 %v3024, 0.5
    %3027 = vrot.lane.b32.xlu0 %v3021, 64
    %v3028 = vpop.permute.xlu0 %3027
    %v3029 = vrot.slane %v3028, 1
    %v3031 = vtanh.pop %v3029
    %v3032 = vmul.f32 %v3025, %v2484
    %v3033 = vmul.f32 %v3025, %v3031
    %3035 = vrot.lane.b32.xlu0 %v3033, 64
    %v3036 = vpop.permute.xlu0 %3035
    %v3038 = vadd.f32 %v3032, %v3036
    %v3039 = vtanh.pop %v3038
    %v3041 = vrot.slane %v3025, 1
    %3044 = vrot.lane.b32.xlu0 %v3039, 64
    %v3045 = vpop.permute.xlu0 %3044
    %v3047 = vmul.f32 %v3041, %v3045
    %v3048 = vld [vmem:[#allocation7] sm:$0xff]
    %v3049 = vld [vmem:[#allocation7 + $0x8] sm:$0xff]
    %v3050 = vld [vmem:[#allocation7 + $0x10] sm:$0xff]
    %v3051 = vld [vmem:[#allocation7 + $0x18] sm:$0xff]
    %v3052 = vld [vmem:[#allocation7 + $0x20] sm:$0xff]
    %v3053 = vld [vmem:[#allocation7 + $0x28] sm:$0xff]
    %v3054 = vld [vmem:[#allocation7 + $0x30] sm:$0xff]
    %v3055 = vld [vmem:[#allocation7 + $0x38] sm:$0xff]
    %v3056 = vld [vmem:[#allocation7 + $0x40] sm:$0xff]
    %v3057 = vld [vmem:[#allocation7 + $0x48] sm:$0xff]
    %v3058 = vld [vmem:[#allocation7 + $0x50] sm:$0xff]
    %v3059 = vld [vmem:[#allocation7 + $0x58] sm:$0xff]
    %v3060 = vld [vmem:[#allocation7 + $0x60] sm:$0xff]
    %v3061 = vld [vmem:[#allocation7 + $0x68] sm:$0xff]
    %v3062 = vld [vmem:[#allocation7 + $0x70] sm:$0xff]
    %v3063 = vld [vmem:[#allocation7 + $0x78] sm:$0xff]
    %v3064 = vld [vmem:[#allocation7 + $0x80] sm:$0xff]
    %v3065 = vld [vmem:[#allocation7 + $0x88] sm:$0xff]
    %v3066 = vld [vmem:[#allocation7 + $0x90] sm:$0xff]
    %v3067 = vld [vmem:[#allocation7 + $0x98] sm:$0xff]
    %v3068 = vld [vmem:[#allocation7 + $0xa0] sm:$0xff]
    %v3069 = vld [vmem:[#allocation7 + $0xa8] sm:$0xff]
    %v3070 = vld [vmem:[#allocation7 + $0xb0] sm:$0xff]
    %v3071 = vld [vmem:[#allocation7 + $0xb8] sm:$0xff]
    %v3072 = vld [vmem:[#allocation7 + $0xc0] sm:$0xff]
    %v3073 = vld [vmem:[#allocation7 + $0xc8] sm:$0xff]
    %v3074 = vld [vmem:[#allocation7 + $0xd0] sm:$0xff]
    %v3075 = vld [vmem:[#allocation7 + $0xd8] sm:$0xff]
    %v3076 = vld [vmem:[#allocation7 + $0xe0] sm:$0xff]
    %v3077 = vld [vmem:[#allocation7 + $0xe8] sm:$0xff]
    %v3078 = vld [vmem:[#allocation7 + $0xf0] sm:$0xff]
    %v3079 = vld [vmem:[#allocation7 + $0xf8] sm:$0xff]
    %v3081 = vsel %vm156, %v3047, 0
    %3083 = vmatprep.subr.mxu0 %v3049
    %3084 = vmatpush1.msra.mxu0 %v3048
    %3085 = vmatprep.subr.mxu0 %v3053
    %3086 = vmatpush1.msra.mxu0 %v3052
    %3087 = vmatprep.subr.mxu0 %v3057
    %3088 = vmatpush1.msra.mxu0 %v3056
    %3089 = vmatprep.subr.mxu0 %v3061
    %3090 = vmatpush1.msra.mxu0 %v3060
    %3091 = vmatprep.subr.mxu0 %v3065
    %3092 = vmatpush1.msra.mxu0 %v3064
    %3093 = vmatprep.subr.mxu0 %v3069
    %3094 = vmatpush1.msra.mxu0 %v3068
    %3095 = vmatprep.subr.mxu0 %v3073
    %3096 = vmatpush1.msra.mxu0 %v3072
    %3097 = vmatprep.subr.mxu0 %v3077
    %3098 = vmatpush1.msra.mxu0 %v3076
    %3099 = vmatprep.subr.mxu0 0.0
    %3100 = vmatpush1.msra.mxu0 0.0
    %3101 = vmatprep.subr.mxu0 0.0
    %3102 = vmatpush1.msra.mxu0 0.0
    %3103 = vmatprep.subr.mxu0 0.0
    %3104 = vmatpush1.msra.mxu0 0.0
    %3105 = vmatprep.subr.mxu0 0.0
    %3106 = vmatpush1.msra.mxu0 0.0
    %3107 = vmatprep.subr.mxu0 0.0
    %3108 = vmatpush1.msra.mxu0 0.0
    %3109 = vmatprep.subr.mxu0 0.0
    %3110 = vmatpush1.msra.mxu0 0.0
    %3111 = vmatprep.subr.mxu0 0.0
    %3112 = vmatpush1.msra.mxu0 0.0
    %3113 = vmatprep.subr.mxu0 0.0
    %3114 = vmatpush1.msra.mxu0 0.0
    %3115 = vmatprep.subr.mxu0 0.0
    %3116 = vmatpush1.msra.mxu0 0.0
    %3117 = vmatprep.subr.mxu0 0.0
    %3118 = vmatpush1.msra.mxu0 0.0
    %3119 = vmatprep.subr.mxu0 0.0
    %3120 = vmatpush1.msra.mxu0 0.0
    %3121 = vmatprep.subr.mxu0 0.0
    %3122 = vmatpush1.msra.mxu0 0.0
    %3123 = vmatprep.subr.mxu0 0.0
    %3124 = vmatpush1.msra.mxu0 0.0
    %3125 = vmatprep.subr.mxu0 0.0
    %3126 = vmatpush1.msra.mxu0 0.0
    %3127 = vmatprep.subr.mxu0 0.0
    %3128 = vmatpush1.msra.mxu0 0.0
    %3129 = vmatprep.subr.mxu0 0.0
    %3130 = vmatpush1.msra.mxu0 0.0
    %3131 = vmatprep.subr.mxu0 0.0
    %3132 = vmatpush1.msra.mxu0 0.0
    %3133 = vmatprep.subr.mxu0 0.0
    %3134 = vmatpush1.msra.mxu0 0.0
    %3135 = vmatprep.subr.mxu0 0.0
    %3136 = vmatpush1.msra.mxu0 0.0
    %3137 = vmatprep.subr.mxu0 0.0
    %3138 = vmatpush1.msra.mxu0 0.0
    %3139 = vmatprep.subr.mxu0 0.0
    %3140 = vmatpush1.msra.mxu0 0.0
    %3141 = vmatprep.subr.mxu0 0.0
    %3142 = vmatpush1.msra.mxu0 0.0
    %3143 = vmatprep.subr.mxu0 0.0
    %3144 = vmatpush1.msra.mxu0 0.0
    %3145 = vmatprep.subr.mxu0 0.0
    %3146 = vmatpush1.msra.mxu0 0.0
    %3147 = vmatprep.mubr.f32.mxu0 0.0
    %3148 = vmatmul.mubr.f32.gmra.mrb[0].mxu0 %v3081
    %v3149 = vpop.f32.mrb[0].mxu0
    %v3150 = vadd.f32 0.0, %v3149
    %v3151 = vpop.f32.mrb[0].mxu0
    %v3152 = vadd.f32 0.0, %v3151
    %3153 = vdwg.mxu0
    %3154 = vmatprep.subr.mxu0 %v3051
    %3155 = vmatpush1.msra.mxu0 %v3050
    %3156 = vmatprep.subr.mxu0 %v3055
    %3157 = vmatpush1.msra.mxu0 %v3054
    %3158 = vmatprep.subr.mxu0 %v3059
    %3159 = vmatpush1.msra.mxu0 %v3058
    %3160 = vmatprep.subr.mxu0 %v3063
    %3161 = vmatpush1.msra.mxu0 %v3062
    %3162 = vmatprep.subr.mxu0 %v3067
    %3163 = vmatpush1.msra.mxu0 %v3066
    %3164 = vmatprep.subr.mxu0 %v3071
    %3165 = vmatpush1.msra.mxu0 %v3070
    %3166 = vmatprep.subr.mxu0 %v3075
    %3167 = vmatpush1.msra.mxu0 %v3074
    %3168 = vmatprep.subr.mxu0 %v3079
    %3169 = vmatpush1.msra.mxu0 %v3078
    %3170 = vmatprep.subr.mxu0 0.0
    %3171 = vmatpush1.msra.mxu0 0.0
    %3172 = vmatprep.subr.mxu0 0.0
    %3173 = vmatpush1.msra.mxu0 0.0
    %3174 = vmatprep.subr.mxu0 0.0
    %3175 = vmatpush1.msra.mxu0 0.0
    %3176 = vmatprep.subr.mxu0 0.0
    %3177 = vmatpush1.msra.mxu0 0.0
    %3178 = vmatprep.subr.mxu0 0.0
    %3179 = vmatpush1.msra.mxu0 0.0
    %3180 = vmatprep.subr.mxu0 0.0
    %3181 = vmatpush1.msra.mxu0 0.0
    %3182 = vmatprep.subr.mxu0 0.0
    %3183 = vmatpush1.msra.mxu0 0.0
    %3184 = vmatprep.subr.mxu0 0.0
    %3185 = vmatpush1.msra.mxu0 0.0
    %3186 = vmatprep.subr.mxu0 0.0
    %3187 = vmatpush1.msra.mxu0 0.0
    %3188 = vmatprep.subr.mxu0 0.0
    %3189 = vmatpush1.msra.mxu0 0.0
    %3190 = vmatprep.subr.mxu0 0.0
    %3191 = vmatpush1.msra.mxu0 0.0
    %3192 = vmatprep.subr.mxu0 0.0
    %3193 = vmatpush1.msra.mxu0 0.0
    %3194 = vmatprep.subr.mxu0 0.0
    %3195 = vmatpush1.msra.mxu0 0.0
    %3196 = vmatprep.subr.mxu0 0.0
    %3197 = vmatpush1.msra.mxu0 0.0
    %3198 = vmatprep.subr.mxu0 0.0
    %3199 = vmatpush1.msra.mxu0 0.0
    %3200 = vmatprep.subr.mxu0 0.0
    %3201 = vmatpush1.msra.mxu0 0.0
    %3202 = vmatprep.subr.mxu0 0.0
    %3203 = vmatpush1.msra.mxu0 0.0
    %3204 = vmatprep.subr.mxu0 0.0
    %3205 = vmatpush1.msra.mxu0 0.0
    %3206 = vmatprep.subr.mxu0 0.0
    %3207 = vmatpush1.msra.mxu0 0.0
    %3208 = vmatprep.subr.mxu0 0.0
    %3209 = vmatpush1.msra.mxu0 0.0
    %3210 = vmatprep.subr.mxu0 0.0
    %3211 = vmatpush1.msra.mxu0 0.0
    %3212 = vmatprep.subr.mxu0 0.0
    %3213 = vmatpush1.msra.mxu0 0.0
    %3214 = vmatprep.subr.mxu0 0.0
    %3215 = vmatpush1.msra.mxu0 0.0
    %3216 = vmatprep.subr.mxu0 0.0
    %3217 = vmatpush1.msra.mxu0 0.0
    %3218 = vmatprep.mubr.f32.mxu0 0.0
    %3219 = vmatmul.mubr.f32.gmra.mrb[0].mxu0 %v3081
    %v3220 = vpop.f32.mrb[0].mxu0
    %v3221 = vadd.f32 0.0, %v3220
    %v3222 = vpop.f32.mrb[0].mxu0
    %v3223 = vadd.f32 0.0, %v3222
    %3224 = vdwg.mxu0
    %v3225 = vld [vmem:[#allocation8] sm:$0xff]
    %v3226 = vld [vmem:[#allocation8 + $0x8] sm:$0xff]
    %v3227 = vld [vmem:[#allocation8 + $0x10] sm:$0xff]
    %v3228 = vld [vmem:[#allocation8 + $0x18] sm:$0xff]
    %v3229 = vld [vmem:[#allocation8 + $0x20] sm:$0xff]
    %v3230 = vld [vmem:[#allocation8 + $0x28] sm:$0xff]
    %v3231 = vld [vmem:[#allocation8 + $0x30] sm:$0xff]
    %v3232 = vld [vmem:[#allocation8 + $0x38] sm:$0xff]
    %v3233 = vld [vmem:[#allocation8 + $0x40] sm:$0xff]
    %v3234 = vld [vmem:[#allocation8 + $0x48] sm:$0xff]
    %v3235 = vld [vmem:[#allocation8 + $0x50] sm:$0xff]
    %v3236 = vld [vmem:[#allocation8 + $0x58] sm:$0xff]
    %v3237 = vld [vmem:[#allocation8 + $0x60] sm:$0xff]
    %v3238 = vld [vmem:[#allocation8 + $0x68] sm:$0xff]
    %v3239 = vld [vmem:[#allocation8 + $0x70] sm:$0xff]
    %v3240 = vld [vmem:[#allocation8 + $0x78] sm:$0xff]
    %v3241 = vld [vmem:[#allocation8 + $0x80] sm:$0xff]
    %v3242 = vld [vmem:[#allocation8 + $0x88] sm:$0xff]
    %v3243 = vld [vmem:[#allocation8 + $0x90] sm:$0xff]
    %v3244 = vld [vmem:[#allocation8 + $0x98] sm:$0xff]
    %v3245 = vld [vmem:[#allocation8 + $0xa0] sm:$0xff]
    %v3246 = vld [vmem:[#allocation8 + $0xa8] sm:$0xff]
    %v3247 = vld [vmem:[#allocation8 + $0xb0] sm:$0xff]
    %v3248 = vld [vmem:[#allocation8 + $0xb8] sm:$0xff]
    %v3249 = vld [vmem:[#allocation8 + $0xc0] sm:$0xff]
    %v3250 = vld [vmem:[#allocation8 + $0xc8] sm:$0xff]
    %v3251 = vld [vmem:[#allocation8 + $0xd0] sm:$0xff]
    %v3252 = vld [vmem:[#allocation8 + $0xd8] sm:$0xff]
    %v3253 = vld [vmem:[#allocation8 + $0xe0] sm:$0xff]
    %v3254 = vld [vmem:[#allocation8 + $0xe8] sm:$0xff]
    %v3255 = vld [vmem:[#allocation8 + $0xf0] sm:$0xff]
    %v3256 = vld [vmem:[#allocation8 + $0xf8] sm:$0xff]
    %v3258 = vsel %vm156, %v2998, 0
    %3260 = vmatprep.subr.mxu0 %v3226
    %3261 = vmatpush1.msra.mxu0 %v3225
    %3262 = vmatprep.subr.mxu0 %v3230
    %3263 = vmatpush1.msra.mxu0 %v3229
    %3264 = vmatprep.subr.mxu0 %v3234
    %3265 = vmatpush1.msra.mxu0 %v3233
    %3266 = vmatprep.subr.mxu0 %v3238
    %3267 = vmatpush1.msra.mxu0 %v3237
    %3268 = vmatprep.subr.mxu0 %v3242
    %3269 = vmatpush1.msra.mxu0 %v3241
    %3270 = vmatprep.subr.mxu0 %v3246
    %3271 = vmatpush1.msra.mxu0 %v3245
    %3272 = vmatprep.subr.mxu0 %v3250
    %3273 = vmatpush1.msra.mxu0 %v3249
    %3274 = vmatprep.subr.mxu0 %v3254
    %3275 = vmatpush1.msra.mxu0 %v3253
    %3276 = vmatprep.subr.mxu0 0.0
    %3277 = vmatpush1.msra.mxu0 0.0
    %3278 = vmatprep.subr.mxu0 0.0
    %3279 = vmatpush1.msra.mxu0 0.0
    %3280 = vmatprep.subr.mxu0 0.0
    %3281 = vmatpush1.msra.mxu0 0.0
    %3282 = vmatprep.subr.mxu0 0.0
    %3283 = vmatpush1.msra.mxu0 0.0
    %3284 = vmatprep.subr.mxu0 0.0
    %3285 = vmatpush1.msra.mxu0 0.0
    %3286 = vmatprep.subr.mxu0 0.0
    %3287 = vmatpush1.msra.mxu0 0.0
    %3288 = vmatprep.subr.mxu0 0.0
    %3289 = vmatpush1.msra.mxu0 0.0
    %3290 = vmatprep.subr.mxu0 0.0
    %3291 = vmatpush1.msra.mxu0 0.0
    %3292 = vmatprep.subr.mxu0 0.0
    %3293 = vmatpush1.msra.mxu0 0.0
    %3294 = vmatprep.subr.mxu0 0.0
    %3295 = vmatpush1.msra.mxu0 0.0
    %3296 = vmatprep.subr.mxu0 0.0
    %3297 = vmatpush1.msra.mxu0 0.0
    %3298 = vmatprep.subr.mxu0 0.0
    %3299 = vmatpush1.msra.mxu0 0.0
    %3300 = vmatprep.subr.mxu0 0.0
    %3301 = vmatpush1.msra.mxu0 0.0
    %3302 = vmatprep.subr.mxu0 0.0
    %3303 = vmatpush1.msra.mxu0 0.0
    %3304 = vmatprep.subr.mxu0 0.0
    %3305 = vmatpush1.msra.mxu0 0.0
    %3306 = vmatprep.subr.mxu0 0.0
    %3307 = vmatpush1.msra.mxu0 0.0
    %3308 = vmatprep.subr.mxu0 0.0
    %3309 = vmatpush1.msra.mxu0 0.0
    %3310 = vmatprep.subr.mxu0 0.0
    %3311 = vmatpush1.msra.mxu0 0.0
    %3312 = vmatprep.subr.mxu0 0.0
    %3313 = vmatpush1.msra.mxu0 0.0
    %3314 = vmatprep.subr.mxu0 0.0
    %3315 = vmatpush1.msra.mxu0 0.0
    %3316 = vmatprep.subr.mxu0 0.0
    %3317 = vmatpush1.msra.mxu0 0.0
    %3318 = vmatprep.subr.mxu0 0.0
    %3319 = vmatpush1.msra.mxu0 0.0
    %3320 = vmatprep.subr.mxu0 0.0
    %3321 = vmatpush1.msra.mxu0 0.0
    %3322 = vmatprep.subr.mxu0 0.0
    %3323 = vmatpush1.msra.mxu0 0.0
    %3324 = vmatprep.mubr.f32.mxu0 0.0
    %3325 = vmatmul.mubr.f32.gmra.mrb[0].mxu0 %v3258
    %v3326 = vpop.f32.mrb[0].mxu0
    %v3327 = vadd.f32 0.0, %v3326
    %v3328 = vpop.f32.mrb[0].mxu0
    %v3329 = vadd.f32 0.0, %v3328
    %3330 = vdwg.mxu0
    %3331 = vmatprep.subr.mxu0 %v3228
    %3332 = vmatpush1.msra.mxu0 %v3227
    %3333 = vmatprep.subr.mxu0 %v3232
    %3334 = vmatpush1.msra.mxu0 %v3231
    %3335 = vmatprep.subr.mxu0 %v3236
    %3336 = vmatpush1.msra.mxu0 %v3235
    %3337 = vmatprep.subr.mxu0 %v3240
    %3338 = vmatpush1.msra.mxu0 %v3239
    %3339 = vmatprep.subr.mxu0 %v3244
    %3340 = vmatpush1.msra.mxu0 %v3243
    %3341 = vmatprep.subr.mxu0 %v3248
    %3342 = vmatpush1.msra.mxu0 %v3247
    %3343 = vmatprep.subr.mxu0 %v3252
    %3344 = vmatpush1.msra.mxu0 %v3251
    %3345 = vmatprep.subr.mxu0 %v3256
    %3346 = vmatpush1.msra.mxu0 %v3255
    %3347 = vmatprep.subr.mxu0 0.0
    %3348 = vmatpush1.msra.mxu0 0.0
    %3349 = vmatprep.subr.mxu0 0.0
    %3350 = vmatpush1.msra.mxu0 0.0
    %3351 = vmatprep.subr.mxu0 0.0
    %3352 = vmatpush1.msra.mxu0 0.0
    %3353 = vmatprep.subr.mxu0 0.0
    %3354 = vmatpush1.msra.mxu0 0.0
    %3355 = vmatprep.subr.mxu0 0.0
    %3356 = vmatpush1.msra.mxu0 0.0
    %3357 = vmatprep.subr.mxu0 0.0
    %3358 = vmatpush1.msra.mxu0 0.0
    %3359 = vmatprep.subr.mxu0 0.0
    %3360 = vmatpush1.msra.mxu0 0.0
    %3361 = vmatprep.subr.mxu0 0.0
    %3362 = vmatpush1.msra.mxu0 0.0
    %3363 = vmatprep.subr.mxu0 0.0
    %3364 = vmatpush1.msra.mxu0 0.0
    %3365 = vmatprep.subr.mxu0 0.0
    %3366 = vmatpush1.msra.mxu0 0.0
    %3367 = vmatprep.subr.mxu0 0.0
    %3368 = vmatpush1.msra.mxu0 0.0
    %3369 = vmatprep.subr.mxu0 0.0
    %3370 = vmatpush1.msra.mxu0 0.0
    %3371 = vmatprep.subr.mxu0 0.0
    %3372 = vmatpush1.msra.mxu0 0.0
    %3373 = vmatprep.subr.mxu0 0.0
    %3374 = vmatpush1.msra.mxu0 0.0
    %3375 = vmatprep.subr.mxu0 0.0
    %3376 = vmatpush1.msra.mxu0 0.0
    %3377 = vmatprep.subr.mxu0 0.0
    %3378 = vmatpush1.msra.mxu0 0.0
    %3379 = vmatprep.subr.mxu0 0.0
    %3380 = vmatpush1.msra.mxu0 0.0
    %3381 = vmatprep.subr.mxu0 0.0
    %3382 = vmatpush1.msra.mxu0 0.0
    %3383 = vmatprep.subr.mxu0 0.0
    %3384 = vmatpush1.msra.mxu0 0.0
    %3385 = vmatprep.subr.mxu0 0.0
    %3386 = vmatpush1.msra.mxu0 0.0
    %3387 = vmatprep.subr.mxu0 0.0
    %3388 = vmatpush1.msra.mxu0 0.0
    %3389 = vmatprep.subr.mxu0 0.0
    %3390 = vmatpush1.msra.mxu0 0.0
    %3391 = vmatprep.subr.mxu0 0.0
    %3392 = vmatpush1.msra.mxu0 0.0
    %3393 = vmatprep.subr.mxu0 0.0
    %3394 = vmatpush1.msra.mxu0 0.0
    %3395 = vmatprep.mubr.f32.mxu0 0.0
    %3396 = vmatmul.mubr.f32.gmra.mrb[0].mxu0 %v3258
    %v3397 = vpop.f32.mrb[0].mxu0
    %v3398 = vadd.f32 0.0, %v3397
    %v3399 = vpop.f32.mrb[0].mxu0
    %v3400 = vadd.f32 0.0, %v3399
    %3401 = vdwg.mxu0
    %v3402 = vld [vmem:[#allocation10] sm:$0xff]
    %v3403 = vld [vmem:[#allocation10 + $0x8] sm:$0xff]
    %v3404 = vld [vmem:[#allocation10 + $0x10] sm:$0xff]
    %v3405 = vld [vmem:[#allocation10 + $0x18] sm:$0xff]
    %v3406 = vld [vmem:[#allocation10 + $0x20] sm:$0xff]
    %v3407 = vld [vmem:[#allocation10 + $0x28] sm:$0xff]
    %v3408 = vld [vmem:[#allocation10 + $0x30] sm:$0xff]
    %v3409 = vld [vmem:[#allocation10 + $0x38] sm:$0xff]
    %v3410 = vld [vmem:[#allocation10 + $0x40] sm:$0xff]
    %v3411 = vld [vmem:[#allocation10 + $0x48] sm:$0xff]
    %v3412 = vld [vmem:[#allocation10 + $0x50] sm:$0xff]
    %v3413 = vld [vmem:[#allocation10 + $0x58] sm:$0xff]
    %v3414 = vld [vmem:[#allocation10 + $0x60] sm:$0xff]
    %v3415 = vld [vmem:[#allocation10 + $0x68] sm:$0xff]
    %v3416 = vld [vmem:[#allocation10 + $0x70] sm:$0xff]
    %v3417 = vld [vmem:[#allocation10 + $0x78] sm:$0xff]
    %v3419 = vsel %vm156, %v2967, 0
    %3421 = vmatprep.subr.mxu0 %v3403
    %3422 = vmatpush1.msra.mxu0 %v3402
    %3423 = vmatprep.subr.mxu0 %v3405
    %3424 = vmatpush1.msra.mxu0 %v3404
    %3425 = vmatprep.subr.mxu0 %v3407
    %3426 = vmatpush1.msra.mxu0 %v3406
    %3427 = vmatprep.subr.mxu0 %v3409
    %3428 = vmatpush1.msra.mxu0 %v3408
    %3429 = vmatprep.subr.mxu0 %v3411
    %3430 = vmatpush1.msra.mxu0 %v3410
    %3431 = vmatprep.subr.mxu0 %v3413
    %3432 = vmatpush1.msra.mxu0 %v3412
    %3433 = vmatprep.subr.mxu0 %v3415
    %3434 = vmatpush1.msra.mxu0 %v3414
    %3435 = vmatprep.subr.mxu0 %v3417
    %3436 = vmatpush1.msra.mxu0 %v3416
    %3437 = vmatprep.subr.mxu0 0.0
    %3438 = vmatpush1.msra.mxu0 0.0
    %3439 = vmatprep.subr.mxu0 0.0
    %3440 = vmatpush1.msra.mxu0 0.0
    %3441 = vmatprep.subr.mxu0 0.0
    %3442 = vmatpush1.msra.mxu0 0.0
    %3443 = vmatprep.subr.mxu0 0.0
    %3444 = vmatpush1.msra.mxu0 0.0
    %3445 = vmatprep.subr.mxu0 0.0
    %3446 = vmatpush1.msra.mxu0 0.0
    %3447 = vmatprep.subr.mxu0 0.0
    %3448 = vmatpush1.msra.mxu0 0.0
    %3449 = vmatprep.subr.mxu0 0.0
    %3450 = vmatpush1.msra.mxu0 0.0
    %3451 = vmatprep.subr.mxu0 0.0
    %3452 = vmatpush1.msra.mxu0 0.0
    %3453 = vmatprep.subr.mxu0 0.0
    %3454 = vmatpush1.msra.mxu0 0.0
    %3455 = vmatprep.subr.mxu0 0.0
    %3456 = vmatpush1.msra.mxu0 0.0
    %3457 = vmatprep.subr.mxu0 0.0
    %3458 = vmatpush1.msra.mxu0 0.0
    %3459 = vmatprep.subr.mxu0 0.0
    %3460 = vmatpush1.msra.mxu0 0.0
    %3461 = vmatprep.subr.mxu0 0.0
    %3462 = vmatpush1.msra.mxu0 0.0
    %3463 = vmatprep.subr.mxu0 0.0
    %3464 = vmatpush1.msra.mxu0 0.0
    %3465 = vmatprep.subr.mxu0 0.0
    %3466 = vmatpush1.msra.mxu0 0.0
    %3467 = vmatprep.subr.mxu0 0.0
    %3468 = vmatpush1.msra.mxu0 0.0
    %3469 = vmatprep.subr.mxu0 0.0
    %3470 = vmatpush1.msra.mxu0 0.0
    %3471 = vmatprep.subr.mxu0 0.0
    %3472 = vmatpush1.msra.mxu0 0.0
    %3473 = vmatprep.subr.mxu0 0.0
    %3474 = vmatpush1.msra.mxu0 0.0
    %3475 = vmatprep.subr.mxu0 0.0
    %3476 = vmatpush1.msra.mxu0 0.0
    %3477 = vmatprep.subr.mxu0 0.0
    %3478 = vmatpush1.msra.mxu0 0.0
    %3479 = vmatprep.subr.mxu0 0.0
    %3480 = vmatpush1.msra.mxu0 0.0
    %3481 = vmatprep.subr.mxu0 0.0
    %3482 = vmatpush1.msra.mxu0 0.0
    %3483 = vmatprep.subr.mxu0 0.0
    %3484 = vmatpush1.msra.mxu0 0.0
    %3485 = vmatprep.mubr.f32.mxu0 0.0
    %3486 = vmatmul.mubr.f32.gmra.mrb[0].mxu0 %v3419
    %v3487 = vpop.f32.mrb[0].mxu0
    %v3488 = vadd.f32 0.0, %v3487
    %v3489 = vpop.f32.mrb[0].mxu0
    %v3490 = vadd.f32 0.0, %v3489
    %3491 = vdwg.mxu0
    %v3492 = vadd.f32 %v3398, %v716
    %v3493 = vadd.f32 %v3400, %v720
    %v3494 = vadd.f32 %v3492, %v3488
    %v3495 = vadd.f32 %v3493, %v3490
    %v3496 = vmul.f32 %v3494, 0.5
    %v3497 = vmul.f32 %v3495, 0.5
    %v3498 = vtanh.pop %v3496
    %v3499 = vtanh.pop %v3497
    %v3500 = vmul.f32 %v3498, 0.5
    %v3501 = vmul.f32 %v3499, 0.5
    %v3502 = vadd.f32 %v3500, 0.5
    %v3503 = vadd.f32 %v3501, 0.5
    %v3504 = vtanh.pop %v3495
    %v3505 = vmul.f32 %v3502, %v2961
    %3507 = vrot.lane.b32.xlu0 %v3504, 64
    %v3508 = vpop.permute.xlu0 %3507
    %v3510 = vmul.f32 %v3502, %v3508
    %3512 = vrot.lane.b32.xlu0 %v3510, 64
    %v3513 = vpop.permute.xlu0 %3512
    %v3515 = vadd.f32 %v3505, %v3513
    %v3516 = vtanh.pop %v3515
    %3518 = vrot.lane.b32.xlu0 %v3516, 64
    %v3519 = vpop.permute.xlu0 %3518
    %v3521 = vmul.f32 %v3503, %v3519
    %3522 = vst.msk [vmem:[#allocation2 + $0x5] sm:$0x1] %vm751, %v3521
    %v3523 = vadd.f32 %v3221, %v306
    %v3524 = vadd.f32 %v3223, %v310
    %v3525 = vadd.f32 %v3523, %v3327
    %v3526 = vadd.f32 %v3524, %v3329
    %v3527 = vmul.f32 %v3525, 0.5
    %v3528 = vmul.f32 %v3526, 0.5
    %v3529 = vtanh.pop %v3527
    %v3530 = vtanh.pop %v3528
    %v3531 = vmul.f32 %v3529, 0.5
    %v3532 = vmul.f32 %v3530, 0.5
    %v3533 = vadd.f32 %v3531, 0.5
    %v3534 = vadd.f32 %v3532, 0.5
    %v3535 = vtanh.pop %v3526
    %v3536 = vmul.f32 %v3533, %v2992
    %3538 = vrot.lane.b32.xlu0 %v3535, 64
    %v3539 = vpop.permute.xlu0 %3538
    %v3541 = vmul.f32 %v3533, %v3539
    %3543 = vrot.lane.b32.xlu0 %v3541, 64
    %v3544 = vpop.permute.xlu0 %3543
    %v3546 = vadd.f32 %v3536, %v3544
    %v3547 = vtanh.pop %v3546
    %3549 = vrot.lane.b32.xlu0 %v3547, 64
    %v3550 = vpop.permute.xlu0 %3549
    %v3552 = vmul.f32 %v3534, %v3550
    %s3553 = sld [smem:[#allocation3 + $0x7]]
    %v3554 = vstv %s3553
    %v3555 = vmul.f32 %v3554, %v90
    %v3556 = vadd.f32 %v3555, %v91
    %v3559 = vcombine.low %v3150, %v3152
    %v3561 = vunpack.c.l.s4 1966171168
    %v3562 = vunpack.c.0.s8 %v3561
    %v3563 = vlaneseq
    %v3564 = vshrl.u32 %v3563, 7
    %v3565 = vsub.s32 %v3562, %v3564
    %v3566 = vrot.slane %v3559, %v3565
    %v3568 = vunpack.c.l.s4 1966171168
    %v3569 = vunpack.c.0.s8 %v3568
    %v3570 = vlaneseq
    %v3571 = vshrl.u32 %v3570, 7
    %v3572 = vsub.s32 %v3569, %v3571
    %v3573 = vrot.slane %v3566, %v3572
    %v3575 = vadd.f32 %v3556, %v3573
    %v3576 = vmul.f32 %v3575, 0.5
    %v3577 = vtanh.pop %v3576
    %v3578 = vmul.f32 %v3577, 0.5
    %v3579 = vadd.f32 %v3578, 0.5
    %3581 = vrot.lane.b32.xlu0 %v3575, 64
    %v3582 = vpop.permute.xlu0 %3581
    %v3583 = vrot.slane %v3582, 1
    %v3585 = vtanh.pop %v3583
    %v3586 = vmul.f32 %v3579, %v3038
    %v3587 = vmul.f32 %v3579, %v3585
    %3589 = vrot.lane.b32.xlu0 %v3587, 64
    %v3590 = vpop.permute.xlu0 %3589
    %v3592 = vadd.f32 %v3586, %v3590
    %v3593 = vtanh.pop %v3592
    %v3595 = vrot.slane %v3579, 1
    %3598 = vrot.lane.b32.xlu0 %v3593, 64
    %v3599 = vpop.permute.xlu0 %3598
    %v3601 = vmul.f32 %v3595, %v3599
    %v3602 = vld [vmem:[#allocation7 + $0x10] sm:$0xff]
    %v3603 = vld [vmem:[#allocation7 + $0x18] sm:$0xff]
    %v3604 = vld [vmem:[#allocation7 + $0x30] sm:$0xff]
    %v3605 = vld [vmem:[#allocation7 + $0x38] sm:$0xff]
    %v3606 = vld [vmem:[#allocation7 + $0x50] sm:$0xff]
    %v3607 = vld [vmem:[#allocation7 + $0x58] sm:$0xff]
    %v3608 = vld [vmem:[#allocation7 + $0x70] sm:$0xff]
    %v3609 = vld [vmem:[#allocation7 + $0x78] sm:$0xff]
    %v3610 = vld [vmem:[#allocation7 + $0x90] sm:$0xff]
    %v3611 = vld [vmem:[#allocation7 + $0x98] sm:$0xff]
    %v3612 = vld [vmem:[#allocation7 + $0xb0] sm:$0xff]
    %v3613 = vld [vmem:[#allocation7 + $0xb8] sm:$0xff]
    %v3614 = vld [vmem:[#allocation7 + $0xd0] sm:$0xff]
    %v3615 = vld [vmem:[#allocation7 + $0xd8] sm:$0xff]
    %v3616 = vld [vmem:[#allocation7 + $0xf0] sm:$0xff]
    %v3617 = vld [vmem:[#allocation7 + $0xf8] sm:$0xff]
    %v3619 = vsel %vm156, %v3601, 0
    %3621 = vmatprep.subr.mxu0 %v3603
    %3622 = vmatpush1.msra.mxu0 %v3602
    %3623 = vmatprep.subr.mxu0 %v3605
    %3624 = vmatpush1.msra.mxu0 %v3604
    %3625 = vmatprep.subr.mxu0 %v3607
    %3626 = vmatpush1.msra.mxu0 %v3606
    %3627 = vmatprep.subr.mxu0 %v3609
    %3628 = vmatpush1.msra.mxu0 %v3608
    %3629 = vmatprep.subr.mxu0 %v3611
    %3630 = vmatpush1.msra.mxu0 %v3610
    %3631 = vmatprep.subr.mxu0 %v3613
    %3632 = vmatpush1.msra.mxu0 %v3612
    %3633 = vmatprep.subr.mxu0 %v3615
    %3634 = vmatpush1.msra.mxu0 %v3614
    %3635 = vmatprep.subr.mxu0 %v3617
    %3636 = vmatpush1.msra.mxu0 %v3616
    %3637 = vmatprep.subr.mxu0 0.0
    %3638 = vmatpush1.msra.mxu0 0.0
    %3639 = vmatprep.subr.mxu0 0.0
    %3640 = vmatpush1.msra.mxu0 0.0
    %3641 = vmatprep.subr.mxu0 0.0
    %3642 = vmatpush1.msra.mxu0 0.0
    %3643 = vmatprep.subr.mxu0 0.0
    %3644 = vmatpush1.msra.mxu0 0.0
    %3645 = vmatprep.subr.mxu0 0.0
    %3646 = vmatpush1.msra.mxu0 0.0
    %3647 = vmatprep.subr.mxu0 0.0
    %3648 = vmatpush1.msra.mxu0 0.0
    %3649 = vmatprep.subr.mxu0 0.0
    %3650 = vmatpush1.msra.mxu0 0.0
    %3651 = vmatprep.subr.mxu0 0.0
    %3652 = vmatpush1.msra.mxu0 0.0
    %3653 = vmatprep.subr.mxu0 0.0
    %3654 = vmatpush1.msra.mxu0 0.0
    %3655 = vmatprep.subr.mxu0 0.0
    %3656 = vmatpush1.msra.mxu0 0.0
    %3657 = vmatprep.subr.mxu0 0.0
    %3658 = vmatpush1.msra.mxu0 0.0
    %3659 = vmatprep.subr.mxu0 0.0
    %3660 = vmatpush1.msra.mxu0 0.0
    %3661 = vmatprep.subr.mxu0 0.0
    %3662 = vmatpush1.msra.mxu0 0.0
    %3663 = vmatprep.subr.mxu0 0.0
    %3664 = vmatpush1.msra.mxu0 0.0
    %3665 = vmatprep.subr.mxu0 0.0
    %3666 = vmatpush1.msra.mxu0 0.0
    %3667 = vmatprep.subr.mxu0 0.0
    %3668 = vmatpush1.msra.mxu0 0.0
    %3669 = vmatprep.subr.mxu0 0.0
    %3670 = vmatpush1.msra.mxu0 0.0
    %3671 = vmatprep.subr.mxu0 0.0
    %3672 = vmatpush1.msra.mxu0 0.0
    %3673 = vmatprep.subr.mxu0 0.0
    %3674 = vmatpush1.msra.mxu0 0.0
    %3675 = vmatprep.subr.mxu0 0.0
    %3676 = vmatpush1.msra.mxu0 0.0
    %3677 = vmatprep.subr.mxu0 0.0
    %3678 = vmatpush1.msra.mxu0 0.0
    %3679 = vmatprep.subr.mxu0 0.0
    %3680 = vmatpush1.msra.mxu0 0.0
    %3681 = vmatprep.subr.mxu0 0.0
    %3682 = vmatpush1.msra.mxu0 0.0
    %3683 = vmatprep.subr.mxu0 0.0
    %3684 = vmatpush1.msra.mxu0 0.0
    %3685 = vmatprep.mubr.f32.mxu0 0.0
    %3686 = vmatmul.mubr.f32.gmra.mrb[0].mxu0 %v3619
    %v3687 = vpop.f32.mrb[0].mxu0
    %v3688 = vadd.f32 0.0, %v3687
    %v3689 = vpop.f32.mrb[0].mxu0
    %v3690 = vadd.f32 0.0, %v3689
    %3691 = vdwg.mxu0
    %v3692 = vld [vmem:[#allocation8] sm:$0xff]
    %v3693 = vld [vmem:[#allocation8 + $0x8] sm:$0xff]
    %v3694 = vld [vmem:[#allocation8 + $0x10] sm:$0xff]
    %v3695 = vld [vmem:[#allocation8 + $0x18] sm:$0xff]
    %v3696 = vld [vmem:[#allocation8 + $0x20] sm:$0xff]
    %v3697 = vld [vmem:[#allocation8 + $0x28] sm:$0xff]
    %v3698 = vld [vmem:[#allocation8 + $0x30] sm:$0xff]
    %v3699 = vld [vmem:[#allocation8 + $0x38] sm:$0xff]
    %v3700 = vld [vmem:[#allocation8 + $0x40] sm:$0xff]
    %v3701 = vld [vmem:[#allocation8 + $0x48] sm:$0xff]
    %v3702 = vld [vmem:[#allocation8 + $0x50] sm:$0xff]
    %v3703 = vld [vmem:[#allocation8 + $0x58] sm:$0xff]
    %v3704 = vld [vmem:[#allocation8 + $0x60] sm:$0xff]
    %v3705 = vld [vmem:[#allocation8 + $0x68] sm:$0xff]
    %v3706 = vld [vmem:[#allocation8 + $0x70] sm:$0xff]
    %v3707 = vld [vmem:[#allocation8 + $0x78] sm:$0xff]
    %v3708 = vld [vmem:[#allocation8 + $0x80] sm:$0xff]
    %v3709 = vld [vmem:[#allocation8 + $0x88] sm:$0xff]
    %v3710 = vld [vmem:[#allocation8 + $0x90] sm:$0xff]
    %v3711 = vld [vmem:[#allocation8 + $0x98] sm:$0xff]
    %v3712 = vld [vmem:[#allocation8 + $0xa0] sm:$0xff]
    %v3713 = vld [vmem:[#allocation8 + $0xa8] sm:$0xff]
    %v3714 = vld [vmem:[#allocation8 + $0xb0] sm:$0xff]
    %v3715 = vld [vmem:[#allocation8 + $0xb8] sm:$0xff]
    %v3716 = vld [vmem:[#allocation8 + $0xc0] sm:$0xff]
    %v3717 = vld [vmem:[#allocation8 + $0xc8] sm:$0xff]
    %v3718 = vld [vmem:[#allocation8 + $0xd0] sm:$0xff]
    %v3719 = vld [vmem:[#allocation8 + $0xd8] sm:$0xff]
    %v3720 = vld [vmem:[#allocation8 + $0xe0] sm:$0xff]
    %v3721 = vld [vmem:[#allocation8 + $0xe8] sm:$0xff]
    %v3722 = vld [vmem:[#allocation8 + $0xf0] sm:$0xff]
    %v3723 = vld [vmem:[#allocation8 + $0xf8] sm:$0xff]
    %v3725 = vsel %vm156, %v3552, 0
    %3727 = vmatprep.subr.mxu0 %v3693
    %3728 = vmatpush1.msra.mxu0 %v3692
    %3729 = vmatprep.subr.mxu0 %v3697
    %3730 = vmatpush1.msra.mxu0 %v3696
    %3731 = vmatprep.subr.mxu0 %v3701
    %3732 = vmatpush1.msra.mxu0 %v3700
    %3733 = vmatprep.subr.mxu0 %v3705
    %3734 = vmatpush1.msra.mxu0 %v3704
    %3735 = vmatprep.subr.mxu0 %v3709
    %3736 = vmatpush1.msra.mxu0 %v3708
    %3737 = vmatprep.subr.mxu0 %v3713
    %3738 = vmatpush1.msra.mxu0 %v3712
    %3739 = vmatprep.subr.mxu0 %v3717
    %3740 = vmatpush1.msra.mxu0 %v3716
    %3741 = vmatprep.subr.mxu0 %v3721
    %3742 = vmatpush1.msra.mxu0 %v3720
    %3743 = vmatprep.subr.mxu0 0.0
    %3744 = vmatpush1.msra.mxu0 0.0
    %3745 = vmatprep.subr.mxu0 0.0
    %3746 = vmatpush1.msra.mxu0 0.0
    %3747 = vmatprep.subr.mxu0 0.0
    %3748 = vmatpush1.msra.mxu0 0.0
    %3749 = vmatprep.subr.mxu0 0.0
    %3750 = vmatpush1.msra.mxu0 0.0
    %3751 = vmatprep.subr.mxu0 0.0
    %3752 = vmatpush1.msra.mxu0 0.0
    %3753 = vmatprep.subr.mxu0 0.0
    %3754 = vmatpush1.msra.mxu0 0.0
    %3755 = vmatprep.subr.mxu0 0.0
    %3756 = vmatpush1.msra.mxu0 0.0
    %3757 = vmatprep.subr.mxu0 0.0
    %3758 = vmatpush1.msra.mxu0 0.0
    %3759 = vmatprep.subr.mxu0 0.0
    %3760 = vmatpush1.msra.mxu0 0.0
    %3761 = vmatprep.subr.mxu0 0.0
    %3762 = vmatpush1.msra.mxu0 0.0
    %3763 = vmatprep.subr.mxu0 0.0
    %3764 = vmatpush1.msra.mxu0 0.0
    %3765 = vmatprep.subr.mxu0 0.0
    %3766 = vmatpush1.msra.mxu0 0.0
    %3767 = vmatprep.subr.mxu0 0.0
    %3768 = vmatpush1.msra.mxu0 0.0
    %3769 = vmatprep.subr.mxu0 0.0
    %3770 = vmatpush1.msra.mxu0 0.0
    %3771 = vmatprep.subr.mxu0 0.0
    %3772 = vmatpush1.msra.mxu0 0.0
    %3773 = vmatprep.subr.mxu0 0.0
    %3774 = vmatpush1.msra.mxu0 0.0
    %3775 = vmatprep.subr.mxu0 0.0
    %3776 = vmatpush1.msra.mxu0 0.0
    %3777 = vmatprep.subr.mxu0 0.0
    %3778 = vmatpush1.msra.mxu0 0.0
    %3779 = vmatprep.subr.mxu0 0.0
    %3780 = vmatpush1.msra.mxu0 0.0
    %3781 = vmatprep.subr.mxu0 0.0
    %3782 = vmatpush1.msra.mxu0 0.0
    %3783 = vmatprep.subr.mxu0 0.0
    %3784 = vmatpush1.msra.mxu0 0.0
    %3785 = vmatprep.subr.mxu0 0.0
    %3786 = vmatpush1.msra.mxu0 0.0
    %3787 = vmatprep.subr.mxu0 0.0
    %3788 = vmatpush1.msra.mxu0 0.0
    %3789 = vmatprep.subr.mxu0 0.0
    %3790 = vmatpush1.msra.mxu0 0.0
    %3791 = vmatprep.mubr.f32.mxu0 0.0
    %3792 = vmatmul.mubr.f32.gmra.mrb[0].mxu0 %v3725
    %v3793 = vpop.f32.mrb[0].mxu0
    %v3794 = vadd.f32 0.0, %v3793
    %v3795 = vpop.f32.mrb[0].mxu0
    %v3796 = vadd.f32 0.0, %v3795
    %3797 = vdwg.mxu0
    %3798 = vmatprep.subr.mxu0 %v3695
    %3799 = vmatpush1.msra.mxu0 %v3694
    %3800 = vmatprep.subr.mxu0 %v3699
    %3801 = vmatpush1.msra.mxu0 %v3698
    %3802 = vmatprep.subr.mxu0 %v3703
    %3803 = vmatpush1.msra.mxu0 %v3702
    %3804 = vmatprep.subr.mxu0 %v3707
    %3805 = vmatpush1.msra.mxu0 %v3706
    %3806 = vmatprep.subr.mxu0 %v3711
    %3807 = vmatpush1.msra.mxu0 %v3710
    %3808 = vmatprep.subr.mxu0 %v3715
    %3809 = vmatpush1.msra.mxu0 %v3714
    %3810 = vmatprep.subr.mxu0 %v3719
    %3811 = vmatpush1.msra.mxu0 %v3718
    %3812 = vmatprep.subr.mxu0 %v3723
    %3813 = vmatpush1.msra.mxu0 %v3722
    %3814 = vmatprep.subr.mxu0 0.0
    %3815 = vmatpush1.msra.mxu0 0.0
    %3816 = vmatprep.subr.mxu0 0.0
    %3817 = vmatpush1.msra.mxu0 0.0
    %3818 = vmatprep.subr.mxu0 0.0
    %3819 = vmatpush1.msra.mxu0 0.0
    %3820 = vmatprep.subr.mxu0 0.0
    %3821 = vmatpush1.msra.mxu0 0.0
    %3822 = vmatprep.subr.mxu0 0.0
    %3823 = vmatpush1.msra.mxu0 0.0
    %3824 = vmatprep.subr.mxu0 0.0
    %3825 = vmatpush1.msra.mxu0 0.0
    %3826 = vmatprep.subr.mxu0 0.0
    %3827 = vmatpush1.msra.mxu0 0.0
    %3828 = vmatprep.subr.mxu0 0.0
    %3829 = vmatpush1.msra.mxu0 0.0
    %3830 = vmatprep.subr.mxu0 0.0
    %3831 = vmatpush1.msra.mxu0 0.0
    %3832 = vmatprep.subr.mxu0 0.0
    %3833 = vmatpush1.msra.mxu0 0.0
    %3834 = vmatprep.subr.mxu0 0.0
    %3835 = vmatpush1.msra.mxu0 0.0
    %3836 = vmatprep.subr.mxu0 0.0
    %3837 = vmatpush1.msra.mxu0 0.0
    %3838 = vmatprep.subr.mxu0 0.0
    %3839 = vmatpush1.msra.mxu0 0.0
    %3840 = vmatprep.subr.mxu0 0.0
    %3841 = vmatpush1.msra.mxu0 0.0
    %3842 = vmatprep.subr.mxu0 0.0
    %3843 = vmatpush1.msra.mxu0 0.0
    %3844 = vmatprep.subr.mxu0 0.0
    %3845 = vmatpush1.msra.mxu0 0.0
    %3846 = vmatprep.subr.mxu0 0.0
    %3847 = vmatpush1.msra.mxu0 0.0
    %3848 = vmatprep.subr.mxu0 0.0
    %3849 = vmatpush1.msra.mxu0 0.0
    %3850 = vmatprep.subr.mxu0 0.0
    %3851 = vmatpush1.msra.mxu0 0.0
    %3852 = vmatprep.subr.mxu0 0.0
    %3853 = vmatpush1.msra.mxu0 0.0
    %3854 = vmatprep.subr.mxu0 0.0
    %3855 = vmatpush1.msra.mxu0 0.0
    %3856 = vmatprep.subr.mxu0 0.0
    %3857 = vmatpush1.msra.mxu0 0.0
    %3858 = vmatprep.subr.mxu0 0.0
    %3859 = vmatpush1.msra.mxu0 0.0
    %3860 = vmatprep.subr.mxu0 0.0
    %3861 = vmatpush1.msra.mxu0 0.0
    %3862 = vmatprep.mubr.f32.mxu0 0.0
    %3863 = vmatmul.mubr.f32.gmra.mrb[0].mxu0 %v3725
    %v3864 = vpop.f32.mrb[0].mxu0
    %v3865 = vadd.f32 0.0, %v3864
    %v3866 = vpop.f32.mrb[0].mxu0
    %v3867 = vadd.f32 0.0, %v3866
    %3868 = vdwg.mxu0
    %v3869 = vld [vmem:[#allocation10] sm:$0xff]
    %v3870 = vld [vmem:[#allocation10 + $0x8] sm:$0xff]
    %v3871 = vld [vmem:[#allocation10 + $0x10] sm:$0xff]
    %v3872 = vld [vmem:[#allocation10 + $0x18] sm:$0xff]
    %v3873 = vld [vmem:[#allocation10 + $0x20] sm:$0xff]
    %v3874 = vld [vmem:[#allocation10 + $0x28] sm:$0xff]
    %v3875 = vld [vmem:[#allocation10 + $0x30] sm:$0xff]
    %v3876 = vld [vmem:[#allocation10 + $0x38] sm:$0xff]
    %v3877 = vld [vmem:[#allocation10 + $0x40] sm:$0xff]
    %v3878 = vld [vmem:[#allocation10 + $0x48] sm:$0xff]
    %v3879 = vld [vmem:[#allocation10 + $0x50] sm:$0xff]
    %v3880 = vld [vmem:[#allocation10 + $0x58] sm:$0xff]
    %v3881 = vld [vmem:[#allocation10 + $0x60] sm:$0xff]
    %v3882 = vld [vmem:[#allocation10 + $0x68] sm:$0xff]
    %v3883 = vld [vmem:[#allocation10 + $0x70] sm:$0xff]
    %v3884 = vld [vmem:[#allocation10 + $0x78] sm:$0xff]
    %v3886 = vsel %vm156, %v3521, 0
    %3888 = vmatprep.subr.mxu0 %v3870
    %3889 = vmatpush1.msra.mxu0 %v3869
    %3890 = vmatprep.subr.mxu0 %v3872
    %3891 = vmatpush1.msra.mxu0 %v3871
    %3892 = vmatprep.subr.mxu0 %v3874
    %3893 = vmatpush1.msra.mxu0 %v3873
    %3894 = vmatprep.subr.mxu0 %v3876
    %3895 = vmatpush1.msra.mxu0 %v3875
    %3896 = vmatprep.subr.mxu0 %v3878
    %3897 = vmatpush1.msra.mxu0 %v3877
    %3898 = vmatprep.subr.mxu0 %v3880
    %3899 = vmatpush1.msra.mxu0 %v3879
    %3900 = vmatprep.subr.mxu0 %v3882
    %3901 = vmatpush1.msra.mxu0 %v3881
    %3902 = vmatprep.subr.mxu0 %v3884
    %3903 = vmatpush1.msra.mxu0 %v3883
    %3904 = vmatprep.subr.mxu0 0.0
    %3905 = vmatpush1.msra.mxu0 0.0
    %3906 = vmatprep.subr.mxu0 0.0
    %3907 = vmatpush1.msra.mxu0 0.0
    %3908 = vmatprep.subr.mxu0 0.0
    %3909 = vmatpush1.msra.mxu0 0.0
    %3910 = vmatprep.subr.mxu0 0.0
    %3911 = vmatpush1.msra.mxu0 0.0
    %3912 = vmatprep.subr.mxu0 0.0
    %3913 = vmatpush1.msra.mxu0 0.0
    %3914 = vmatprep.subr.mxu0 0.0
    %3915 = vmatpush1.msra.mxu0 0.0
    %3916 = vmatprep.subr.mxu0 0.0
    %3917 = vmatpush1.msra.mxu0 0.0
    %3918 = vmatprep.subr.mxu0 0.0
    %3919 = vmatpush1.msra.mxu0 0.0
    %3920 = vmatprep.subr.mxu0 0.0
    %3921 = vmatpush1.msra.mxu0 0.0
    %3922 = vmatprep.subr.mxu0 0.0
    %3923 = vmatpush1.msra.mxu0 0.0
    %3924 = vmatprep.subr.mxu0 0.0
    %3925 = vmatpush1.msra.mxu0 0.0
    %3926 = vmatprep.subr.mxu0 0.0
    %3927 = vmatpush1.msra.mxu0 0.0
    %3928 = vmatprep.subr.mxu0 0.0
    %3929 = vmatpush1.msra.mxu0 0.0
    %3930 = vmatprep.subr.mxu0 0.0
    %3931 = vmatpush1.msra.mxu0 0.0
    %3932 = vmatprep.subr.mxu0 0.0
    %3933 = vmatpush1.msra.mxu0 0.0
    %3934 = vmatprep.subr.mxu0 0.0
    %3935 = vmatpush1.msra.mxu0 0.0
    %3936 = vmatprep.subr.mxu0 0.0
    %3937 = vmatpush1.msra.mxu0 0.0
    %3938 = vmatprep.subr.mxu0 0.0
    %3939 = vmatpush1.msra.mxu0 0.0
    %3940 = vmatprep.subr.mxu0 0.0
    %3941 = vmatpush1.msra.mxu0 0.0
    %3942 = vmatprep.subr.mxu0 0.0
    %3943 = vmatpush1.msra.mxu0 0.0
    %3944 = vmatprep.subr.mxu0 0.0
    %3945 = vmatpush1.msra.mxu0 0.0
    %3946 = vmatprep.subr.mxu0 0.0
    %3947 = vmatpush1.msra.mxu0 0.0
    %3948 = vmatprep.subr.mxu0 0.0
    %3949 = vmatpush1.msra.mxu0 0.0
    %3950 = vmatprep.subr.mxu0 0.0
    %3951 = vmatpush1.msra.mxu0 0.0
    %3952 = vmatprep.mubr.f32.mxu0 0.0
    %3953 = vmatmul.mubr.f32.gmra.mrb[0].mxu0 %v3886
    %v3954 = vpop.f32.mrb[0].mxu0
    %v3955 = vadd.f32 0.0, %v3954
    %v3956 = vpop.f32.mrb[0].mxu0
    %v3957 = vadd.f32 0.0, %v3956
    %3958 = vdwg.mxu0
    %v3959 = vadd.f32 %v3865, %v716
    %v3960 = vadd.f32 %v3867, %v720
    %v3961 = vadd.f32 %v3959, %v3955
    %v3962 = vadd.f32 %v3960, %v3957
    %v3963 = vmul.f32 %v3961, 0.5
    %v3964 = vmul.f32 %v3962, 0.5
    %v3965 = vtanh.pop %v3963
    %v3966 = vtanh.pop %v3964
    %v3967 = vmul.f32 %v3965, 0.5
    %v3968 = vmul.f32 %v3966, 0.5
    %v3969 = vadd.f32 %v3967, 0.5
    %v3970 = vadd.f32 %v3968, 0.5
    %v3971 = vtanh.pop %v3962
    %v3972 = vmul.f32 %v3969, %v3515
    %3974 = vrot.lane.b32.xlu0 %v3971, 64
    %v3975 = vpop.permute.xlu0 %3974
    %v3977 = vmul.f32 %v3969, %v3975
    %3979 = vrot.lane.b32.xlu0 %v3977, 64
    %v3980 = vpop.permute.xlu0 %3979
    %v3982 = vadd.f32 %v3972, %v3980
    %v3983 = vtanh.pop %v3982
    %3985 = vrot.lane.b32.xlu0 %v3983, 64
    %v3986 = vpop.permute.xlu0 %3985
    %v3988 = vmul.f32 %v3970, %v3986
    %3989 = vst.msk [vmem:[#allocation2 + $0x6] sm:$0x1] %vm751, %v3988
    %v3990 = vadd.f32 %v3688, %v306
    %v3991 = vadd.f32 %v3690, %v310
    %v3992 = vadd.f32 %v3990, %v3794
    %v3993 = vadd.f32 %v3991, %v3796
    %v3994 = vmul.f32 %v3992, 0.5
    %v3995 = vmul.f32 %v3993, 0.5
    %v3996 = vtanh.pop %v3994
    %v3997 = vtanh.pop %v3995
    %v3998 = vmul.f32 %v3996, 0.5
    %v3999 = vmul.f32 %v3997, 0.5
    %v4000 = vadd.f32 %v3998, 0.5
    %v4001 = vadd.f32 %v3999, 0.5
    %v4002 = vtanh.pop %v3993
    %v4003 = vmul.f32 %v4000, %v3546
    %4005 = vrot.lane.b32.xlu0 %v4002, 64
    %v4006 = vpop.permute.xlu0 %4005
    %v4008 = vmul.f32 %v4000, %v4006
    %4010 = vrot.lane.b32.xlu0 %v4008, 64
    %v4011 = vpop.permute.xlu0 %4010
    %v4013 = vadd.f32 %v4003, %v4011
    %v4014 = vtanh.pop %v4013
    %4016 = vrot.lane.b32.xlu0 %v4014, 64
    %v4017 = vpop.permute.xlu0 %4016
    %v4019 = vmul.f32 %v4001, %v4017
    %v4020 = vld [vmem:[#allocation8 + $0x10] sm:$0xff]
    %v4021 = vld [vmem:[#allocation8 + $0x18] sm:$0xff]
    %v4022 = vld [vmem:[#allocation8 + $0x30] sm:$0xff]
    %v4023 = vld [vmem:[#allocation8 + $0x38] sm:$0xff]
    %v4024 = vld [vmem:[#allocation8 + $0x50] sm:$0xff]
    %v4025 = vld [vmem:[#allocation8 + $0x58] sm:$0xff]
    %v4026 = vld [vmem:[#allocation8 + $0x70] sm:$0xff]
    %v4027 = vld [vmem:[#allocation8 + $0x78] sm:$0xff]
    %v4028 = vld [vmem:[#allocation8 + $0x90] sm:$0xff]
    %v4029 = vld [vmem:[#allocation8 + $0x98] sm:$0xff]
    %v4030 = vld [vmem:[#allocation8 + $0xb0] sm:$0xff]
    %v4031 = vld [vmem:[#allocation8 + $0xb8] sm:$0xff]
    %v4032 = vld [vmem:[#allocation8 + $0xd0] sm:$0xff]
    %v4033 = vld [vmem:[#allocation8 + $0xd8] sm:$0xff]
    %v4034 = vld [vmem:[#allocation8 + $0xf0] sm:$0xff]
    %v4035 = vld [vmem:[#allocation8 + $0xf8] sm:$0xff]
    %v4037 = vsel %vm156, %v4019, 0
    %4039 = vmatprep.subr.mxu0 %v4021
    %4040 = vmatpush1.msra.mxu0 %v4020
    %4041 = vmatprep.subr.mxu0 %v4023
    %4042 = vmatpush1.msra.mxu0 %v4022
    %4043 = vmatprep.subr.mxu0 %v4025
    %4044 = vmatpush1.msra.mxu0 %v4024
    %4045 = vmatprep.subr.mxu0 %v4027
    %4046 = vmatpush1.msra.mxu0 %v4026
    %4047 = vmatprep.subr.mxu0 %v4029
    %4048 = vmatpush1.msra.mxu0 %v4028
    %4049 = vmatprep.subr.mxu0 %v4031
    %4050 = vmatpush1.msra.mxu0 %v4030
    %4051 = vmatprep.subr.mxu0 %v4033
    %4052 = vmatpush1.msra.mxu0 %v4032
    %4053 = vmatprep.subr.mxu0 %v4035
    %4054 = vmatpush1.msra.mxu0 %v4034
    %4055 = vmatprep.subr.mxu0 0.0
    %4056 = vmatpush1.msra.mxu0 0.0
    %4057 = vmatprep.subr.mxu0 0.0
    %4058 = vmatpush1.msra.mxu0 0.0
    %4059 = vmatprep.subr.mxu0 0.0
    %4060 = vmatpush1.msra.mxu0 0.0
    %4061 = vmatprep.subr.mxu0 0.0
    %4062 = vmatpush1.msra.mxu0 0.0
    %4063 = vmatprep.subr.mxu0 0.0
    %4064 = vmatpush1.msra.mxu0 0.0
    %4065 = vmatprep.subr.mxu0 0.0
    %4066 = vmatpush1.msra.mxu0 0.0
    %4067 = vmatprep.subr.mxu0 0.0
    %4068 = vmatpush1.msra.mxu0 0.0
    %4069 = vmatprep.subr.mxu0 0.0
    %4070 = vmatpush1.msra.mxu0 0.0
    %4071 = vmatprep.subr.mxu0 0.0
    %4072 = vmatpush1.msra.mxu0 0.0
    %4073 = vmatprep.subr.mxu0 0.0
    %4074 = vmatpush1.msra.mxu0 0.0
    %4075 = vmatprep.subr.mxu0 0.0
    %4076 = vmatpush1.msra.mxu0 0.0
    %4077 = vmatprep.subr.mxu0 0.0
    %4078 = vmatpush1.msra.mxu0 0.0
    %4079 = vmatprep.subr.mxu0 0.0
    %4080 = vmatpush1.msra.mxu0 0.0
    %4081 = vmatprep.subr.mxu0 0.0
    %4082 = vmatpush1.msra.mxu0 0.0
    %4083 = vmatprep.subr.mxu0 0.0
    %4084 = vmatpush1.msra.mxu0 0.0
    %4085 = vmatprep.subr.mxu0 0.0
    %4086 = vmatpush1.msra.mxu0 0.0
    %4087 = vmatprep.subr.mxu0 0.0
    %4088 = vmatpush1.msra.mxu0 0.0
    %4089 = vmatprep.subr.mxu0 0.0
    %4090 = vmatpush1.msra.mxu0 0.0
    %4091 = vmatprep.subr.mxu0 0.0
    %4092 = vmatpush1.msra.mxu0 0.0
    %4093 = vmatprep.subr.mxu0 0.0
    %4094 = vmatpush1.msra.mxu0 0.0
    %4095 = vmatprep.subr.mxu0 0.0
    %4096 = vmatpush1.msra.mxu0 0.0
    %4097 = vmatprep.subr.mxu0 0.0
    %4098 = vmatpush1.msra.mxu0 0.0
    %4099 = vmatprep.subr.mxu0 0.0
    %4100 = vmatpush1.msra.mxu0 0.0
    %4101 = vmatprep.subr.mxu0 0.0
    %4102 = vmatpush1.msra.mxu0 0.0
    %4103 = vmatprep.mubr.f32.mxu0 0.0
    %4104 = vmatmul.mubr.f32.gmra.mrb[0].mxu0 %v4037
    %v4105 = vpop.f32.mrb[0].mxu0
    %v4106 = vadd.f32 0.0, %v4105
    %v4107 = vpop.f32.mrb[0].mxu0
    %v4108 = vadd.f32 0.0, %v4107
    %4109 = vdwg.mxu0
    %v4110 = vld [vmem:[#allocation10] sm:$0xff]
    %v4111 = vld [vmem:[#allocation10 + $0x8] sm:$0xff]
    %v4112 = vld [vmem:[#allocation10 + $0x10] sm:$0xff]
    %v4113 = vld [vmem:[#allocation10 + $0x18] sm:$0xff]
    %v4114 = vld [vmem:[#allocation10 + $0x20] sm:$0xff]
    %v4115 = vld [vmem:[#allocation10 + $0x28] sm:$0xff]
    %v4116 = vld [vmem:[#allocation10 + $0x30] sm:$0xff]
    %v4117 = vld [vmem:[#allocation10 + $0x38] sm:$0xff]
    %v4118 = vld [vmem:[#allocation10 + $0x40] sm:$0xff]
    %v4119 = vld [vmem:[#allocation10 + $0x48] sm:$0xff]
    %v4120 = vld [vmem:[#allocation10 + $0x50] sm:$0xff]
    %v4121 = vld [vmem:[#allocation10 + $0x58] sm:$0xff]
    %v4122 = vld [vmem:[#allocation10 + $0x60] sm:$0xff]
    %v4123 = vld [vmem:[#allocation10 + $0x68] sm:$0xff]
    %v4124 = vld [vmem:[#allocation10 + $0x70] sm:$0xff]
    %v4125 = vld [vmem:[#allocation10 + $0x78] sm:$0xff]
    %v4127 = vsel %vm156, %v3988, 0
    %4129 = vmatprep.subr.mxu0 %v4111
    %4130 = vmatpush1.msra.mxu0 %v4110
    %4131 = vmatprep.subr.mxu0 %v4113
    %4132 = vmatpush1.msra.mxu0 %v4112
    %4133 = vmatprep.subr.mxu0 %v4115
    %4134 = vmatpush1.msra.mxu0 %v4114
    %4135 = vmatprep.subr.mxu0 %v4117
    %4136 = vmatpush1.msra.mxu0 %v4116
    %4137 = vmatprep.subr.mxu0 %v4119
    %4138 = vmatpush1.msra.mxu0 %v4118
    %4139 = vmatprep.subr.mxu0 %v4121
    %4140 = vmatpush1.msra.mxu0 %v4120
    %4141 = vmatprep.subr.mxu0 %v4123
    %4142 = vmatpush1.msra.mxu0 %v4122
    %4143 = vmatprep.subr.mxu0 %v4125
    %4144 = vmatpush1.msra.mxu0 %v4124
    %4145 = vmatprep.subr.mxu0 0.0
    %4146 = vmatpush1.msra.mxu0 0.0
    %4147 = vmatprep.subr.mxu0 0.0
    %4148 = vmatpush1.msra.mxu0 0.0
    %4149 = vmatprep.subr.mxu0 0.0
    %4150 = vmatpush1.msra.mxu0 0.0
    %4151 = vmatprep.subr.mxu0 0.0
    %4152 = vmatpush1.msra.mxu0 0.0
    %4153 = vmatprep.subr.mxu0 0.0
    %4154 = vmatpush1.msra.mxu0 0.0
    %4155 = vmatprep.subr.mxu0 0.0
    %4156 = vmatpush1.msra.mxu0 0.0
    %4157 = vmatprep.subr.mxu0 0.0
    %4158 = vmatpush1.msra.mxu0 0.0
    %4159 = vmatprep.subr.mxu0 0.0
    %4160 = vmatpush1.msra.mxu0 0.0
    %4161 = vmatprep.subr.mxu0 0.0
    %4162 = vmatpush1.msra.mxu0 0.0
    %4163 = vmatprep.subr.mxu0 0.0
    %4164 = vmatpush1.msra.mxu0 0.0
    %4165 = vmatprep.subr.mxu0 0.0
    %4166 = vmatpush1.msra.mxu0 0.0
    %4167 = vmatprep.subr.mxu0 0.0
    %4168 = vmatpush1.msra.mxu0 0.0
    %4169 = vmatprep.subr.mxu0 0.0
    %4170 = vmatpush1.msra.mxu0 0.0
    %4171 = vmatprep.subr.mxu0 0.0
    %4172 = vmatpush1.msra.mxu0 0.0
    %4173 = vmatprep.subr.mxu0 0.0
    %4174 = vmatpush1.msra.mxu0 0.0
    %4175 = vmatprep.subr.mxu0 0.0
    %4176 = vmatpush1.msra.mxu0 0.0
    %4177 = vmatprep.subr.mxu0 0.0
    %4178 = vmatpush1.msra.mxu0 0.0
    %4179 = vmatprep.subr.mxu0 0.0
    %4180 = vmatpush1.msra.mxu0 0.0
    %4181 = vmatprep.subr.mxu0 0.0
    %4182 = vmatpush1.msra.mxu0 0.0
    %4183 = vmatprep.subr.mxu0 0.0
    %4184 = vmatpush1.msra.mxu0 0.0
    %4185 = vmatprep.subr.mxu0 0.0
    %4186 = vmatpush1.msra.mxu0 0.0
    %4187 = vmatprep.subr.mxu0 0.0
    %4188 = vmatpush1.msra.mxu0 0.0
    %4189 = vmatprep.subr.mxu0 0.0
    %4190 = vmatpush1.msra.mxu0 0.0
    %4191 = vmatprep.subr.mxu0 0.0
    %4192 = vmatpush1.msra.mxu0 0.0
    %4193 = vmatprep.mubr.f32.mxu0 0.0
    %4194 = vmatmul.mubr.f32.gmra.mrb[0].mxu0 %v4127
    %v4195 = vpop.f32.mrb[0].mxu0
    %v4196 = vadd.f32 0.0, %v4195
    %v4197 = vpop.f32.mrb[0].mxu0
    %v4198 = vadd.f32 0.0, %v4197
    %4199 = vdwg.mxu0
    %v4200 = vadd.f32 %v4106, %v716
    %v4201 = vadd.f32 %v4108, %v720
    %v4202 = vadd.f32 %v4200, %v4196
    %v4203 = vadd.f32 %v4201, %v4198
    %v4204 = vmul.f32 %v4202, 0.5
    %v4205 = vmul.f32 %v4203, 0.5
    %v4206 = vtanh.pop %v4204
    %v4207 = vtanh.pop %v4205
    %v4208 = vmul.f32 %v4206, 0.5
    %v4209 = vmul.f32 %v4207, 0.5
    %v4210 = vadd.f32 %v4208, 0.5
    %v4211 = vadd.f32 %v4209, 0.5
    %v4212 = vtanh.pop %v4203
    %v4213 = vmul.f32 %v4210, %v3982
    %4215 = vrot.lane.b32.xlu0 %v4212, 64
    %v4216 = vpop.permute.xlu0 %4215
    %v4218 = vmul.f32 %v4210, %v4216
    %4220 = vrot.lane.b32.xlu0 %v4218, 64
    %v4221 = vpop.permute.xlu0 %4220
    %v4223 = vadd.f32 %v4213, %v4221
    %v4224 = vtanh.pop %v4223
    %4226 = vrot.lane.b32.xlu0 %v4224, 64
    %v4227 = vpop.permute.xlu0 %4226
    %v4229 = vmul.f32 %v4211, %v4227
    %4230 = vst.msk [vmem:[#allocation2 + $0x7] sm:$0x1] %vm751, %v4229
    %v4231 = vld [vmem:[#allocation2] sm:$0xff]
    %v4232 = vld [vmem:[%s8] sm:$0xff]
    %v4233 = vld [vmem:[%s8 + $0x8] sm:$0xff]
    %v4234 = vld [vmem:[%s8 + $0x10] sm:$0xff]
    %v4235 = vld [vmem:[%s8 + $0x18] sm:$0xff]
    %v4236 = vld [vmem:[%s8 + $0x20] sm:$0xff]
    %v4237 = vld [vmem:[%s8 + $0x28] sm:$0xff]
    %v4238 = vld [vmem:[%s8 + $0x30] sm:$0xff]
    %v4239 = vld [vmem:[%s8 + $0x38] sm:$0xff]
    %v4240 = vld [vmem:[%s9] sm:$0x1]
    %v4242 = vlaneseq
    %v4243 = vshrl.u32 %v4242, 7
    %v4244 = vsub.s32 0, %v4243
    %v4245 = vrot.slane %v4240, %v4244
    %v4248 = vsel %vm156, %v4231, 0
    %4250 = vmatprep.subr.mxu0 0.0
    %4251 = vmatpush1.msra.mxu0 %v4232
    %4252 = vmatprep.subr.mxu0 0.0
    %4253 = vmatpush1.msra.mxu0 %v4233
    %4254 = vmatprep.subr.mxu0 0.0
    %4255 = vmatpush1.msra.mxu0 %v4234
    %4256 = vmatprep.subr.mxu0 0.0
    %4257 = vmatpush1.msra.mxu0 %v4235
    %4258 = vmatprep.subr.mxu0 0.0
    %4259 = vmatpush1.msra.mxu0 %v4236
    %4260 = vmatprep.subr.mxu0 0.0
    %4261 = vmatpush1.msra.mxu0 %v4237
    %4262 = vmatprep.subr.mxu0 0.0
    %4263 = vmatpush1.msra.mxu0 %v4238
    %4264 = vmatprep.subr.mxu0 0.0
    %4265 = vmatpush1.msra.mxu0 %v4239
    %4266 = vmatprep.subr.mxu0 0.0
    %4267 = vmatpush1.msra.mxu0 0.0
    %4268 = vmatprep.subr.mxu0 0.0
    %4269 = vmatpush1.msra.mxu0 0.0
    %4270 = vmatprep.subr.mxu0 0.0
    %4271 = vmatpush1.msra.mxu0 0.0
    %4272 = vmatprep.subr.mxu0 0.0
    %4273 = vmatpush1.msra.mxu0 0.0
    %4274 = vmatprep.subr.mxu0 0.0
    %4275 = vmatpush1.msra.mxu0 0.0
    %4276 = vmatprep.subr.mxu0 0.0
    %4277 = vmatpush1.msra.mxu0 0.0
    %4278 = vmatprep.subr.mxu0 0.0
    %4279 = vmatpush1.msra.mxu0 0.0
    %4280 = vmatprep.subr.mxu0 0.0
    %4281 = vmatpush1.msra.mxu0 0.0
    %4282 = vmatprep.subr.mxu0 0.0
    %4283 = vmatpush1.msra.mxu0 0.0
    %4284 = vmatprep.subr.mxu0 0.0
    %4285 = vmatpush1.msra.mxu0 0.0
    %4286 = vmatprep.subr.mxu0 0.0
    %4287 = vmatpush1.msra.mxu0 0.0
    %4288 = vmatprep.subr.mxu0 0.0
    %4289 = vmatpush1.msra.mxu0 0.0
    %4290 = vmatprep.subr.mxu0 0.0
    %4291 = vmatpush1.msra.mxu0 0.0
    %4292 = vmatprep.subr.mxu0 0.0
    %4293 = vmatpush1.msra.mxu0 0.0
    %4294 = vmatprep.subr.mxu0 0.0
    %4295 = vmatpush1.msra.mxu0 0.0
    %4296 = vmatprep.subr.mxu0 0.0
    %4297 = vmatpush1.msra.mxu0 0.0
    %4298 = vmatprep.subr.mxu0 0.0
    %4299 = vmatpush1.msra.mxu0 0.0
    %4300 = vmatprep.subr.mxu0 0.0
    %4301 = vmatpush1.msra.mxu0 0.0
    %4302 = vmatprep.subr.mxu0 0.0
    %4303 = vmatpush1.msra.mxu0 0.0
    %4304 = vmatprep.subr.mxu0 0.0
    %4305 = vmatpush1.msra.mxu0 0.0
    %4306 = vmatprep.subr.mxu0 0.0
    %4307 = vmatpush1.msra.mxu0 0.0
    %4308 = vmatprep.subr.mxu0 0.0
    %4309 = vmatpush1.msra.mxu0 0.0
    %4310 = vmatprep.subr.mxu0 0.0
    %4311 = vmatpush1.msra.mxu0 0.0
    %4312 = vmatprep.subr.mxu0 0.0
    %4313 = vmatpush1.msra.mxu0 0.0
    %4314 = vmatprep.mubr.f32.mxu0 0.0
    %4315 = vmatmul.mubr.f32.gmra.mrb[0].mxu0 %v4248
    %v4316 = vpop.f32.mrb[0].mxu0
    %v4317 = vadd.f32 %v4245, %v4316
    %v4318 = vpop.f32.mrb[0].mxu0
    %4319 = vdwg.mxu0
    %vm4320 = vcmask 39936
    %4321 = vst.msk [vmem:[#allocation11] sm:$0xff] %vm4320, %v4317
    // Predicated region
    $region58: #{lstm_model_forward.1} parent=1 // pred_check
      _
    $region59: #{lstm_model_forward.1} parent=1 // pred_check_branch
      %4323 = sbr.rel (0) target = $region61
    $region60: #{lstm_model_forward.1} parent=1 // pred_region
      %s4325 = ssub.s32 128, 128
      %4326 = vsyncadd [#allocation5], %s4325
      %s4328 = sshll.u32 [#allocation11], 4
      %s4329 = int_to_ptr.vmem [resolvable:$true] %s4328
      %4331 = dma.vmem_to_hbm [thread:$0]  %s4329, 128, %s10, [#allocation5]
    $region61: #{lstm_model_forward.1} parent=1 // pred_fallthru
      _
    // Predicated region
    $region62: #{lstm_model_forward.1} parent=1 // pred_check
      _
    $region63: #{lstm_model_forward.1} parent=1 // pred_check_branch
      %4333 = sbr.rel (0) target = $region65
    $region64: #{lstm_model_forward.1} parent=1 // pred_region
      %4334 = dma.done [#allocation5], 128
    $region65: #{lstm_model_forward.1} parent=1 // pred_fallthru
      _
    %4335 = vsyncpa [#allocation4], 1
    %4336 = vsyncpa [#allocation9], 1
    %4337 = vsyncpa [#allocation5], 1
    %4338 = vsyncpa [#allocation6], 1

</llo_original>
